<compile_context>
chip_gen: v7x
topology: tpu7x:2x2x1
jax: 0.10.0
libtpu: 0.0.40
codegen_flags: <defaults>
</compile_context>

<pallas_src>
import functools
import math

import jax
import jax.numpy as jnp
from jax import lax
from jax.experimental import pallas as pl
from jax.experimental.pallas import tpu as pltpu


# ---------------------------------------------------------------------------
# Pallas kernel: one (batch, N-tile) per grid step; N lives on the lane axis.
# ---------------------------------------------------------------------------
def adapter_kernel(seq_ref, aa_ref, mask_ref, ctx_ref,
                   ln_g_ref, ln_b_ref,
                   lat_wT_ref, lat_bT_ref, null_ref,
                   ctx_w_ref, ctx_b_ref, sd_ref, sdT_ref,
                   hproj_w_ref, hproj_b_ref, afl_ref, sg_ref, pred_b_ref,
                   out_ref,
                   *, heads, dim_head, temp=0.05, ln_eps=1e-5, lae_eps=1e-20):
    H, Dh = heads, dim_head
    inv_temp = 1.0 / temp

    x = seq_ref[0]            # (TN, E)  enformer embeddings for this tile
    aa = aa_ref[0]            # (M, A)   protein (aa) embeddings
    m = mask_ref[0]           # (M, 1)   float {0,1} context mask (column)
    ce = ctx_ref[0]           # (1, C)   contextual (free-text) embedding

    # ---- self.norm_seq_embed : LayerNorm over the feature dim (E on lanes) ----
    mu = jnp.mean(x, axis=-1, keepdims=True)
    var = jnp.mean((x - mu) ** 2, axis=-1, keepdims=True)
    xn = (x - mu) * lax.rsqrt(var + ln_eps) * ln_g_ref[...] + ln_b_ref[...]

    # ---- FILIP latent projection, transposed so TN is on the lane axis ----
    # latT[r, n] = (xn @ to_latent_w)[n, r] + b[r]        -> (H*Dh, TN)
    latT = lax.dot_general(lat_wT_ref[...], xn, (((1,), (1,)), ((), ())),
                           preferred_element_type=jnp.float32) + lat_bT_ref[...]

    # ---- context latents (M, H*Dh), per-head l2-norm vectorized across heads ----
    cc = jnp.dot(aa, ctx_w_ref[...],
                 preferred_element_type=jnp.float32) + ctx_b_ref[...]     # (M, HD)
    ss = jnp.dot(cc * cc, sd_ref[...],
                 preferred_element_type=jnp.float32)                      # (M, H)
    inv_c = 1.0 / jnp.maximum(jnp.sqrt(ss), 1e-12)
    ctx_n = cc * jnp.dot(inv_c, sdT_ref[...],
                         preferred_element_type=jnp.float32)              # (M, HD)

    valid = m > 0.5                              # (M, 1) -> broadcasts over lanes
    n_valid = 1.0 + jnp.sum(m)                   # null token is always valid

    rows = []
    for h in range(H):                           # static unroll; lane-dense in TN
        lat_h = latT[h * Dh:(h + 1) * Dh, :]     # (Dh, TN) aligned sublane slice
        # per-position l2 norm of this head's latent, applied as a row scale
        inv_l = 1.0 / jnp.maximum(
            jnp.sqrt(jnp.sum(lat_h * lat_h, axis=0, keepdims=True)), 1e-12)  # (1, TN)

        ctx_h = ctx_n[:, h * Dh:(h + 1) * Dh]    # (M, Dh)  already l2-normalized
        null_h = null_ref[h:h + 1, :]            # (1, Dh)  NOT normalized (matches ref)

        sim_c = jnp.dot(ctx_h, lat_h,
                        preferred_element_type=jnp.float32) * inv_l       # (M, TN)
        sim_0 = jnp.dot(null_h, lat_h,
                        preferred_element_type=jnp.float32) * inv_l       # (1, TN)

        # masked logavgexp over the context axis (rows), temp = 0.05
        t_c = jnp.where(valid, sim_c * inv_temp, -1e30)                   # (M, TN)
        t_0 = sim_0 * inv_temp                                            # (1, TN)
        mx = jnp.maximum(jnp.max(t_c, axis=0, keepdims=True), t_0)        # (1, TN)
        se = jnp.sum(jnp.where(valid, jnp.exp(t_c - mx), 0.0),
                     axis=0, keepdims=True) + jnp.exp(t_0 - mx)           # (1, TN)
        lae = (jnp.log(jnp.maximum(se, lae_eps) / n_valid + lae_eps) + mx) * temp
        rows.append(lae)                                                  # (1, TN)

    interT = jnp.concatenate(rows, axis=0)       # (H, TN) == interactions^T

    # ---- fused HypergridLinear + to_pred ----
    # gating stays flat (1, H*H); wp[i] = sum_o hyper_w[i,o]*sigmoid(g[i*H+o])*pred_w[o]
    g = jax.nn.sigmoid(
        jnp.dot(ce, hproj_w_ref[...], preferred_element_type=jnp.float32)
        + hproj_b_ref[...])                                               # (1, H*H)
    q = g * afl_ref[...]                                                  # (1, H*H)
    wpr = jnp.dot(q, sg_ref[...], preferred_element_type=jnp.float32)     # (1, H)
    p = jnp.dot(wpr, interT,
                preferred_element_type=jnp.float32) + pred_b_ref[...]     # (1, TN)
    out_ref[0] = jax.nn.softplus(p)              # lane-dense (1, TN) store


# ---------------------------------------------------------------------------
# Wrapper: parameter plumbing + pallas_call
# ---------------------------------------------------------------------------
def _pick_tile_n(n):
    if n <= 512:
        return n
    for tn in (512, 384, 256, 128):      # multiples of 128 -> lane-aligned out tiles
        if n % tn == 0:
            return tn
    return n


def adapter_forward(seq_embed, aa_embed, aa_mask, contextual_embed, params,
                    block_n=None):
    f32 = jnp.float32
    B, N, E = seq_embed.shape
    M, A = aa_embed.shape[1], aa_embed.shape[2]
    C = contextual_embed.shape[-1]
    H, Dh = params["null_context"].shape
    HD = H * Dh

    TN = block_n if block_n is not None else _pick_tile_n(N)
    assert N % TN == 0, (N, TN)
    NT = N // TN

    mask3 = aa_mask.astype(f32).reshape(B, M, 1)
    ctx3 = contextual_embed.astype(f32).reshape(B, 1, C)

    # host-side derived parameters (reshapes / transposes / tiny constants)
    ln_g = params["ln_g"].reshape(1, E)
    ln_b = params["ln_b"].reshape(1, E)
    lat_wT = params["to_latent_w"].T                                  # (HD, E)
    lat_bT = params["to_latent_b"].reshape(HD, 1)
    null = params["null_context"]                                     # (H, Dh)
    ctx_w = params["ctx_to_latent_w"]                                 # (A, HD)
    ctx_b = params["ctx_to_latent_b"].reshape(1, HD)
    sd = (jnp.arange(HD)[:, None] // Dh ==
          jnp.arange(H)[None, :]).astype(f32)                         # (HD, H)
    sdT = sd.T                                                        # (H, HD)
    hproj_w = params["hyper_proj_w"]                                  # (C, H*H)
    hproj_b = params["hyper_proj_b"].reshape(1, H * H)
    afl = (params["hyper_weights"] *
           params["pred_w"].reshape(1, H)).reshape(1, H * H)          # (1, H*H)
    sg = (jnp.arange(H * H)[:, None] // H ==
          jnp.arange(H)[None, :]).astype(f32)                         # (H*H, H)
    pred_b = params["pred_b"].reshape(1, 1)

    kernel = functools.partial(adapter_kernel, heads=H, dim_head=Dh)

    flops = 2 * B * (N * E * HD                 # seq latent projection
                     + NT * M * A * HD          # ctx projection (per tile)
                     + N * (M + 1) * HD         # FILIP sims
                     + 2 * NT * M * HD * H      # ctx norm selector matmuls
                     + NT * C * H * H           # gating
                     + N * H)                   # fused tail
    transcendentals = B * N * (H * (M + 2) + 1)
    bytes_accessed = 4 * (B * N * E + B * M * A + B * M + B * C + B * N
                          + HD * E + HD + A * HD + HD + H * Dh
                          + 2 * HD * H + C * H * H + 3 * H * H + H * H * H
                          + 2 * E + 1)

    out = pl.pallas_call(
        kernel,
        out_shape=jax.ShapeDtypeStruct((B, 1, N), f32),
        grid=(B, NT),
        in_specs=[
            pl.BlockSpec((1, TN, E), lambda b, t: (b, t, 0)),   # seq_embed tile
            pl.BlockSpec((1, M, A), lambda b, t: (b, 0, 0)),    # aa_embed
            pl.BlockSpec((1, M, 1), lambda b, t: (b, 0, 0)),    # aa_mask (column)
            pl.BlockSpec((1, 1, C), lambda b, t: (b, 0, 0)),    # contextual_embed
            pl.BlockSpec((1, E), lambda b, t: (0, 0)),          # ln gamma
            pl.BlockSpec((1, E), lambda b, t: (0, 0)),          # ln beta
            pl.BlockSpec((HD, E), lambda b, t: (0, 0)),         # to_latent_w^T
            pl.BlockSpec((HD, 1), lambda b, t: (0, 0)),         # to_latent_b (col)
            pl.BlockSpec((H, Dh), lambda b, t: (0, 0)),         # null_context
            pl.BlockSpec((A, HD), lambda b, t: (0, 0)),         # ctx_to_latent_w
            pl.BlockSpec((1, HD), lambda b, t: (0, 0)),         # ctx_to_latent_b
            pl.BlockSpec((HD, H), lambda b, t: (0, 0)),         # head-block selector
            pl.BlockSpec((H, HD), lambda b, t: (0, 0)),         # selector^T
            pl.BlockSpec((C, H * H), lambda b, t: (0, 0)),      # hypergrid proj W
            pl.BlockSpec((1, H * H), lambda b, t: (0, 0)),      # hypergrid proj b
            pl.BlockSpec((1, H * H), lambda b, t: (0, 0)),      # hyper_w*pred_w flat
            pl.BlockSpec((H * H, H), lambda b, t: (0, 0)),      # gating block-sum sel
            pl.BlockSpec((1, 1), lambda b, t: (0, 0)),          # pred bias
        ],
        out_specs=pl.BlockSpec((1, 1, TN), lambda b, t: (b, 0, t)),
        compiler_params=pltpu.CompilerParams(
            dimension_semantics=("parallel", "parallel"),
            vmem_limit_bytes=64 * 1024 * 1024),
        cost_estimate=pl.CostEstimate(flops=int(flops),
                                      transcendentals=int(transcendentals),
                                      bytes_accessed=int(bytes_accessed)),
    )(seq_embed.astype(f32), aa_embed.astype(f32), mask3, ctx3,
      ln_g, ln_b, lat_wT, lat_bT, null, ctx_w, ctx_b, sd, sdT,
      hproj_w, hproj_b, afl, sg, pred_b)

    return out[:, 0, :]   # (B, N)  == Rearrange('... 1 -> ...')


# ---------------------------------------------------------------------------
# Pure-JAX reference (same math) for a correctness check
# ---------------------------------------------------------------------------
def reference_forward(seq_embed, aa_embed, aa_mask, ctx_embed, p, H, Dh, temp=0.05):
    B, N, _ = seq_embed.shape
    M = aa_embed.shape[1]
    x = seq_embed
    mu = x.mean(-1, keepdims=True)
    var = ((x - mu) ** 2).mean(-1, keepdims=True)
    xn = (x - mu) / jnp.sqrt(var + 1e-5) * p["ln_g"] + p["ln_b"]
    lat = xn @ p["to_latent_w"] + p["to_latent_b"]
    ctx = aa_embed @ p["ctx_to_latent_w"] + p["ctx_to_latent_b"]
    latb = lat.reshape(B, N, H, Dh).transpose(0, 2, 1, 3)
    ctxb = ctx.reshape(B, M, H, Dh).transpose(0, 2, 1, 3)
    latb = latb / jnp.maximum(jnp.linalg.norm(latb, axis=-1, keepdims=True), 1e-12)
    ctxb = ctxb / jnp.maximum(jnp.linalg.norm(ctxb, axis=-1, keepdims=True), 1e-12)
    null = jnp.broadcast_to(p["null_context"][None, :, None, :], (B, H, 1, Dh))
    ctxb = jnp.concatenate([null, ctxb], axis=2)
    sim = jnp.einsum("bhid,bhjd->bhij", latb, ctxb)
    maskf = jnp.concatenate([jnp.ones((B, 1), bool), aa_mask], axis=1)[:, None, None, :]
    t = jnp.where(maskf, sim / temp, -1e30)
    mx = t.max(-1, keepdims=True)
    se = jnp.where(maskf, jnp.exp(t - mx), 0.0).sum(-1, keepdims=True)
    n = maskf.sum(-1, keepdims=True).astype(jnp.float32)
    lae = (jnp.log(jnp.maximum(se, 1e-20) / n + 1e-20) + mx) * temp
    inter = lae[..., 0].transpose(0, 2, 1)                      # (B, N, H)
    gating = jax.nn.sigmoid(ctx_embed @ p["hyper_proj_w"] + p["hyper_proj_b"])
    gating = gating.reshape(B, H, H)
    w = p["hyper_weights"][None] * gating
    logits = jnp.einsum("bnd,bde->bne", inter, w)
    pr = logits @ p["pred_w"] + p["pred_b"]
    return jax.nn.softplus(pr)[..., 0]


# ---------------------------------------------------------------------------
if __name__ == "__main__":
    # small shapes consistent with the module's forward
    B, N, M = 2, 16, 8          # batch, genomic positions, aa tokens
    E = 32                      # enformer_dim = enformer.dim * 2 (dim=16)
    A = 32                      # aa_embed_dim
    C = 16                      # contextual_embed_dim
    H, Dh = 4, 8                # latent_heads, latent_dim (dim_head)

    key = jax.random.PRNGKey(0)
    ks = jax.random.split(key, 16)

    seq_embed = jax.random.normal(ks[0], (B, N, E), jnp.float32)
    aa_embed = jax.random.normal(ks[1], (B, M, A), jnp.float32)
    contextual_embed = jax.random.normal(ks[2], (B, C), jnp.float32)
    # mask out the last two aa tokens of batch element 1
    aa_mask = jnp.array([[True] * M, [True] * (M - 2) + [False] * 2])

    params = {
        "ln_g": jnp.ones((E,), jnp.float32),
        "ln_b": jnp.zeros((E,), jnp.float32),
        # FILIP (nn.Parameter(torch.randn(...)))
        "to_latent_w": jax.random.normal(ks[3], (E, H * Dh), jnp.float32),
        "to_latent_b": jax.random.normal(ks[4], (H * Dh,), jnp.float32),
        "null_context": jax.random.normal(ks[5], (H, Dh), jnp.float32),
        "ctx_to_latent_w": jax.random.normal(ks[6], (A, H * Dh), jnp.float32),
        "ctx_to_latent_b": jax.random.normal(ks[7], (H * Dh,), jnp.float32),
        # HypergridLinear
        "hyper_weights": jax.random.normal(ks[8], (H, H), jnp.float32),
        "hyper_proj_w": jax.random.normal(ks[9], (C, H * H), jnp.float32)
                        / math.sqrt(C),
        "hyper_proj_b": jax.random.normal(ks[10], (H * H,), jnp.float32) * 0.1,
        # to_pred Linear(H, 1)
        "pred_w": jax.random.normal(ks[11], (H, 1), jnp.float32) / math.sqrt(H),
        "pred_b": jax.random.normal(ks[12], (1,), jnp.float32) * 0.1,
    }

    pred = adapter_forward(seq_embed, aa_embed, aa_mask, contextual_embed, params)
    pred = jax.block_until_ready(pred)

    ref = reference_forward(seq_embed, aa_embed, aa_mask, contextual_embed,
                            params, H, Dh)
    ref = jax.block_until_ready(ref)

    assert pred.shape == (B, N), pred.shape
    assert jnp.allclose(pred, ref, rtol=1e-3, atol=1e-3), (pred, ref)
    print("KERNEL_OK")
</pallas_src>

<mosaic_0001>
module attributes {stable_mosaic.version = 11 : i64} {
  func.func @adapter_kernel(%arg0: i32, %arg1: i32, %arg2: memref<1x16x32xf32, #tpu.memory_space<vmem>>, %arg3: memref<1x8x32xf32, #tpu.memory_space<vmem>>, %arg4: memref<1x8x1xf32, #tpu.memory_space<vmem>>, %arg5: memref<1x1x16xf32, #tpu.memory_space<vmem>>, %arg6: memref<1x32xf32, #tpu.memory_space<vmem>>, %arg7: memref<1x32xf32, #tpu.memory_space<vmem>>, %arg8: memref<32x32xf32, #tpu.memory_space<vmem>>, %arg9: memref<32x1xf32, #tpu.memory_space<vmem>>, %arg10: memref<4x8xf32, #tpu.memory_space<vmem>>, %arg11: memref<32x32xf32, #tpu.memory_space<vmem>>, %arg12: memref<1x32xf32, #tpu.memory_space<vmem>>, %arg13: memref<32x4xf32, #tpu.memory_space<vmem>>, %arg14: memref<4x32xf32, #tpu.memory_space<vmem>>, %arg15: memref<16x16xf32, #tpu.memory_space<vmem>>, %arg16: memref<1x16xf32, #tpu.memory_space<vmem>>, %arg17: memref<1x16xf32, #tpu.memory_space<vmem>>, %arg18: memref<16x4xf32, #tpu.memory_space<vmem>>, %arg19: memref<1x1xf32, #tpu.memory_space<vmem>>, %arg20: memref<1x1x16xf32, #tpu.memory_space<vmem>>) attributes {dimension_semantics = [#tpu.dimension_semantics<parallel>, #tpu.dimension_semantics<parallel>], iteration_bounds = array<i64: 2, 1>, scalar_prefetch = 0 : i64, scratch_operands = 0 : i64, tpu.core_type = #tpu.core_type<tc>, window_params = [{transform_indices = @transform_0, window_bounds = array<i64: 1, 16, 32>}, {transform_indices = @transform_1, window_bounds = array<i64: 1, 8, 32>}, {transform_indices = @transform_2, window_bounds = array<i64: 1, 8, 1>}, {transform_indices = @transform_3, window_bounds = array<i64: 1, 1, 16>}, {pipeline_mode = #tpu.pipeline_mode<synchronous>, transform_indices = @transform_4, window_bounds = array<i64: 1, 32>}, {pipeline_mode = #tpu.pipeline_mode<synchronous>, transform_indices = @transform_5, window_bounds = array<i64: 1, 32>}, {pipeline_mode = #tpu.pipeline_mode<synchronous>, transform_indices = @transform_6, window_bounds = array<i64: 32, 32>}, {pipeline_mode = #tpu.pipeline_mode<synchronous>, transform_indices = @transform_7, window_bounds = array<i64: 32, 1>}, {pipeline_mode = #tpu.pipeline_mode<synchronous>, transform_indices = @transform_8, window_bounds = array<i64: 4, 8>}, {pipeline_mode = #tpu.pipeline_mode<synchronous>, transform_indices = @transform_9, window_bounds = array<i64: 32, 32>}, {pipeline_mode = #tpu.pipeline_mode<synchronous>, transform_indices = @transform_10, window_bounds = array<i64: 1, 32>}, {pipeline_mode = #tpu.pipeline_mode<synchronous>, transform_indices = @transform_11, window_bounds = array<i64: 32, 4>}, {pipeline_mode = #tpu.pipeline_mode<synchronous>, transform_indices = @transform_12, window_bounds = array<i64: 4, 32>}, {pipeline_mode = #tpu.pipeline_mode<synchronous>, transform_indices = @transform_13, window_bounds = array<i64: 16, 16>}, {pipeline_mode = #tpu.pipeline_mode<synchronous>, transform_indices = @transform_14, window_bounds = array<i64: 1, 16>}, {pipeline_mode = #tpu.pipeline_mode<synchronous>, transform_indices = @transform_15, window_bounds = array<i64: 1, 16>}, {pipeline_mode = #tpu.pipeline_mode<synchronous>, transform_indices = @transform_16, window_bounds = array<i64: 16, 4>}, {pipeline_mode = #tpu.pipeline_mode<synchronous>, transform_indices = @transform_17, window_bounds = array<i64: 1, 1>}, {transform_indices = @transform_18, window_bounds = array<i64: 1, 1, 16>}]} {
    %c0 = arith.constant 0 : index
    %c0_0 = arith.constant 0 : index
    %c0_1 = arith.constant 0 : index
    %0 = vector.load %arg2[%c0, %c0_0, %c0_1] : memref<1x16x32xf32, #tpu.memory_space<vmem>>, vector<1x16x32xf32>
    %1 = vector.shape_cast %0 : vector<1x16x32xf32> to vector<16x32xf32>
    %c0_2 = arith.constant 0 : index
    %c0_3 = arith.constant 0 : index
    %c0_4 = arith.constant 0 : index
    %2 = vector.load %arg3[%c0_2, %c0_3, %c0_4] : memref<1x8x32xf32, #tpu.memory_space<vmem>>, vector<1x8x32xf32>
    %3 = vector.shape_cast %2 : vector<1x8x32xf32> to vector<8x32xf32>
    %c0_5 = arith.constant 0 : index
    %c0_6 = arith.constant 0 : index
    %c0_7 = arith.constant 0 : index
    %4 = vector.load %arg4[%c0_5, %c0_6, %c0_7] : memref<1x8x1xf32, #tpu.memory_space<vmem>>, vector<1x8x1xf32>
    %5 = vector.shape_cast %4 : vector<1x8x1xf32> to vector<8x1xf32>
    %c0_8 = arith.constant 0 : index
    %c0_9 = arith.constant 0 : index
    %c0_10 = arith.constant 0 : index
    %6 = vector.load %arg5[%c0_8, %c0_9, %c0_10] : memref<1x1x16xf32, #tpu.memory_space<vmem>>, vector<1x1x16xf32>
    %7 = vector.shape_cast %6 : vector<1x1x16xf32> to vector<1x16xf32>
    %cst = arith.constant dense<0.000000e+00> : vector<16xf32>
    %8 = vector.multi_reduction <add>, %1, %cst [1] : vector<16x32xf32> to vector<16xf32>
    %9 = vector.shape_cast %8 : vector<16xf32> to vector<16x1xf32>
    %cst_11 = arith.constant 3.200000e+01 : f32
    %10 = vector.broadcast %cst_11 : f32 to vector<16x1xf32>
    %11 = arith.divf %9, %10 : vector<16x1xf32>
    %12 = vector.broadcast %11 : vector<16x1xf32> to vector<16x32xf32>
    %13 = arith.subf %1, %12 : vector<16x32xf32>
    %14 = arith.mulf %13, %13 : vector<16x32xf32>
    %cst_12 = arith.constant dense<0.000000e+00> : vector<16xf32>
    %15 = vector.multi_reduction <add>, %14, %cst_12 [1] : vector<16x32xf32> to vector<16xf32>
    %16 = vector.shape_cast %15 : vector<16xf32> to vector<16x1xf32>
    %cst_13 = arith.constant 3.200000e+01 : f32
    %17 = vector.broadcast %cst_13 : f32 to vector<16x1xf32>
    %18 = arith.divf %16, %17 : vector<16x1xf32>
    %19 = vector.broadcast %11 : vector<16x1xf32> to vector<16x32xf32>
    %20 = arith.subf %1, %19 : vector<16x32xf32>
    %cst_14 = arith.constant 9.99999974E-6 : f32
    %21 = vector.broadcast %cst_14 : f32 to vector<16x1xf32>
    %22 = arith.addf %18, %21 : vector<16x1xf32>
    %23 = math.rsqrt %22 : vector<16x1xf32>
    %24 = vector.broadcast %23 : vector<16x1xf32> to vector<16x32xf32>
    %25 = arith.mulf %20, %24 : vector<16x32xf32>
    %c0_15 = arith.constant 0 : index
    %c0_16 = arith.constant 0 : index
    %26 = vector.load %arg6[%c0_15, %c0_16] : memref<1x32xf32, #tpu.memory_space<vmem>>, vector<1x32xf32>
    %27 = vector.broadcast %26 : vector<1x32xf32> to vector<16x32xf32>
    %28 = arith.mulf %25, %27 : vector<16x32xf32>
    %c0_17 = arith.constant 0 : index
    %c0_18 = arith.constant 0 : index
    %29 = vector.load %arg7[%c0_17, %c0_18] : memref<1x32xf32, #tpu.memory_space<vmem>>, vector<1x32xf32>
    %30 = vector.broadcast %29 : vector<1x32xf32> to vector<16x32xf32>
    %31 = arith.addf %28, %30 : vector<16x32xf32>
    %c0_19 = arith.constant 0 : index
    %c0_20 = arith.constant 0 : index
    %32 = vector.load %arg8[%c0_19, %c0_20] : memref<32x32xf32, #tpu.memory_space<vmem>>, vector<32x32xf32>
    %cst_21 = arith.constant dense<0.000000e+00> : vector<32x16xf32>
    %33 = tpu.matmul %32, %31, %cst_21 {dimension_numbers = #tpu.dot_dimension_numbers<[1], [1], [0], [0], [0, 0, 1, 0], [], []>} : vector<32x32xf32>, vector<16x32xf32>, vector<32x16xf32> -> vector<32x16xf32>
    %c0_22 = arith.constant 0 : index
    %c0_23 = arith.constant 0 : index
    %34 = vector.load %arg9[%c0_22, %c0_23] : memref<32x1xf32, #tpu.memory_space<vmem>>, vector<32x1xf32>
    %35 = vector.broadcast %34 : vector<32x1xf32> to vector<32x16xf32>
    %36 = arith.addf %33, %35 : vector<32x16xf32>
    %c0_24 = arith.constant 0 : index
    %c0_25 = arith.constant 0 : index
    %37 = vector.load %arg11[%c0_24, %c0_25] : memref<32x32xf32, #tpu.memory_space<vmem>>, vector<32x32xf32>
    %cst_26 = arith.constant dense<0.000000e+00> : vector<8x32xf32>
    %38 = tpu.matmul %3, %37, %cst_26 {dimension_numbers = #tpu.dot_dimension_numbers<[1], [0], [0], [1], [0, 0, 1, 1], [], []>} : vector<8x32xf32>, vector<32x32xf32>, vector<8x32xf32> -> vector<8x32xf32>
    %c0_27 = arith.constant 0 : index
    %c0_28 = arith.constant 0 : index
    %39 = vector.load %arg12[%c0_27, %c0_28] : memref<1x32xf32, #tpu.memory_space<vmem>>, vector<1x32xf32>
    %40 = vector.broadcast %39 : vector<1x32xf32> to vector<8x32xf32>
    %41 = arith.addf %38, %40 : vector<8x32xf32>
    %42 = arith.mulf %41, %41 : vector<8x32xf32>
    %c0_29 = arith.constant 0 : index
    %c0_30 = arith.constant 0 : index
    %43 = vector.load %arg13[%c0_29, %c0_30] : memref<32x4xf32, #tpu.memory_space<vmem>>, vector<32x4xf32>
    %cst_31 = arith.constant dense<0.000000e+00> : vector<8x4xf32>
    %44 = tpu.matmul %42, %43, %cst_31 {dimension_numbers = #tpu.dot_dimension_numbers<[1], [0], [0], [1], [0, 0, 1, 1], [], []>} : vector<8x32xf32>, vector<32x4xf32>, vector<8x4xf32> -> vector<8x4xf32>
    %45 = math.sqrt %44 : vector<8x4xf32>
    %cst_32 = arith.constant 9.99999996E-13 : f32
    %46 = vector.broadcast %cst_32 : f32 to vector<8x4xf32>
    %47 = arith.maximumf %45, %46 : vector<8x4xf32>
    %cst_33 = arith.constant 1.000000e+00 : f32
    %48 = vector.broadcast %cst_33 : f32 to vector<8x4xf32>
    %49 = arith.divf %48, %47 : vector<8x4xf32>
    %c0_34 = arith.constant 0 : index
    %c0_35 = arith.constant 0 : index
    %50 = vector.load %arg14[%c0_34, %c0_35] : memref<4x32xf32, #tpu.memory_space<vmem>>, vector<4x32xf32>
    %cst_36 = arith.constant dense<0.000000e+00> : vector<8x32xf32>
    %51 = tpu.matmul %49, %50, %cst_36 {dimension_numbers = #tpu.dot_dimension_numbers<[1], [0], [0], [1], [0, 0, 1, 1], [], []>} : vector<8x4xf32>, vector<4x32xf32>, vector<8x32xf32> -> vector<8x32xf32>
    %52 = arith.mulf %41, %51 : vector<8x32xf32>
    %cst_37 = arith.constant 5.000000e-01 : f32
    %53 = vector.broadcast %cst_37 : f32 to vector<8x1xf32>
    %54 = arith.cmpf ogt, %5, %53 : vector<8x1xf32>
    %55 = vector.shape_cast %5 : vector<8x1xf32> to vector<1x8x1xf32>
    %cst_38 = arith.constant dense<0.000000e+00> : vector<1xf32>
    %56 = vector.multi_reduction <add>, %55, %cst_38 [1, 2] : vector<1x8x1xf32> to vector<1xf32>
    %57 = vector.shape_cast %56 : vector<1xf32> to vector<1x1x1xf32>
    %58 = vector.extract %57[0, 0, 0] : f32 from vector<1x1x1xf32>
    %cst_39 = arith.constant 1.000000e+00 : f32
    %59 = arith.addf %cst_39, %58 : f32
    %60 = vector.extract_strided_slice %36 {offsets = [0, 0], sizes = [8, 16], strides = [1, 1]} : vector<32x16xf32> to vector<8x16xf32>
    %61 = arith.mulf %60, %60 : vector<8x16xf32>
    %cst_40 = arith.constant dense<0.000000e+00> : vector<16xf32>
    %62 = vector.multi_reduction <add>, %61, %cst_40 [0] : vector<8x16xf32> to vector<16xf32>
    %63 = vector.shape_cast %62 : vector<16xf32> to vector<1x16xf32>
    %64 = math.sqrt %63 : vector<1x16xf32>
    %cst_41 = arith.constant 9.99999996E-13 : f32
    %65 = vector.broadcast %cst_41 : f32 to vector<1x16xf32>
    %66 = arith.maximumf %64, %65 : vector<1x16xf32>
    %cst_42 = arith.constant 1.000000e+00 : f32
    %67 = vector.broadcast %cst_42 : f32 to vector<1x16xf32>
    %68 = arith.divf %67, %66 : vector<1x16xf32>
    %69 = vector.extract_strided_slice %52 {offsets = [0, 0], sizes = [8, 8], strides = [1, 1]} : vector<8x32xf32> to vector<8x8xf32>
    %c0_43 = arith.constant 0 : index
    %c0_44 = arith.constant 0 : index
    %70 = vector.load %arg10[%c0_43, %c0_44] : memref<4x8xf32, #tpu.memory_space<vmem>>, vector<1x8xf32>
    %cst_45 = arith.constant dense<0.000000e+00> : vector<8x16xf32>
    %71 = tpu.matmul %69, %60, %cst_45 {dimension_numbers = #tpu.dot_dimension_numbers<[1], [0], [0], [1], [0, 0, 1, 1], [], []>} : vector<8x8xf32>, vector<8x16xf32>, vector<8x16xf32> -> vector<8x16xf32>
    %72 = vector.broadcast %68 : vector<1x16xf32> to vector<8x16xf32>
    %73 = arith.mulf %71, %72 : vector<8x16xf32>
    %cst_46 = arith.constant dense<0.000000e+00> : vector<1x16xf32>
    %74 = tpu.matmul %70, %60, %cst_46 {dimension_numbers = #tpu.dot_dimension_numbers<[1], [0], [0], [1], [0, 0, 1, 1], [], []>} : vector<1x8xf32>, vector<8x16xf32>, vector<1x16xf32> -> vector<1x16xf32>
    %75 = arith.mulf %74, %68 : vector<1x16xf32>
    %cst_47 = arith.constant 2.000000e+01 : f32
    %76 = vector.broadcast %cst_47 : f32 to vector<8x16xf32>
    %77 = arith.mulf %73, %76 : vector<8x16xf32>
    %cst_48 = arith.constant -1.000000e+30 : f32
    %78 = vector.shape_cast %54 : vector<8x1xi1> to vector<8x1xi1>
    %79 = vector.broadcast %78 : vector<8x1xi1> to vector<8x16xi1>
    %80 = vector.broadcast %cst_48 : f32 to vector<8x16xf32>
    %81 = arith.select %79, %77, %80 : vector<8x16xi1>, vector<8x16xf32>
    %cst_49 = arith.constant 2.000000e+01 : f32
    %82 = vector.broadcast %cst_49 : f32 to vector<1x16xf32>
    %83 = arith.mulf %75, %82 : vector<1x16xf32>
    %cst_50 = arith.constant dense<0xFF800000> : vector<16xf32>
    %84 = vector.multi_reduction <maximumf>, %81, %cst_50 [0] : vector<8x16xf32> to vector<16xf32>
    %85 = vector.shape_cast %84 : vector<16xf32> to vector<1x16xf32>
    %86 = arith.maximumf %85, %83 : vector<1x16xf32>
    %87 = vector.broadcast %86 : vector<1x16xf32> to vector<8x16xf32>
    %88 = arith.subf %81, %87 : vector<8x16xf32>
    %89 = math.exp %88 : vector<8x16xf32>
    %cst_51 = arith.constant 0.000000e+00 : f32
    %90 = vector.shape_cast %54 : vector<8x1xi1> to vector<8x1xi1>
    %91 = vector.broadcast %90 : vector<8x1xi1> to vector<8x16xi1>
    %92 = vector.broadcast %cst_51 : f32 to vector<8x16xf32>
    %93 = arith.select %91, %89, %92 : vector<8x16xi1>, vector<8x16xf32>
    %cst_52 = arith.constant dense<0.000000e+00> : vector<16xf32>
    %94 = vector.multi_reduction <add>, %93, %cst_52 [0] : vector<8x16xf32> to vector<16xf32>
    %95 = vector.shape_cast %94 : vector<16xf32> to vector<1x16xf32>
    %96 = arith.subf %83, %86 : vector<1x16xf32>
    %97 = math.exp %96 : vector<1x16xf32>
    %98 = arith.addf %95, %97 : vector<1x16xf32>
    %cst_53 = arith.constant 9.99999968E-21 : f32
    %99 = vector.broadcast %cst_53 : f32 to vector<1x16xf32>
    %100 = arith.maximumf %98, %99 : vector<1x16xf32>
    %101 = vector.broadcast %59 : f32 to vector<1x16xf32>
    %102 = arith.divf %100, %101 : vector<1x16xf32>
    %cst_54 = arith.constant 9.99999968E-21 : f32
    %103 = vector.broadcast %cst_54 : f32 to vector<1x16xf32>
    %104 = arith.addf %102, %103 : vector<1x16xf32>
    %105 = math.log %104 : vector<1x16xf32>
    %106 = arith.addf %105, %86 : vector<1x16xf32>
    %cst_55 = arith.constant 5.000000e-02 : f32
    %107 = vector.broadcast %cst_55 : f32 to vector<1x16xf32>
    %108 = arith.mulf %106, %107 : vector<1x16xf32>
    %109 = vector.extract_strided_slice %36 {offsets = [8, 0], sizes = [8, 16], strides = [1, 1]} : vector<32x16xf32> to vector<8x16xf32>
    %110 = arith.mulf %109, %109 : vector<8x16xf32>
    %cst_56 = arith.constant dense<0.000000e+00> : vector<16xf32>
    %111 = vector.multi_reduction <add>, %110, %cst_56 [0] : vector<8x16xf32> to vector<16xf32>
    %112 = vector.shape_cast %111 : vector<16xf32> to vector<1x16xf32>
    %113 = math.sqrt %112 : vector<1x16xf32>
    %cst_57 = arith.constant 9.99999996E-13 : f32
    %114 = vector.broadcast %cst_57 : f32 to vector<1x16xf32>
    %115 = arith.maximumf %113, %114 : vector<1x16xf32>
    %cst_58 = arith.constant 1.000000e+00 : f32
    %116 = vector.broadcast %cst_58 : f32 to vector<1x16xf32>
    %117 = arith.divf %116, %115 : vector<1x16xf32>
    %118 = vector.extract_strided_slice %52 {offsets = [0, 8], sizes = [8, 8], strides = [1, 1]} : vector<8x32xf32> to vector<8x8xf32>
    %c1 = arith.constant 1 : index
    %c0_59 = arith.constant 0 : index
    %119 = vector.load %arg10[%c1, %c0_59] : memref<4x8xf32, #tpu.memory_space<vmem>>, vector<1x8xf32>
    %cst_60 = arith.constant dense<0.000000e+00> : vector<8x16xf32>
    %120 = tpu.matmul %118, %109, %cst_60 {dimension_numbers = #tpu.dot_dimension_numbers<[1], [0], [0], [1], [0, 0, 1, 1], [], []>} : vector<8x8xf32>, vector<8x16xf32>, vector<8x16xf32> -> vector<8x16xf32>
    %121 = vector.broadcast %117 : vector<1x16xf32> to vector<8x16xf32>
    %122 = arith.mulf %120, %121 : vector<8x16xf32>
    %cst_61 = arith.constant dense<0.000000e+00> : vector<1x16xf32>
    %123 = tpu.matmul %119, %109, %cst_61 {dimension_numbers = #tpu.dot_dimension_numbers<[1], [0], [0], [1], [0, 0, 1, 1], [], []>} : vector<1x8xf32>, vector<8x16xf32>, vector<1x16xf32> -> vector<1x16xf32>
    %124 = arith.mulf %123, %117 : vector<1x16xf32>
    %cst_62 = arith.constant 2.000000e+01 : f32
    %125 = vector.broadcast %cst_62 : f32 to vector<8x16xf32>
    %126 = arith.mulf %122, %125 : vector<8x16xf32>
    %cst_63 = arith.constant -1.000000e+30 : f32
    %127 = vector.shape_cast %54 : vector<8x1xi1> to vector<8x1xi1>
    %128 = vector.broadcast %127 : vector<8x1xi1> to vector<8x16xi1>
    %129 = vector.broadcast %cst_63 : f32 to vector<8x16xf32>
    %130 = arith.select %128, %126, %129 : vector<8x16xi1>, vector<8x16xf32>
    %cst_64 = arith.constant 2.000000e+01 : f32
    %131 = vector.broadcast %cst_64 : f32 to vector<1x16xf32>
    %132 = arith.mulf %124, %131 : vector<1x16xf32>
    %cst_65 = arith.constant dense<0xFF800000> : vector<16xf32>
    %133 = vector.multi_reduction <maximumf>, %130, %cst_65 [0] : vector<8x16xf32> to vector<16xf32>
    %134 = vector.shape_cast %133 : vector<16xf32> to vector<1x16xf32>
    %135 = arith.maximumf %134, %132 : vector<1x16xf32>
    %136 = vector.broadcast %135 : vector<1x16xf32> to vector<8x16xf32>
    %137 = arith.subf %130, %136 : vector<8x16xf32>
    %138 = math.exp %137 : vector<8x16xf32>
    %cst_66 = arith.constant 0.000000e+00 : f32
    %139 = vector.shape_cast %54 : vector<8x1xi1> to vector<8x1xi1>
    %140 = vector.broadcast %139 : vector<8x1xi1> to vector<8x16xi1>
    %141 = vector.broadcast %cst_66 : f32 to vector<8x16xf32>
    %142 = arith.select %140, %138, %141 : vector<8x16xi1>, vector<8x16xf32>
    %cst_67 = arith.constant dense<0.000000e+00> : vector<16xf32>
    %143 = vector.multi_reduction <add>, %142, %cst_67 [0] : vector<8x16xf32> to vector<16xf32>
    %144 = vector.shape_cast %143 : vector<16xf32> to vector<1x16xf32>
    %145 = arith.subf %132, %135 : vector<1x16xf32>
    %146 = math.exp %145 : vector<1x16xf32>
    %147 = arith.addf %144, %146 : vector<1x16xf32>
    %cst_68 = arith.constant 9.99999968E-21 : f32
    %148 = vector.broadcast %cst_68 : f32 to vector<1x16xf32>
    %149 = arith.maximumf %147, %148 : vector<1x16xf32>
    %150 = vector.broadcast %59 : f32 to vector<1x16xf32>
    %151 = arith.divf %149, %150 : vector<1x16xf32>
    %cst_69 = arith.constant 9.99999968E-21 : f32
    %152 = vector.broadcast %cst_69 : f32 to vector<1x16xf32>
    %153 = arith.addf %151, %152 : vector<1x16xf32>
    %154 = math.log %153 : vector<1x16xf32>
    %155 = arith.addf %154, %135 : vector<1x16xf32>
    %cst_70 = arith.constant 5.000000e-02 : f32
    %156 = vector.broadcast %cst_70 : f32 to vector<1x16xf32>
    %157 = arith.mulf %155, %156 : vector<1x16xf32>
    %158 = vector.extract_strided_slice %36 {offsets = [16, 0], sizes = [8, 16], strides = [1, 1]} : vector<32x16xf32> to vector<8x16xf32>
    %159 = arith.mulf %158, %158 : vector<8x16xf32>
    %cst_71 = arith.constant dense<0.000000e+00> : vector<16xf32>
    %160 = vector.multi_reduction <add>, %159, %cst_71 [0] : vector<8x16xf32> to vector<16xf32>
    %161 = vector.shape_cast %160 : vector<16xf32> to vector<1x16xf32>
    %162 = math.sqrt %161 : vector<1x16xf32>
    %cst_72 = arith.constant 9.99999996E-13 : f32
    %163 = vector.broadcast %cst_72 : f32 to vector<1x16xf32>
    %164 = arith.maximumf %162, %163 : vector<1x16xf32>
    %cst_73 = arith.constant 1.000000e+00 : f32
    %165 = vector.broadcast %cst_73 : f32 to vector<1x16xf32>
    %166 = arith.divf %165, %164 : vector<1x16xf32>
    %167 = vector.extract_strided_slice %52 {offsets = [0, 16], sizes = [8, 8], strides = [1, 1]} : vector<8x32xf32> to vector<8x8xf32>
    %c2 = arith.constant 2 : index
    %c0_74 = arith.constant 0 : index
    %168 = vector.load %arg10[%c2, %c0_74] : memref<4x8xf32, #tpu.memory_space<vmem>>, vector<1x8xf32>
    %cst_75 = arith.constant dense<0.000000e+00> : vector<8x16xf32>
    %169 = tpu.matmul %167, %158, %cst_75 {dimension_numbers = #tpu.dot_dimension_numbers<[1], [0], [0], [1], [0, 0, 1, 1], [], []>} : vector<8x8xf32>, vector<8x16xf32>, vector<8x16xf32> -> vector<8x16xf32>
    %170 = vector.broadcast %166 : vector<1x16xf32> to vector<8x16xf32>
    %171 = arith.mulf %169, %170 : vector<8x16xf32>
    %cst_76 = arith.constant dense<0.000000e+00> : vector<1x16xf32>
    %172 = tpu.matmul %168, %158, %cst_76 {dimension_numbers = #tpu.dot_dimension_numbers<[1], [0], [0], [1], [0, 0, 1, 1], [], []>} : vector<1x8xf32>, vector<8x16xf32>, vector<1x16xf32> -> vector<1x16xf32>
    %173 = arith.mulf %172, %166 : vector<1x16xf32>
    %cst_77 = arith.constant 2.000000e+01 : f32
    %174 = vector.broadcast %cst_77 : f32 to vector<8x16xf32>
    %175 = arith.mulf %171, %174 : vector<8x16xf32>
    %cst_78 = arith.constant -1.000000e+30 : f32
    %176 = vector.shape_cast %54 : vector<8x1xi1> to vector<8x1xi1>
    %177 = vector.broadcast %176 : vector<8x1xi1> to vector<8x16xi1>
    %178 = vector.broadcast %cst_78 : f32 to vector<8x16xf32>
    %179 = arith.select %177, %175, %178 : vector<8x16xi1>, vector<8x16xf32>
    %cst_79 = arith.constant 2.000000e+01 : f32
    %180 = vector.broadcast %cst_79 : f32 to vector<1x16xf32>
    %181 = arith.mulf %173, %180 : vector<1x16xf32>
    %cst_80 = arith.constant dense<0xFF800000> : vector<16xf32>
    %182 = vector.multi_reduction <maximumf>, %179, %cst_80 [0] : vector<8x16xf32> to vector<16xf32>
    %183 = vector.shape_cast %182 : vector<16xf32> to vector<1x16xf32>
    %184 = arith.maximumf %183, %181 : vector<1x16xf32>
    %185 = vector.broadcast %184 : vector<1x16xf32> to vector<8x16xf32>
    %186 = arith.subf %179, %185 : vector<8x16xf32>
    %187 = math.exp %186 : vector<8x16xf32>
    %cst_81 = arith.constant 0.000000e+00 : f32
    %188 = vector.shape_cast %54 : vector<8x1xi1> to vector<8x1xi1>
    %189 = vector.broadcast %188 : vector<8x1xi1> to vector<8x16xi1>
    %190 = vector.broadcast %cst_81 : f32 to vector<8x16xf32>
    %191 = arith.select %189, %187, %190 : vector<8x16xi1>, vector<8x16xf32>
    %cst_82 = arith.constant dense<0.000000e+00> : vector<16xf32>
    %192 = vector.multi_reduction <add>, %191, %cst_82 [0] : vector<8x16xf32> to vector<16xf32>
    %193 = vector.shape_cast %192 : vector<16xf32> to vector<1x16xf32>
    %194 = arith.subf %181, %184 : vector<1x16xf32>
    %195 = math.exp %194 : vector<1x16xf32>
    %196 = arith.addf %193, %195 : vector<1x16xf32>
    %cst_83 = arith.constant 9.99999968E-21 : f32
    %197 = vector.broadcast %cst_83 : f32 to vector<1x16xf32>
    %198 = arith.maximumf %196, %197 : vector<1x16xf32>
    %199 = vector.broadcast %59 : f32 to vector<1x16xf32>
    %200 = arith.divf %198, %199 : vector<1x16xf32>
    %cst_84 = arith.constant 9.99999968E-21 : f32
    %201 = vector.broadcast %cst_84 : f32 to vector<1x16xf32>
    %202 = arith.addf %200, %201 : vector<1x16xf32>
    %203 = math.log %202 : vector<1x16xf32>
    %204 = arith.addf %203, %184 : vector<1x16xf32>
    %cst_85 = arith.constant 5.000000e-02 : f32
    %205 = vector.broadcast %cst_85 : f32 to vector<1x16xf32>
    %206 = arith.mulf %204, %205 : vector<1x16xf32>
    %207 = vector.extract_strided_slice %36 {offsets = [24, 0], sizes = [8, 16], strides = [1, 1]} : vector<32x16xf32> to vector<8x16xf32>
    %208 = arith.mulf %207, %207 : vector<8x16xf32>
    %cst_86 = arith.constant dense<0.000000e+00> : vector<16xf32>
    %209 = vector.multi_reduction <add>, %208, %cst_86 [0] : vector<8x16xf32> to vector<16xf32>
    %210 = vector.shape_cast %209 : vector<16xf32> to vector<1x16xf32>
    %211 = math.sqrt %210 : vector<1x16xf32>
    %cst_87 = arith.constant 9.99999996E-13 : f32
    %212 = vector.broadcast %cst_87 : f32 to vector<1x16xf32>
    %213 = arith.maximumf %211, %212 : vector<1x16xf32>
    %cst_88 = arith.constant 1.000000e+00 : f32
    %214 = vector.broadcast %cst_88 : f32 to vector<1x16xf32>
    %215 = arith.divf %214, %213 : vector<1x16xf32>
    %216 = vector.extract_strided_slice %52 {offsets = [0, 24], sizes = [8, 8], strides = [1, 1]} : vector<8x32xf32> to vector<8x8xf32>
    %c3 = arith.constant 3 : index
    %c0_89 = arith.constant 0 : index
    %217 = vector.load %arg10[%c3, %c0_89] : memref<4x8xf32, #tpu.memory_space<vmem>>, vector<1x8xf32>
    %cst_90 = arith.constant dense<0.000000e+00> : vector<8x16xf32>
    %218 = tpu.matmul %216, %207, %cst_90 {dimension_numbers = #tpu.dot_dimension_numbers<[1], [0], [0], [1], [0, 0, 1, 1], [], []>} : vector<8x8xf32>, vector<8x16xf32>, vector<8x16xf32> -> vector<8x16xf32>
    %219 = vector.broadcast %215 : vector<1x16xf32> to vector<8x16xf32>
    %220 = arith.mulf %218, %219 : vector<8x16xf32>
    %cst_91 = arith.constant dense<0.000000e+00> : vector<1x16xf32>
    %221 = tpu.matmul %217, %207, %cst_91 {dimension_numbers = #tpu.dot_dimension_numbers<[1], [0], [0], [1], [0, 0, 1, 1], [], []>} : vector<1x8xf32>, vector<8x16xf32>, vector<1x16xf32> -> vector<1x16xf32>
    %222 = arith.mulf %221, %215 : vector<1x16xf32>
    %cst_92 = arith.constant 2.000000e+01 : f32
    %223 = vector.broadcast %cst_92 : f32 to vector<8x16xf32>
    %224 = arith.mulf %220, %223 : vector<8x16xf32>
    %cst_93 = arith.constant -1.000000e+30 : f32
    %225 = vector.shape_cast %54 : vector<8x1xi1> to vector<8x1xi1>
    %226 = vector.broadcast %225 : vector<8x1xi1> to vector<8x16xi1>
    %227 = vector.broadcast %cst_93 : f32 to vector<8x16xf32>
    %228 = arith.select %226, %224, %227 : vector<8x16xi1>, vector<8x16xf32>
    %cst_94 = arith.constant 2.000000e+01 : f32
    %229 = vector.broadcast %cst_94 : f32 to vector<1x16xf32>
    %230 = arith.mulf %222, %229 : vector<1x16xf32>
    %cst_95 = arith.constant dense<0xFF800000> : vector<16xf32>
    %231 = vector.multi_reduction <maximumf>, %228, %cst_95 [0] : vector<8x16xf32> to vector<16xf32>
    %232 = vector.shape_cast %231 : vector<16xf32> to vector<1x16xf32>
    %233 = arith.maximumf %232, %230 : vector<1x16xf32>
    %234 = vector.broadcast %233 : vector<1x16xf32> to vector<8x16xf32>
    %235 = arith.subf %228, %234 : vector<8x16xf32>
    %236 = math.exp %235 : vector<8x16xf32>
    %cst_96 = arith.constant 0.000000e+00 : f32
    %237 = vector.shape_cast %54 : vector<8x1xi1> to vector<8x1xi1>
    %238 = vector.broadcast %237 : vector<8x1xi1> to vector<8x16xi1>
    %239 = vector.broadcast %cst_96 : f32 to vector<8x16xf32>
    %240 = arith.select %238, %236, %239 : vector<8x16xi1>, vector<8x16xf32>
    %cst_97 = arith.constant dense<0.000000e+00> : vector<16xf32>
    %241 = vector.multi_reduction <add>, %240, %cst_97 [0] : vector<8x16xf32> to vector<16xf32>
    %242 = vector.shape_cast %241 : vector<16xf32> to vector<1x16xf32>
    %243 = arith.subf %230, %233 : vector<1x16xf32>
    %244 = math.exp %243 : vector<1x16xf32>
    %245 = arith.addf %242, %244 : vector<1x16xf32>
    %cst_98 = arith.constant 9.99999968E-21 : f32
    %246 = vector.broadcast %cst_98 : f32 to vector<1x16xf32>
    %247 = arith.maximumf %245, %246 : vector<1x16xf32>
    %248 = vector.broadcast %59 : f32 to vector<1x16xf32>
    %249 = arith.divf %247, %248 : vector<1x16xf32>
    %cst_99 = arith.constant 9.99999968E-21 : f32
    %250 = vector.broadcast %cst_99 : f32 to vector<1x16xf32>
    %251 = arith.addf %249, %250 : vector<1x16xf32>
    %252 = math.log %251 : vector<1x16xf32>
    %253 = arith.addf %252, %233 : vector<1x16xf32>
    %cst_100 = arith.constant 5.000000e-02 : f32
    %254 = vector.broadcast %cst_100 : f32 to vector<1x16xf32>
    %255 = arith.mulf %253, %254 : vector<1x16xf32>
    %256 = tpu.concatenate %108, %157, %206, %255 in 0 : vector<1x16xf32>, vector<1x16xf32>, vector<1x16xf32>, vector<1x16xf32> -> vector<4x16xf32>
    %c0_101 = arith.constant 0 : index
    %c0_102 = arith.constant 0 : index
    %257 = vector.load %arg15[%c0_101, %c0_102] : memref<16x16xf32, #tpu.memory_space<vmem>>, vector<16x16xf32>
    %cst_103 = arith.constant dense<0.000000e+00> : vector<1x16xf32>
    %258 = tpu.matmul %7, %257, %cst_103 {dimension_numbers = #tpu.dot_dimension_numbers<[1], [0], [0], [1], [0, 0, 1, 1], [], []>} : vector<1x16xf32>, vector<16x16xf32>, vector<1x16xf32> -> vector<1x16xf32>
    %c0_104 = arith.constant 0 : index
    %c0_105 = arith.constant 0 : index
    %259 = vector.load %arg16[%c0_104, %c0_105] : memref<1x16xf32, #tpu.memory_space<vmem>>, vector<1x16xf32>
    %260 = arith.addf %258, %259 : vector<1x16xf32>
    %261 = arith.negf %260 : vector<1x16xf32>
    %262 = math.exp %261 : vector<1x16xf32>
    %cst_106 = arith.constant 1.000000e+00 : f32
    %263 = vector.broadcast %cst_106 : f32 to vector<1x16xf32>
    %264 = arith.addf %263, %262 : vector<1x16xf32>
    %265 = arith.divf %263, %264 : vector<1x16xf32>
    %c0_107 = arith.constant 0 : index
    %c0_108 = arith.constant 0 : index
    %266 = vector.load %arg17[%c0_107, %c0_108] : memref<1x16xf32, #tpu.memory_space<vmem>>, vector<1x16xf32>
    %267 = arith.mulf %265, %266 : vector<1x16xf32>
    %c0_109 = arith.constant 0 : index
    %c0_110 = arith.constant 0 : index
    %268 = vector.load %arg18[%c0_109, %c0_110] : memref<16x4xf32, #tpu.memory_space<vmem>>, vector<16x4xf32>
    %cst_111 = arith.constant dense<0.000000e+00> : vector<1x4xf32>
    %269 = tpu.matmul %267, %268, %cst_111 {dimension_numbers = #tpu.dot_dimension_numbers<[1], [0], [0], [1], [0, 0, 1, 1], [], []>} : vector<1x16xf32>, vector<16x4xf32>, vector<1x4xf32> -> vector<1x4xf32>
    %cst_112 = arith.constant dense<0.000000e+00> : vector<1x16xf32>
    %270 = tpu.matmul %269, %256, %cst_112 {dimension_numbers = #tpu.dot_dimension_numbers<[1], [0], [0], [1], [0, 0, 1, 1], [], []>} : vector<1x4xf32>, vector<4x16xf32>, vector<1x16xf32> -> vector<1x16xf32>
    %c0_113 = arith.constant 0 : index
    %c0_114 = arith.constant 0 : index
    %271 = vector.load %arg19[%c0_113, %c0_114] : memref<1x1xf32, #tpu.memory_space<vmem>>, vector<1x1xf32>
    %272 = vector.broadcast %271 : vector<1x1xf32> to vector<1x16xf32>
    %273 = arith.addf %270, %272 : vector<1x16xf32>
    %cst_115 = arith.constant 0.000000e+00 : f32
    %274 = vector.broadcast %cst_115 : f32 to vector<1x16xf32>
    %275 = arith.maximumf %273, %274 : vector<1x16xf32>
    %276 = vector.broadcast %cst_115 : f32 to vector<1x16xf32>
    %277 = arith.subf %273, %276 : vector<1x16xf32>
    %278 = arith.cmpf one, %277, %277 : vector<1x16xf32>
    %279 = vector.broadcast %cst_115 : f32 to vector<1x16xf32>
    %280 = arith.addf %273, %279 : vector<1x16xf32>
    %281 = math.absf %277 : vector<1x16xf32>
    %cst_116 = arith.constant 0.000000e+00 : f32
    %282 = vector.broadcast %cst_116 : f32 to vector<1x16xf32>
    %283 = arith.subf %282, %281 : vector<1x16xf32>
    %284 = math.exp %283 : vector<1x16xf32>
    %285 = math.log1p %284 : vector<1x16xf32>
    %286 = arith.addf %275, %285 : vector<1x16xf32>
    %287 = arith.select %278, %280, %286 : vector<1x16xi1>, vector<1x16xf32>
    %c0_117 = arith.constant 0 : index
    %c0_118 = arith.constant 0 : index
    %c0_119 = arith.constant 0 : index
    %288 = vector.load %arg20[%c0_117, %c0_118, %c0_119] : memref<1x1x16xf32, #tpu.memory_space<vmem>>, vector<1x1x16xf32>
    %289 = vector.shape_cast %288 : vector<1x1x16xf32> to vector<1x16xf32>
    %290 = vector.shape_cast %287 : vector<1x16xf32> to vector<1x1x16xf32>
    tpu.vector_store %arg20[%c0_117, %c0_118, %c0_119], %290 {strides = array<i32>} : memref<1x1x16xf32, #tpu.memory_space<vmem>>, vector<1x1x16xf32>,
    return
  }
  func.func @transform_0(%arg0: i32, %arg1: i32) -> (i32, i32, i32) {
    %c0_i32 = arith.constant 0 : i32
    %c0_i32_0 = arith.constant 0 : i32
    return %arg0, %arg1, %c0_i32 : i32, i32, i32
  }
  func.func @transform_1(%arg0: i32, %arg1: i32) -> (i32, i32, i32) {
    %c0_i32 = arith.constant 0 : i32
    %c0_i32_0 = arith.constant 0 : i32
    %c0_i32_1 = arith.constant 0 : i32
    return %arg0, %c0_i32, %c0_i32_0 : i32, i32, i32
  }
  func.func @transform_2(%arg0: i32, %arg1: i32) -> (i32, i32, i32) {
    %c0_i32 = arith.constant 0 : i32
    %c0_i32_0 = arith.constant 0 : i32
    %c0_i32_1 = arith.constant 0 : i32
    return %arg0, %c0_i32, %c0_i32_0 : i32, i32, i32
  }
  func.func @transform_3(%arg0: i32, %arg1: i32) -> (i32, i32, i32) {
    %c0_i32 = arith.constant 0 : i32
    %c0_i32_0 = arith.constant 0 : i32
    %c0_i32_1 = arith.constant 0 : i32
    return %arg0, %c0_i32, %c0_i32_0 : i32, i32, i32
  }
  func.func @transform_4(%arg0: i32, %arg1: i32) -> (i32, i32) {
    %c0_i32 = arith.constant 0 : i32
    %c0_i32_0 = arith.constant 0 : i32
    %c0_i32_1 = arith.constant 0 : i32
    return %c0_i32, %c0_i32_0 : i32, i32
  }
  func.func @transform_5(%arg0: i32, %arg1: i32) -> (i32, i32) {
    %c0_i32 = arith.constant 0 : i32
    %c0_i32_0 = arith.constant 0 : i32
    %c0_i32_1 = arith.constant 0 : i32
    return %c0_i32, %c0_i32_0 : i32, i32
  }
  func.func @transform_6(%arg0: i32, %arg1: i32) -> (i32, i32) {
    %c0_i32 = arith.constant 0 : i32
    %c0_i32_0 = arith.constant 0 : i32
    %c0_i32_1 = arith.constant 0 : i32
    return %c0_i32, %c0_i32_0 : i32, i32
  }
  func.func @transform_7(%arg0: i32, %arg1: i32) -> (i32, i32) {
    %c0_i32 = arith.constant 0 : i32
    %c0_i32_0 = arith.constant 0 : i32
    %c0_i32_1 = arith.constant 0 : i32
    return %c0_i32, %c0_i32_0 : i32, i32
  }
  func.func @transform_8(%arg0: i32, %arg1: i32) -> (i32, i32) {
    %c0_i32 = arith.constant 0 : i32
    %c0_i32_0 = arith.constant 0 : i32
    %c0_i32_1 = arith.constant 0 : i32
    return %c0_i32, %c0_i32_0 : i32, i32
  }
  func.func @transform_9(%arg0: i32, %arg1: i32) -> (i32, i32) {
    %c0_i32 = arith.constant 0 : i32
    %c0_i32_0 = arith.constant 0 : i32
    %c0_i32_1 = arith.constant 0 : i32
    return %c0_i32, %c0_i32_0 : i32, i32
  }
  func.func @transform_10(%arg0: i32, %arg1: i32) -> (i32, i32) {
    %c0_i32 = arith.constant 0 : i32
    %c0_i32_0 = arith.constant 0 : i32
    %c0_i32_1 = arith.constant 0 : i32
    return %c0_i32, %c0_i32_0 : i32, i32
  }
  func.func @transform_11(%arg0: i32, %arg1: i32) -> (i32, i32) {
    %c0_i32 = arith.constant 0 : i32
    %c0_i32_0 = arith.constant 0 : i32
    %c0_i32_1 = arith.constant 0 : i32
    return %c0_i32, %c0_i32_0 : i32, i32
  }
  func.func @transform_12(%arg0: i32, %arg1: i32) -> (i32, i32) {
    %c0_i32 = arith.constant 0 : i32
    %c0_i32_0 = arith.constant 0 : i32
    %c0_i32_1 = arith.constant 0 : i32
    return %c0_i32, %c0_i32_0 : i32, i32
  }
  func.func @transform_13(%arg0: i32, %arg1: i32) -> (i32, i32) {
    %c0_i32 = arith.constant 0 : i32
    %c0_i32_0 = arith.constant 0 : i32
    %c0_i32_1 = arith.constant 0 : i32
    return %c0_i32, %c0_i32_0 : i32, i32
  }
  func.func @transform_14(%arg0: i32, %arg1: i32) -> (i32, i32) {
    %c0_i32 = arith.constant 0 : i32
    %c0_i32_0 = arith.constant 0 : i32
    %c0_i32_1 = arith.constant 0 : i32
    return %c0_i32, %c0_i32_0 : i32, i32
  }
  func.func @transform_15(%arg0: i32, %arg1: i32) -> (i32, i32) {
    %c0_i32 = arith.constant 0 : i32
    %c0_i32_0 = arith.constant 0 : i32
    %c0_i32_1 = arith.constant 0 : i32
    return %c0_i32, %c0_i32_0 : i32, i32
  }
  func.func @transform_16(%arg0: i32, %arg1: i32) -> (i32, i32) {
    %c0_i32 = arith.constant 0 : i32
    %c0_i32_0 = arith.constant 0 : i32
    %c0_i32_1 = arith.constant 0 : i32
    return %c0_i32, %c0_i32_0 : i32, i32
  }
  func.func @transform_17(%arg0: i32, %arg1: i32) -> (i32, i32) {
    %c0_i32 = arith.constant 0 : i32
    %c0_i32_0 = arith.constant 0 : i32
    %c0_i32_1 = arith.constant 0 : i32
    return %c0_i32, %c0_i32_0 : i32, i32
  }
  func.func @transform_18(%arg0: i32, %arg1: i32) -> (i32, i32, i32) {
    %c0_i32 = arith.constant 0 : i32
    %c0_i32_0 = arith.constant 0 : i32
    return %arg0, %c0_i32, %arg1 : i32, i32, i32
  }
}

</mosaic_0001>

<llo_original>
// kernel: tpu_custom_call.1
$region0: #{tpu_custom_call.1}
  #allocation0 [shape = 'u32[]', space=smem, size = 0x4, offset = 0x4, fixed_abs, tag = 'smem constant byte address 0x4 - core index']
  #allocation1 [shape = 'u32[144,128]{1,0:T(1,128)}', space=vmem, size = 0x12000, scoped, tag = 'internal scratch']
  #allocation2 [shape = 'f32[1,1]{1,0:T(1,128)S(1)}', space=vmem, size = 0x200, scoped, tag = 'scoped memory for tpu_custom_call.1']
  %s0 = inlined_call_operand.hbm [shape: f32[2,16,32], index: 0, kind: input, shape index: {}]
  %s1 = inlined_call_operand.hbm [shape: f32[2,8,32], index: 1, kind: input, shape index: {}]
  %s2 = inlined_call_operand.hbm [shape: f32[2,8,1], index: 2, kind: input, shape index: {}]
  %s3 = inlined_call_operand.hbm [shape: f32[2,1,16], index: 3, kind: input, shape index: {}]
  %s4 = inlined_call_operand.hbm [shape: f32[1,32], index: 4, kind: input, shape index: {}]
  %s5 = inlined_call_operand.hbm [shape: f32[1,32], index: 5, kind: input, shape index: {}]
  %s6 = inlined_call_operand.hbm [shape: f32[32,32], index: 6, kind: input, shape index: {}]
  %s7 = inlined_call_operand.hbm [shape: f32[32,1], index: 7, kind: input, shape index: {}]
  %s8 = inlined_call_operand.hbm [shape: f32[4,8], index: 8, kind: input, shape index: {}]
  %s9 = inlined_call_operand.hbm [shape: f32[32,32], index: 9, kind: input, shape index: {}]
  %s10 = inlined_call_operand.hbm [shape: f32[1,32], index: 10, kind: input, shape index: {}]
  %s11 = inlined_call_operand.hbm [shape: f32[32,4], index: 11, kind: input, shape index: {}]
  %s12 = inlined_call_operand.hbm [shape: f32[4,32], index: 12, kind: input, shape index: {}]
  %s13 = inlined_call_operand.hbm [shape: f32[16,16], index: 13, kind: input, shape index: {}]
  %s14 = inlined_call_operand.hbm [shape: f32[1,16], index: 14, kind: input, shape index: {}]
  %s15 = inlined_call_operand.hbm [shape: f32[1,16], index: 15, kind: input, shape index: {}]
  %s16 = inlined_call_operand.hbm [shape: f32[16,4], index: 16, kind: input, shape index: {}]
  %s17 = inlined_call_operand.<no memory space> [shape: f32[1,1], index: 17, kind: input, shape index: {}]
  %s18 = inlined_call_operand.hbm [shape: f32[2,1,16], index: 18, kind: output, shape index: {}]
  %s19 = sld [smem:[#allocation0]]
  $region173: #{tpu_custom_call.1} parent=0
    _
  %s21 = ssub.s32 1, %s19
  %s22 = scalar_select 0, %s21, %s19
  %v23 = vstv %s17
  %24 = vst [vmem:[#allocation2] sm:$0x1] %v23
  $region1: #{tpu_custom_call.1} parent=0
    #allocation3 [shape = 'u8[16384]{0}', space=vmem, size = 0x4000, scoped, tag = 'input window, operand 0']
    #allocation4 [shape = 's32[2]{0}', space=sflag, size = 0x8, scoped, tag = 'scoped memory for tpu_custom_call.1']
    #allocation5 [shape = 's32[2]{0}', space=sflag, size = 0x8, scoped, tag = 'scoped memory for tpu_custom_call.1']
    #allocation6 [shape = 'u8[8192]{0}', space=vmem, size = 0x2000, scoped, tag = 'input window, operand 1']
    #allocation7 [shape = 's32[2]{0}', space=sflag, size = 0x8, scoped, tag = 'scoped memory for tpu_custom_call.1']
    #allocation8 [shape = 'u8[8192]{0}', space=vmem, size = 0x2000, scoped, tag = 'input window, operand 2']
    #allocation9 [shape = 'u8[1024]{0}', space=vmem, size = 0x400, scoped, tag = 'input window, operand 3']
    #allocation10 [shape = 's32[2]{0}', space=sflag, size = 0x8, scoped, tag = 'scoped memory for tpu_custom_call.1']
    #allocation11 [shape = 'u8[512]{0}', space=vmem, size = 0x400, scoped, tag = 'input window, operand 4, single buffered']
    #allocation12 [shape = 'u8[512]{0}', space=vmem, size = 0x400, scoped, tag = 'input window, operand 5, single buffered']
    #allocation13 [shape = 's32[1]{0}', space=sflag, size = 0x4, scoped, tag = 'scoped memory for tpu_custom_call.1']
    #allocation14 [shape = 'u8[16384]{0}', space=vmem, size = 0x4000, scoped, tag = 'input window, operand 6, single buffered']
    #allocation15 [shape = 'u8[16384]{0}', space=vmem, size = 0x4000, scoped, tag = 'input window, operand 7, single buffered']
    #allocation16 [shape = 's32[1]{0}', space=sflag, size = 0x4, scoped, tag = 'scoped memory for tpu_custom_call.1']
    #allocation17 [shape = 'u8[2048]{0}', space=vmem, size = 0x800, scoped, tag = 'input window, operand 8, single buffered']
    #allocation18 [shape = 'u8[16384]{0}', space=vmem, size = 0x4000, scoped, tag = 'input window, operand 9, single buffered']
    #allocation19 [shape = 's32[1]{0}', space=sflag, size = 0x4, scoped, tag = 'scoped memory for tpu_custom_call.1']
    #allocation20 [shape = 'u8[512]{0}', space=vmem, size = 0x400, scoped, tag = 'input window, operand 10, single buffered']
    #allocation21 [shape = 'u8[16384]{0}', space=vmem, size = 0x4000, scoped, tag = 'input window, operand 11, single buffered']
    #allocation22 [shape = 's32[1]{0}', space=sflag, size = 0x4, scoped, tag = 'scoped memory for tpu_custom_call.1']
    #allocation23 [shape = 'u8[2048]{0}', space=vmem, size = 0x800, scoped, tag = 'input window, operand 12, single buffered']
    #allocation24 [shape = 'u8[8192]{0}', space=vmem, size = 0x2000, scoped, tag = 'input window, operand 13, single buffered']
    #allocation25 [shape = 's32[1]{0}', space=sflag, size = 0x4, scoped, tag = 'scoped memory for tpu_custom_call.1']
    #allocation26 [shape = 'u8[512]{0}', space=vmem, size = 0x400, scoped, tag = 'input window, operand 14, single buffered']
    #allocation27 [shape = 'u8[512]{0}', space=vmem, size = 0x400, scoped, tag = 'input window, operand 15, single buffered']
    #allocation28 [shape = 's32[1]{0}', space=sflag, size = 0x4, scoped, tag = 'scoped memory for tpu_custom_call.1']
    #allocation29 [shape = 'u8[8192]{0}', space=vmem, size = 0x2000, scoped, tag = 'input window, operand 16, single buffered']
    #allocation30 [shape = 'u8[1024]{0}', space=vmem, size = 0x400, scoped, tag = 'output window, operand 0']
    %25 = vsyncpa [#allocation4], 0
    %s26 = scalar_lea.sflag [#allocation4], 1
    %27 = vsyncpa %s26, 0
    %28 = vsyncpa [#allocation7], 0
    %s29 = scalar_lea.sflag [#allocation7], 1
    %30 = vsyncpa %s29, 0
    %31 = vsyncpa [#allocation10], 0
    %s32 = scalar_lea.sflag [#allocation10], 1
    %33 = vsyncpa %s32, 0
    %34 = vsyncpa [#allocation13], 0
    %35 = vsyncpa [#allocation16], 0
    %36 = vsyncpa [#allocation19], 0
    %37 = vsyncpa [#allocation22], 0
    %38 = vsyncpa [#allocation25], 0
    %39 = vsyncpa [#allocation28], 0
    %40 = vsyncpa [#allocation5], 0
    %s41 = scalar_lea.sflag [#allocation5], 1
    %42 = vsyncpa %s41, 0
    loop: start=0, step=1, limit=4
    $region2: #{tpu_custom_call.1} parent=1 // loop_pre_header
      _
    $region3: #{tpu_custom_call.1} parent=1 // loop_header
      %s44 = sphi 0, %s48
      %p45 = scmp.ge.s32.totalorder %s44, 4
      %s51 = sphi 0, %s63
      %s52 = sphi 0, %s59
      %s53 = sphi 0, %s51
      %s54 = sphi 0, %s52
      %s55 = sphi 0, %s53
      %s56 = sphi 0, %s54
      %s68 = sphi 0, %s70
      %s71 = sphi 0, %s68
      %s72 = sphi 0, %s71
      %s88 = sphi 0, %s72
      %s94 = sphi 0, %s96
      %s97 = sphi 0, %s94
      %s98 = sphi 0, %s97
      %s114 = sphi 0, %s98
      %s120 = sphi 0, %s122
      %s123 = sphi 0, %s120
      %s124 = sphi 0, %s123
      %s140 = sphi 0, %s124
      %s146 = sphi 0, %s148
      %s149 = sphi 0, %s146
      %s150 = sphi 0, %s149
      %s166 = sphi 0, %s150
      %s170 = sphi 0, %s170
      %s172 = sphi 0, %s170
      %s173 = sphi 0, %s172
      %s187 = sphi 0, %s173
      %s191 = sphi 0, %s191
      %s193 = sphi 0, %s191
      %s194 = sphi 0, %s193
      %s208 = sphi 0, %s194
      %s212 = sphi 0, %s212
      %s214 = sphi 0, %s212
      %s215 = sphi 0, %s214
      %s229 = sphi 0, %s215
      %s233 = sphi 0, %s233
      %s235 = sphi 0, %s233
      %s236 = sphi 0, %s235
      %s250 = sphi 0, %s236
      %s254 = sphi 0, %s254
      %s256 = sphi 0, %s254
      %s257 = sphi 0, %s256
      %s271 = sphi 0, %s257
      %s275 = sphi 0, %s275
      %s277 = sphi 0, %s275
      %s278 = sphi 0, %s277
      %s292 = sphi 0, %s278
      %s296 = sphi 0, %s296
      %s298 = sphi 0, %s296
      %s299 = sphi 0, %s298
      %s313 = sphi 0, %s299
      %s317 = sphi 0, %s317
      %s319 = sphi 0, %s317
      %s320 = sphi 0, %s319
      %s334 = sphi 0, %s320
      %s338 = sphi 0, %s338
      %s340 = sphi 0, %s338
      %s341 = sphi 0, %s340
      %s355 = sphi 0, %s341
      %s359 = sphi 0, %s359
      %s361 = sphi 0, %s359
      %s362 = sphi 0, %s361
      %s376 = sphi 0, %s362
      %s380 = sphi 0, %s380
      %s382 = sphi 0, %s380
      %s383 = sphi 0, %s382
      %s397 = sphi 0, %s383
      %s401 = sphi 0, %s401
      %s403 = sphi 0, %s401
      %s404 = sphi 0, %s403
      %s418 = sphi 0, %s404
      %s422 = sphi 0, %s422
      %s424 = sphi 0, %s422
      %s425 = sphi 0, %s424
      %s439 = sphi 0, %s425
      %s443 = sphi 0, %s443
      %s445 = sphi 0, %s443
      %s446 = sphi 0, %s445
      %s460 = sphi 0, %s446
      %s468 = sphi 0, %s470
      %s471 = sphi 0, %s468
      %s472 = sphi 0, %s471
      %s488 = sphi 0, %s472
    $region4: #{tpu_custom_call.1} parent=1 // loop_header_branch
      %47 = sbr.rel (%p45) target = $region8
    $region5: #{tpu_custom_call.1} parent=1 // loop_body
      %s49 = ssub.s32 %s44, 1
      %s50 = ssub.s32 %s44, 2
      %s57 = sadd.s32 1, %s52
      %p58 = scmp.ge.s32.totalorder %s57, 1
      %s59 = scalar_select %p58, 0, %s57
      %s60 = sadd.s32 1, %s51
      %s61 = scalar_select %p58, %s60, %s51
      %p62 = scmp.ge.s32.totalorder %s61, 2
      %s63 = scalar_select %p62, 0, %s61
      %s64 = ssub.s32 %s51, %s63
      %s65 = ssub.s32 %s52, %s59
      %s66 = sor.u32 %s64, %s65
      %p67 = scmp.eq.s32.totalorder %s66, 0
      %s69 = sadd.s32 %s68, 1
      %s70 = scalar_select %p67, %s68, %s69
      %p73 = pneg %p67
      %p74 = scmp.eq.s32.totalorder %s44, 1
      %p75 = por %p73, %p74
      %p76 = scmp.ne.s32.totalorder %s68, %s71
      %p77 = scmp.eq.s32.totalorder %s44, 0
      %p78 = por %p76, %p77
      %p79 = scmp.ne.s32.totalorder %s68, %s71
      %p80 = scmp.eq.s32.totalorder %s49, 1
      %p81 = por %p79, %p80
      %p82 = scmp.ne.s32.totalorder %s71, %s72
      %p83 = scmp.eq.s32.totalorder %s49, 0
      %p84 = por %p82, %p83
      %p85 = scmp.ne.s32.totalorder %s71, %s72
      %p86 = scmp.eq.s32.totalorder %s50, 1
      %p87 = por %p85, %p86
      %p89 = scmp.ne.s32.totalorder %s72, %s88
      %p90 = scmp.eq.s32.totalorder %s50, 0
      %p91 = por %p89, %p90
      %s92 = ssub.s32 %s51, %s63
      %p93 = scmp.eq.s32.totalorder %s92, 0
      %s95 = sadd.s32 %s94, 1
      %s96 = scalar_select %p93, %s94, %s95
      %p99 = pneg %p93
      %p100 = scmp.eq.s32.totalorder %s44, 1
      %p101 = por %p99, %p100
      %p102 = scmp.ne.s32.totalorder %s94, %s97
      %p103 = scmp.eq.s32.totalorder %s44, 0
      %p104 = por %p102, %p103
      %p105 = scmp.ne.s32.totalorder %s94, %s97
      %p106 = scmp.eq.s32.totalorder %s49, 1
      %p107 = por %p105, %p106
      %p108 = scmp.ne.s32.totalorder %s97, %s98
      %p109 = scmp.eq.s32.totalorder %s49, 0
      %p110 = por %p108, %p109
      %p111 = scmp.ne.s32.totalorder %s97, %s98
      %p112 = scmp.eq.s32.totalorder %s50, 1
      %p113 = por %p111, %p112
      %p115 = scmp.ne.s32.totalorder %s98, %s114
      %p116 = scmp.eq.s32.totalorder %s50, 0
      %p117 = por %p115, %p116
      %s118 = ssub.s32 %s51, %s63
      %p119 = scmp.eq.s32.totalorder %s118, 0
      %s121 = sadd.s32 %s120, 1
      %s122 = scalar_select %p119, %s120, %s121
      %p125 = pneg %p119
      %p126 = scmp.eq.s32.totalorder %s44, 1
      %p127 = por %p125, %p126
      %p128 = scmp.ne.s32.totalorder %s120, %s123
      %p129 = scmp.eq.s32.totalorder %s44, 0
      %p130 = por %p128, %p129
      %p131 = scmp.ne.s32.totalorder %s120, %s123
      %p132 = scmp.eq.s32.totalorder %s49, 1
      %p133 = por %p131, %p132
      %p134 = scmp.ne.s32.totalorder %s123, %s124
      %p135 = scmp.eq.s32.totalorder %s49, 0
      %p136 = por %p134, %p135
      %p137 = scmp.ne.s32.totalorder %s123, %s124
      %p138 = scmp.eq.s32.totalorder %s50, 1
      %p139 = por %p137, %p138
      %p141 = scmp.ne.s32.totalorder %s124, %s140
      %p142 = scmp.eq.s32.totalorder %s50, 0
      %p143 = por %p141, %p142
      %s144 = ssub.s32 %s51, %s63
      %p145 = scmp.eq.s32.totalorder %s144, 0
      %s147 = sadd.s32 %s146, 1
      %s148 = scalar_select %p145, %s146, %s147
      %p151 = pneg %p145
      %p152 = scmp.eq.s32.totalorder %s44, 1
      %p153 = por %p151, %p152
      %p154 = scmp.ne.s32.totalorder %s146, %s149
      %p155 = scmp.eq.s32.totalorder %s44, 0
      %p156 = por %p154, %p155
      %p157 = scmp.ne.s32.totalorder %s146, %s149
      %p158 = scmp.eq.s32.totalorder %s49, 1
      %p159 = por %p157, %p158
      %p160 = scmp.ne.s32.totalorder %s149, %s150
      %p161 = scmp.eq.s32.totalorder %s49, 0
      %p162 = por %p160, %p161
      %p163 = scmp.ne.s32.totalorder %s149, %s150
      %p164 = scmp.eq.s32.totalorder %s50, 1
      %p165 = por %p163, %p164
      %p167 = scmp.ne.s32.totalorder %s150, %s166
      %p168 = scmp.eq.s32.totalorder %s50, 0
      %p169 = por %p167, %p168
      %s171 = sadd.s32 %s170, 1
      %p174 = scmp.eq.s32.totalorder %s44, 1
      %p175 = scmp.ne.s32.totalorder %s170, %s172
      %p176 = scmp.eq.s32.totalorder %s44, 0
      %p177 = por %p175, %p176
      %p178 = scmp.ne.s32.totalorder %s170, %s172
      %p179 = scmp.eq.s32.totalorder %s49, 1
      %p180 = por %p178, %p179
      %p181 = scmp.ne.s32.totalorder %s172, %s173
      %p182 = scmp.eq.s32.totalorder %s49, 0
      %p183 = por %p181, %p182
      %p184 = scmp.ne.s32.totalorder %s172, %s173
      %p185 = scmp.eq.s32.totalorder %s50, 1
      %p186 = por %p184, %p185
      %p188 = scmp.ne.s32.totalorder %s173, %s187
      %p189 = scmp.eq.s32.totalorder %s50, 0
      %p190 = por %p188, %p189
      %s192 = sadd.s32 %s191, 1
      %p195 = scmp.eq.s32.totalorder %s44, 1
      %p196 = scmp.ne.s32.totalorder %s191, %s193
      %p197 = scmp.eq.s32.totalorder %s44, 0
      %p198 = por %p196, %p197
      %p199 = scmp.ne.s32.totalorder %s191, %s193
      %p200 = scmp.eq.s32.totalorder %s49, 1
      %p201 = por %p199, %p200
      %p202 = scmp.ne.s32.totalorder %s193, %s194
      %p203 = scmp.eq.s32.totalorder %s49, 0
      %p204 = por %p202, %p203
      %p205 = scmp.ne.s32.totalorder %s193, %s194
      %p206 = scmp.eq.s32.totalorder %s50, 1
      %p207 = por %p205, %p206
      %p209 = scmp.ne.s32.totalorder %s194, %s208
      %p210 = scmp.eq.s32.totalorder %s50, 0
      %p211 = por %p209, %p210
      %s213 = sadd.s32 %s212, 1
      %p216 = scmp.eq.s32.totalorder %s44, 1
      %p217 = scmp.ne.s32.totalorder %s212, %s214
      %p218 = scmp.eq.s32.totalorder %s44, 0
      %p219 = por %p217, %p218
      %p220 = scmp.ne.s32.totalorder %s212, %s214
      %p221 = scmp.eq.s32.totalorder %s49, 1
      %p222 = por %p220, %p221
      %p223 = scmp.ne.s32.totalorder %s214, %s215
      %p224 = scmp.eq.s32.totalorder %s49, 0
      %p225 = por %p223, %p224
      %p226 = scmp.ne.s32.totalorder %s214, %s215
      %p227 = scmp.eq.s32.totalorder %s50, 1
      %p228 = por %p226, %p227
      %p230 = scmp.ne.s32.totalorder %s215, %s229
      %p231 = scmp.eq.s32.totalorder %s50, 0
      %p232 = por %p230, %p231
      %s234 = sadd.s32 %s233, 1
      %p237 = scmp.eq.s32.totalorder %s44, 1
      %p238 = scmp.ne.s32.totalorder %s233, %s235
      %p239 = scmp.eq.s32.totalorder %s44, 0
      %p240 = por %p238, %p239
      %p241 = scmp.ne.s32.totalorder %s233, %s235
      %p242 = scmp.eq.s32.totalorder %s49, 1
      %p243 = por %p241, %p242
      %p244 = scmp.ne.s32.totalorder %s235, %s236
      %p245 = scmp.eq.s32.totalorder %s49, 0
      %p246 = por %p244, %p245
      %p247 = scmp.ne.s32.totalorder %s235, %s236
      %p248 = scmp.eq.s32.totalorder %s50, 1
      %p249 = por %p247, %p248
      %p251 = scmp.ne.s32.totalorder %s236, %s250
      %p252 = scmp.eq.s32.totalorder %s50, 0
      %p253 = por %p251, %p252
      %s255 = sadd.s32 %s254, 1
      %p258 = scmp.eq.s32.totalorder %s44, 1
      %p259 = scmp.ne.s32.totalorder %s254, %s256
      %p260 = scmp.eq.s32.totalorder %s44, 0
      %p261 = por %p259, %p260
      %p262 = scmp.ne.s32.totalorder %s254, %s256
      %p263 = scmp.eq.s32.totalorder %s49, 1
      %p264 = por %p262, %p263
      %p265 = scmp.ne.s32.totalorder %s256, %s257
      %p266 = scmp.eq.s32.totalorder %s49, 0
      %p267 = por %p265, %p266
      %p268 = scmp.ne.s32.totalorder %s256, %s257
      %p269 = scmp.eq.s32.totalorder %s50, 1
      %p270 = por %p268, %p269
      %p272 = scmp.ne.s32.totalorder %s257, %s271
      %p273 = scmp.eq.s32.totalorder %s50, 0
      %p274 = por %p272, %p273
      %s276 = sadd.s32 %s275, 1
      %p279 = scmp.eq.s32.totalorder %s44, 1
      %p280 = scmp.ne.s32.totalorder %s275, %s277
      %p281 = scmp.eq.s32.totalorder %s44, 0
      %p282 = por %p280, %p281
      %p283 = scmp.ne.s32.totalorder %s275, %s277
      %p284 = scmp.eq.s32.totalorder %s49, 1
      %p285 = por %p283, %p284
      %p286 = scmp.ne.s32.totalorder %s277, %s278
      %p287 = scmp.eq.s32.totalorder %s49, 0
      %p288 = por %p286, %p287
      %p289 = scmp.ne.s32.totalorder %s277, %s278
      %p290 = scmp.eq.s32.totalorder %s50, 1
      %p291 = por %p289, %p290
      %p293 = scmp.ne.s32.totalorder %s278, %s292
      %p294 = scmp.eq.s32.totalorder %s50, 0
      %p295 = por %p293, %p294
      %s297 = sadd.s32 %s296, 1
      %p300 = scmp.eq.s32.totalorder %s44, 1
      %p301 = scmp.ne.s32.totalorder %s296, %s298
      %p302 = scmp.eq.s32.totalorder %s44, 0
      %p303 = por %p301, %p302
      %p304 = scmp.ne.s32.totalorder %s296, %s298
      %p305 = scmp.eq.s32.totalorder %s49, 1
      %p306 = por %p304, %p305
      %p307 = scmp.ne.s32.totalorder %s298, %s299
      %p308 = scmp.eq.s32.totalorder %s49, 0
      %p309 = por %p307, %p308
      %p310 = scmp.ne.s32.totalorder %s298, %s299
      %p311 = scmp.eq.s32.totalorder %s50, 1
      %p312 = por %p310, %p311
      %p314 = scmp.ne.s32.totalorder %s299, %s313
      %p315 = scmp.eq.s32.totalorder %s50, 0
      %p316 = por %p314, %p315
      %s318 = sadd.s32 %s317, 1
      %p321 = scmp.eq.s32.totalorder %s44, 1
      %p322 = scmp.ne.s32.totalorder %s317, %s319
      %p323 = scmp.eq.s32.totalorder %s44, 0
      %p324 = por %p322, %p323
      %p325 = scmp.ne.s32.totalorder %s317, %s319
      %p326 = scmp.eq.s32.totalorder %s49, 1
      %p327 = por %p325, %p326
      %p328 = scmp.ne.s32.totalorder %s319, %s320
      %p329 = scmp.eq.s32.totalorder %s49, 0
      %p330 = por %p328, %p329
      %p331 = scmp.ne.s32.totalorder %s319, %s320
      %p332 = scmp.eq.s32.totalorder %s50, 1
      %p333 = por %p331, %p332
      %p335 = scmp.ne.s32.totalorder %s320, %s334
      %p336 = scmp.eq.s32.totalorder %s50, 0
      %p337 = por %p335, %p336
      %s339 = sadd.s32 %s338, 1
      %p342 = scmp.eq.s32.totalorder %s44, 1
      %p343 = scmp.ne.s32.totalorder %s338, %s340
      %p344 = scmp.eq.s32.totalorder %s44, 0
      %p345 = por %p343, %p344
      %p346 = scmp.ne.s32.totalorder %s338, %s340
      %p347 = scmp.eq.s32.totalorder %s49, 1
      %p348 = por %p346, %p347
      %p349 = scmp.ne.s32.totalorder %s340, %s341
      %p350 = scmp.eq.s32.totalorder %s49, 0
      %p351 = por %p349, %p350
      %p352 = scmp.ne.s32.totalorder %s340, %s341
      %p353 = scmp.eq.s32.totalorder %s50, 1
      %p354 = por %p352, %p353
      %p356 = scmp.ne.s32.totalorder %s341, %s355
      %p357 = scmp.eq.s32.totalorder %s50, 0
      %p358 = por %p356, %p357
      %s360 = sadd.s32 %s359, 1
      %p363 = scmp.eq.s32.totalorder %s44, 1
      %p364 = scmp.ne.s32.totalorder %s359, %s361
      %p365 = scmp.eq.s32.totalorder %s44, 0
      %p366 = por %p364, %p365
      %p367 = scmp.ne.s32.totalorder %s359, %s361
      %p368 = scmp.eq.s32.totalorder %s49, 1
      %p369 = por %p367, %p368
      %p370 = scmp.ne.s32.totalorder %s361, %s362
      %p371 = scmp.eq.s32.totalorder %s49, 0
      %p372 = por %p370, %p371
      %p373 = scmp.ne.s32.totalorder %s361, %s362
      %p374 = scmp.eq.s32.totalorder %s50, 1
      %p375 = por %p373, %p374
      %p377 = scmp.ne.s32.totalorder %s362, %s376
      %p378 = scmp.eq.s32.totalorder %s50, 0
      %p379 = por %p377, %p378
      %s381 = sadd.s32 %s380, 1
      %p384 = scmp.eq.s32.totalorder %s44, 1
      %p385 = scmp.ne.s32.totalorder %s380, %s382
      %p386 = scmp.eq.s32.totalorder %s44, 0
      %p387 = por %p385, %p386
      %p388 = scmp.ne.s32.totalorder %s380, %s382
      %p389 = scmp.eq.s32.totalorder %s49, 1
      %p390 = por %p388, %p389
      %p391 = scmp.ne.s32.totalorder %s382, %s383
      %p392 = scmp.eq.s32.totalorder %s49, 0
      %p393 = por %p391, %p392
      %p394 = scmp.ne.s32.totalorder %s382, %s383
      %p395 = scmp.eq.s32.totalorder %s50, 1
      %p396 = por %p394, %p395
      %p398 = scmp.ne.s32.totalorder %s383, %s397
      %p399 = scmp.eq.s32.totalorder %s50, 0
      %p400 = por %p398, %p399
      %s402 = sadd.s32 %s401, 1
      %p405 = scmp.eq.s32.totalorder %s44, 1
      %p406 = scmp.ne.s32.totalorder %s401, %s403
      %p407 = scmp.eq.s32.totalorder %s44, 0
      %p408 = por %p406, %p407
      %p409 = scmp.ne.s32.totalorder %s401, %s403
      %p410 = scmp.eq.s32.totalorder %s49, 1
      %p411 = por %p409, %p410
      %p412 = scmp.ne.s32.totalorder %s403, %s404
      %p413 = scmp.eq.s32.totalorder %s49, 0
      %p414 = por %p412, %p413
      %p415 = scmp.ne.s32.totalorder %s403, %s404
      %p416 = scmp.eq.s32.totalorder %s50, 1
      %p417 = por %p415, %p416
      %p419 = scmp.ne.s32.totalorder %s404, %s418
      %p420 = scmp.eq.s32.totalorder %s50, 0
      %p421 = por %p419, %p420
      %s423 = sadd.s32 %s422, 1
      %p426 = scmp.eq.s32.totalorder %s44, 1
      %p427 = scmp.ne.s32.totalorder %s422, %s424
      %p428 = scmp.eq.s32.totalorder %s44, 0
      %p429 = por %p427, %p428
      %p430 = scmp.ne.s32.totalorder %s422, %s424
      %p431 = scmp.eq.s32.totalorder %s49, 1
      %p432 = por %p430, %p431
      %p433 = scmp.ne.s32.totalorder %s424, %s425
      %p434 = scmp.eq.s32.totalorder %s49, 0
      %p435 = por %p433, %p434
      %p436 = scmp.ne.s32.totalorder %s424, %s425
      %p437 = scmp.eq.s32.totalorder %s50, 1
      %p438 = por %p436, %p437
      %p440 = scmp.ne.s32.totalorder %s425, %s439
      %p441 = scmp.eq.s32.totalorder %s50, 0
      %p442 = por %p440, %p441
      %s444 = sadd.s32 %s443, 1
      %p447 = scmp.eq.s32.totalorder %s44, 1
      %p448 = scmp.ne.s32.totalorder %s443, %s445
      %p449 = scmp.eq.s32.totalorder %s44, 0
      %p450 = por %p448, %p449
      %p451 = scmp.ne.s32.totalorder %s443, %s445
      %p452 = scmp.eq.s32.totalorder %s49, 1
      %p453 = por %p451, %p452
      %p454 = scmp.ne.s32.totalorder %s445, %s446
      %p455 = scmp.eq.s32.totalorder %s49, 0
      %p456 = por %p454, %p455
      %p457 = scmp.ne.s32.totalorder %s445, %s446
      %p458 = scmp.eq.s32.totalorder %s50, 1
      %p459 = por %p457, %p458
      %p461 = scmp.ne.s32.totalorder %s446, %s460
      %p462 = scmp.eq.s32.totalorder %s50, 0
      %p463 = por %p461, %p462
      %s464 = ssub.s32 %s51, %s63
      %s465 = ssub.s32 %s52, %s59
      %s466 = sor.u32 %s464, %s465
      %p467 = scmp.eq.s32.totalorder %s466, 0
      %s469 = sadd.s32 %s468, 1
      %s470 = scalar_select %p467, %s468, %s469
      %p473 = pneg %p467
      %p474 = scmp.eq.s32.totalorder %s44, 1
      %p475 = por %p473, %p474
      %p476 = scmp.ne.s32.totalorder %s468, %s471
      %p477 = scmp.eq.s32.totalorder %s44, 0
      %p478 = por %p476, %p477
      %p479 = scmp.ne.s32.totalorder %s468, %s471
      %p480 = scmp.eq.s32.totalorder %s49, 1
      %p481 = por %p479, %p480
      %p482 = scmp.ne.s32.totalorder %s471, %s472
      %p483 = scmp.eq.s32.totalorder %s49, 0
      %p484 = por %p482, %p483
      %p485 = scmp.ne.s32.totalorder %s471, %s472
      %p486 = scmp.eq.s32.totalorder %s50, 1
      %p487 = por %p485, %p486
      %p489 = scmp.ne.s32.totalorder %s472, %s488
      %p490 = scmp.eq.s32.totalorder %s50, 0
      %p491 = por %p489, %p490
      %p492 = scmp.le.s32.totalorder 1, %s44
      %p493 = scmp.lt.s32.totalorder %s44, 3
      %p494 = pnand %p492, %p493
      %p495 = pneg %p494
      // Predicated region
      $region9: #{tpu_custom_call.1} parent=5 // pred_check
        _
      $region10: #{tpu_custom_call.1} parent=5 // pred_check_branch
        %497 = sbr.rel (%p494) target = $region12
      $region11: #{tpu_custom_call.1} parent=5 // pred_region
        %s498 = ssub.s32 %s44, 1
        // Predicated region
        $region13: #{tpu_custom_call.1} parent=11 // pred_check
          %p499 = pneg %p183
        $region14: #{tpu_custom_call.1} parent=11 // pred_check_branch
          %501 = sbr.rel (%p499) target = $region16
        $region15: #{tpu_custom_call.1} parent=11 // pred_region
          %s503 = ssub.s32 16, 16
          %504 = vsyncadd [#allocation10], %s503
          %s506 = sshll.u32 [#allocation11], 4
          %s507 = int_to_ptr.vmem [resolvable:$true] %s506
          %509 = dma.hbm_to_vmem [thread:$0]  %s4, 16, %s507, [#allocation10]
        $region16: #{tpu_custom_call.1} parent=11 // pred_fallthru
          _
        // Predicated region
        $region17: #{tpu_custom_call.1} parent=11 // pred_check
          %p510 = pneg %p204
        $region18: #{tpu_custom_call.1} parent=11 // pred_check_branch
          %512 = sbr.rel (%p510) target = $region20
        $region19: #{tpu_custom_call.1} parent=11 // pred_region
          %s514 = ssub.s32 16, 16
          %515 = vsyncadd [#allocation13], %s514
          %s517 = sshll.u32 [#allocation12], 4
          %s518 = int_to_ptr.vmem [resolvable:$true] %s517
          %520 = dma.hbm_to_vmem [thread:$0]  %s5, 16, %s518, [#allocation13]
        $region20: #{tpu_custom_call.1} parent=11 // pred_fallthru
          _
        // Predicated region
        $region21: #{tpu_custom_call.1} parent=11 // pred_check
          %p521 = pneg %p225
        $region22: #{tpu_custom_call.1} parent=11 // pred_check_branch
          %523 = sbr.rel (%p521) target = $region24
        $region23: #{tpu_custom_call.1} parent=11 // pred_region
          %s525 = ssub.s32 512, 512
          %526 = vsyncadd [#allocation13], %s525
          %s527 = sshll.u32 [#allocation14], 4
          %s528 = int_to_ptr.vmem [resolvable:$true] %s527
          %533 = dma.hbm_to_vmem [thread:$0]  %s6, 512, %s528, [#allocation13], 128, 128, 8
        $region24: #{tpu_custom_call.1} parent=11 // pred_fallthru
          _
        // Predicated region
        $region25: #{tpu_custom_call.1} parent=11 // pred_check
          %p534 = pneg %p246
        $region26: #{tpu_custom_call.1} parent=11 // pred_check_branch
          %536 = sbr.rel (%p534) target = $region28
        $region27: #{tpu_custom_call.1} parent=11 // pred_region
          %s538 = ssub.s32 512, 512
          %539 = vsyncadd [#allocation16], %s538
          %s540 = sshll.u32 [#allocation15], 4
          %s541 = int_to_ptr.vmem [resolvable:$true] %s540
          %546 = dma.hbm_to_vmem [thread:$0]  %s7, 512, %s541, [#allocation16], 128, 128, 8
        $region28: #{tpu_custom_call.1} parent=11 // pred_fallthru
          _
        // Predicated region
        $region29: #{tpu_custom_call.1} parent=11 // pred_check
          %p547 = pneg %p267
        $region30: #{tpu_custom_call.1} parent=11 // pred_check_branch
          %549 = sbr.rel (%p547) target = $region32
        $region31: #{tpu_custom_call.1} parent=11 // pred_region
          %s551 = ssub.s32 64, 64
          %552 = vsyncadd [#allocation16], %s551
          %s554 = sshll.u32 [#allocation17], 4
          %s555 = int_to_ptr.vmem [resolvable:$true] %s554
          %557 = dma.hbm_to_vmem [thread:$0]  %s8, 64, %s555, [#allocation16]
        $region32: #{tpu_custom_call.1} parent=11 // pred_fallthru
          _
        // Predicated region
        $region33: #{tpu_custom_call.1} parent=11 // pred_check
          %p558 = pneg %p288
        $region34: #{tpu_custom_call.1} parent=11 // pred_check_branch
          %560 = sbr.rel (%p558) target = $region36
        $region35: #{tpu_custom_call.1} parent=11 // pred_region
          %s562 = ssub.s32 512, 512
          %563 = vsyncadd [#allocation19], %s562
          %s564 = sshll.u32 [#allocation18], 4
          %s565 = int_to_ptr.vmem [resolvable:$true] %s564
          %570 = dma.hbm_to_vmem [thread:$0]  %s9, 512, %s565, [#allocation19], 128, 128, 8
        $region36: #{tpu_custom_call.1} parent=11 // pred_fallthru
          _
        // Predicated region
        $region37: #{tpu_custom_call.1} parent=11 // pred_check
          %p571 = pneg %p309
        $region38: #{tpu_custom_call.1} parent=11 // pred_check_branch
          %573 = sbr.rel (%p571) target = $region40
        $region39: #{tpu_custom_call.1} parent=11 // pred_region
          %s575 = ssub.s32 16, 16
          %576 = vsyncadd [#allocation19], %s575
          %s578 = sshll.u32 [#allocation20], 4
          %s579 = int_to_ptr.vmem [resolvable:$true] %s578
          %581 = dma.hbm_to_vmem [thread:$0]  %s10, 16, %s579, [#allocation19]
        $region40: #{tpu_custom_call.1} parent=11 // pred_fallthru
          _
        // Predicated region
        $region41: #{tpu_custom_call.1} parent=11 // pred_check
          %p582 = pneg %p330
        $region42: #{tpu_custom_call.1} parent=11 // pred_check_branch
          %584 = sbr.rel (%p582) target = $region44
        $region43: #{tpu_custom_call.1} parent=11 // pred_region
          %s586 = ssub.s32 512, 512
          %587 = vsyncadd [#allocation22], %s586
          %s588 = sshll.u32 [#allocation21], 4
          %s589 = int_to_ptr.vmem [resolvable:$true] %s588
          %594 = dma.hbm_to_vmem [thread:$0]  %s11, 512, %s589, [#allocation22], 128, 128, 8
        $region44: #{tpu_custom_call.1} parent=11 // pred_fallthru
          _
        // Predicated region
        $region45: #{tpu_custom_call.1} parent=11 // pred_check
          %p595 = pneg %p351
        $region46: #{tpu_custom_call.1} parent=11 // pred_check_branch
          %597 = sbr.rel (%p595) target = $region48
        $region47: #{tpu_custom_call.1} parent=11 // pred_region
          %s599 = ssub.s32 64, 64
          %600 = vsyncadd [#allocation22], %s599
          %s602 = sshll.u32 [#allocation23], 4
          %s603 = int_to_ptr.vmem [resolvable:$true] %s602
          %605 = dma.hbm_to_vmem [thread:$0]  %s12, 64, %s603, [#allocation22]
        $region48: #{tpu_custom_call.1} parent=11 // pred_fallthru
          _
        // Predicated region
        $region49: #{tpu_custom_call.1} parent=11 // pred_check
          %p606 = pneg %p372
        $region50: #{tpu_custom_call.1} parent=11 // pred_check_branch
          %608 = sbr.rel (%p606) target = $region52
        $region51: #{tpu_custom_call.1} parent=11 // pred_region
          %s610 = ssub.s32 256, 256
          %611 = vsyncadd [#allocation25], %s610
          %s612 = sshll.u32 [#allocation24], 4
          %s613 = int_to_ptr.vmem [resolvable:$true] %s612
          %618 = dma.hbm_to_vmem [thread:$0]  %s13, 256, %s613, [#allocation25], 128, 128, 8
        $region52: #{tpu_custom_call.1} parent=11 // pred_fallthru
          _
        // Predicated region
        $region53: #{tpu_custom_call.1} parent=11 // pred_check
          %p619 = pneg %p393
        $region54: #{tpu_custom_call.1} parent=11 // pred_check_branch
          %621 = sbr.rel (%p619) target = $region56
        $region55: #{tpu_custom_call.1} parent=11 // pred_region
          %s623 = ssub.s32 16, 16
          %624 = vsyncadd [#allocation25], %s623
          %s626 = sshll.u32 [#allocation26], 4
          %s627 = int_to_ptr.vmem [resolvable:$true] %s626
          %629 = dma.hbm_to_vmem [thread:$0]  %s14, 16, %s627, [#allocation25]
        $region56: #{tpu_custom_call.1} parent=11 // pred_fallthru
          _
        // Predicated region
        $region57: #{tpu_custom_call.1} parent=11 // pred_check
          %p630 = pneg %p414
        $region58: #{tpu_custom_call.1} parent=11 // pred_check_branch
          %632 = sbr.rel (%p630) target = $region60
        $region59: #{tpu_custom_call.1} parent=11 // pred_region
          %s634 = ssub.s32 16, 16
          %635 = vsyncadd [#allocation28], %s634
          %s637 = sshll.u32 [#allocation27], 4
          %s638 = int_to_ptr.vmem [resolvable:$true] %s637
          %640 = dma.hbm_to_vmem [thread:$0]  %s15, 16, %s638, [#allocation28]
        $region60: #{tpu_custom_call.1} parent=11 // pred_fallthru
          _
        // Predicated region
        $region61: #{tpu_custom_call.1} parent=11 // pred_check
          %p641 = pneg %p435
        $region62: #{tpu_custom_call.1} parent=11 // pred_check_branch
          %643 = sbr.rel (%p641) target = $region64
        $region63: #{tpu_custom_call.1} parent=11 // pred_region
          %s645 = ssub.s32 256, 256
          %646 = vsyncadd [#allocation28], %s645
          %s647 = sshll.u32 [#allocation29], 4
          %s648 = int_to_ptr.vmem [resolvable:$true] %s647
          %653 = dma.hbm_to_vmem [thread:$0]  %s16, 256, %s648, [#allocation28], 128, 128, 8
        $region64: #{tpu_custom_call.1} parent=11 // pred_fallthru
          _
        // Predicated region
        $region65: #{tpu_custom_call.1} parent=11 // pred_check
          %p654 = pneg %p456
        $region66: #{tpu_custom_call.1} parent=11 // pred_check_branch
          %656 = sbr.rel (%p654) target = $region68
        $region67: #{tpu_custom_call.1} parent=11 // pred_region
          _
        $region68: #{tpu_custom_call.1} parent=11 // pred_fallthru
          _
      $region12: #{tpu_custom_call.1} parent=5 // pred_fallthru
        _
      %p657 = scmp.lt.s32.totalorder %s44, 2
      // Predicated region
      $region69: #{tpu_custom_call.1} parent=5 // pred_check
        %p658 = pneg %p657
      $region70: #{tpu_custom_call.1} parent=5 // pred_check_branch
        %660 = sbr.rel (%p658) target = $region72
      $region71: #{tpu_custom_call.1} parent=5 // pred_region
        // Predicated region
        $region73: #{tpu_custom_call.1} parent=71 // pred_check
          %p661 = pneg %p78
        $region74: #{tpu_custom_call.1} parent=71 // pred_check_branch
          %663 = sbr.rel (%p661) target = $region76
        $region75: #{tpu_custom_call.1} parent=71 // pred_region
          %s664 = sand.u32 %s68, 1
          %s665 = scalar_lea.sflag [#allocation4], %s664
          %s666 = sand.u32 %s68, 1
          %s667 = smul.addr %s666, 16
          %s668 = scalar_lea.vmem [#allocation3], %s667
          %s669 = smul.u32 2, %s52
          %s671 = ssub.s32 256, 256
          %672 = vsyncadd %s665, %s671
          %s673 = smul.addr %s51, 2
          %s674 = sadd.s32 %s669, %s673
          %s675 = smul.addr %s674, 128
          %s676 = scalar_lea.hbm %s0, %s675
          %s677 = sshll.u32 %s668, 4
          %s678 = int_to_ptr.vmem [resolvable:$true] %s677
          %683 = dma.hbm_to_vmem [thread:$0]  %s676, 256, %s678, %s665, 128, 128, 8
        $region76: #{tpu_custom_call.1} parent=71 // pred_fallthru
          _
        // Predicated region
        $region77: #{tpu_custom_call.1} parent=71 // pred_check
          %p684 = pneg %p104
        $region78: #{tpu_custom_call.1} parent=71 // pred_check_branch
          %686 = sbr.rel (%p684) target = $region80
        $region79: #{tpu_custom_call.1} parent=71 // pred_region
          %s687 = sand.u32 %s44, 1
          %s688 = scalar_lea.sflag [#allocation7], %s687
          %s689 = sand.u32 %s94, 1
          %s690 = smul.addr %s689, 8
          %s691 = scalar_lea.vmem [#allocation6], %s690
          %s693 = ssub.s32 128, 128
          %694 = vsyncadd %s688, %s693
          %s695 = smul.addr %s51, 128
          %s696 = scalar_lea.hbm %s1, %s695
          %s698 = sshll.u32 %s691, 4
          %s699 = int_to_ptr.vmem [resolvable:$true] %s698
          %701 = dma.hbm_to_vmem [thread:$0]  %s696, 128, %s699, %s688
        $region80: #{tpu_custom_call.1} parent=71 // pred_fallthru
          _
        // Predicated region
        $region81: #{tpu_custom_call.1} parent=71 // pred_check
          %p702 = pneg %p130
        $region82: #{tpu_custom_call.1} parent=71 // pred_check_branch
          %704 = sbr.rel (%p702) target = $region84
        $region83: #{tpu_custom_call.1} parent=71 // pred_region
          %s705 = sand.u32 %s44, 1
          %s706 = scalar_lea.sflag [#allocation7], %s705
          %s707 = sand.u32 %s120, 1
          %s708 = smul.addr %s707, 8
          %s709 = scalar_lea.vmem [#allocation8], %s708
          %s711 = ssub.s32 128, 128
          %712 = vsyncadd %s706, %s711
          %s713 = smul.addr %s51, 128
          %s714 = scalar_lea.hbm %s2, %s713
          %s716 = sshll.u32 %s709, 4
          %s717 = int_to_ptr.vmem [resolvable:$true] %s716
          %719 = dma.hbm_to_vmem [thread:$0]  %s714, 128, %s717, %s706
        $region84: #{tpu_custom_call.1} parent=71 // pred_fallthru
          _
        // Predicated region
        $region85: #{tpu_custom_call.1} parent=71 // pred_check
          %p720 = pneg %p156
        $region86: #{tpu_custom_call.1} parent=71 // pred_check_branch
          %722 = sbr.rel (%p720) target = $region88
        $region87: #{tpu_custom_call.1} parent=71 // pred_region
          %s723 = sand.u32 %s44, 1
          %s724 = scalar_lea.sflag [#allocation10], %s723
          %s725 = sand.u32 %s146, 1
          %s726 = scalar_lea.vmem [#allocation9], %s725
          %s728 = ssub.s32 16, 16
          %729 = vsyncadd %s724, %s728
          %s730 = smul.addr %s51, 16
          %s731 = scalar_lea.hbm %s3, %s730
          %s733 = sshll.u32 %s726, 4
          %s734 = int_to_ptr.vmem [resolvable:$true] %s733
          %736 = dma.hbm_to_vmem [thread:$0]  %s731, 16, %s734, %s724
        $region88: #{tpu_custom_call.1} parent=71 // pred_fallthru
          _
      $region72: #{tpu_custom_call.1} parent=5 // pred_fallthru
        _
      %p737 = scmp.le.s32.totalorder 1, %s44
      %p738 = scmp.lt.s32.totalorder %s44, 3
      %p739 = pnand %p737, %p738
      %p740 = pneg %p739
      // Predicated region
      $region89: #{tpu_custom_call.1} parent=5 // pred_check
        _
      $region90: #{tpu_custom_call.1} parent=5 // pred_check_branch
        %742 = sbr.rel (%p739) target = $region92
      $region91: #{tpu_custom_call.1} parent=5 // pred_region
        %s743 = ssub.s32 %s44, 1
        %s744 = sand.u32 %s71, 1
        %s745 = scalar_lea.sflag [#allocation4], %s744
        %s746 = sand.u32 %s71, 1
        %s747 = smul.addr %s746, 16
        %s748 = scalar_lea.vmem [#allocation3], %s747
        // Predicated region
        $region93: #{tpu_custom_call.1} parent=91 // pred_check
          %p749 = pneg %p84
        $region94: #{tpu_custom_call.1} parent=91 // pred_check_branch
          %751 = sbr.rel (%p749) target = $region96
        $region95: #{tpu_custom_call.1} parent=91 // pred_region
          %752 = dma.done %s745, 256
        $region96: #{tpu_custom_call.1} parent=91 // pred_fallthru
          _
        %s753 = sand.u32 %s49, 1
        %s754 = scalar_lea.sflag [#allocation7], %s753
        %s755 = sand.u32 %s97, 1
        %s756 = smul.addr %s755, 8
        %s757 = scalar_lea.vmem [#allocation6], %s756
        // Predicated region
        $region97: #{tpu_custom_call.1} parent=91 // pred_check
          %p758 = pneg %p110
        $region98: #{tpu_custom_call.1} parent=91 // pred_check_branch
          %760 = sbr.rel (%p758) target = $region100
        $region99: #{tpu_custom_call.1} parent=91 // pred_region
          %761 = dma.done %s754, 128
        $region100: #{tpu_custom_call.1} parent=91 // pred_fallthru
          _
        %s762 = sand.u32 %s49, 1
        %s763 = scalar_lea.sflag [#allocation7], %s762
        %s764 = sand.u32 %s123, 1
        %s765 = smul.addr %s764, 8
        %s766 = scalar_lea.vmem [#allocation8], %s765
        // Predicated region
        $region101: #{tpu_custom_call.1} parent=91 // pred_check
          %p767 = pneg %p136
        $region102: #{tpu_custom_call.1} parent=91 // pred_check_branch
          %769 = sbr.rel (%p767) target = $region104
        $region103: #{tpu_custom_call.1} parent=91 // pred_region
          %770 = dma.done %s763, 128
        $region104: #{tpu_custom_call.1} parent=91 // pred_fallthru
          _
        %s771 = sand.u32 %s49, 1
        %s772 = scalar_lea.sflag [#allocation10], %s771
        %s773 = sand.u32 %s149, 1
        %s774 = scalar_lea.vmem [#allocation9], %s773
        // Predicated region
        $region105: #{tpu_custom_call.1} parent=91 // pred_check
          %p775 = pneg %p162
        $region106: #{tpu_custom_call.1} parent=91 // pred_check_branch
          %777 = sbr.rel (%p775) target = $region108
        $region107: #{tpu_custom_call.1} parent=91 // pred_region
          %778 = dma.done %s772, 16
        $region108: #{tpu_custom_call.1} parent=91 // pred_fallthru
          _
        // Predicated region
        $region109: #{tpu_custom_call.1} parent=91 // pred_check
          %p779 = pneg %p183
        $region110: #{tpu_custom_call.1} parent=91 // pred_check_branch
          %781 = sbr.rel (%p779) target = $region112
        $region111: #{tpu_custom_call.1} parent=91 // pred_region
          %782 = dma.done [#allocation10], 16
        $region112: #{tpu_custom_call.1} parent=91 // pred_fallthru
          _
        // Predicated region
        $region113: #{tpu_custom_call.1} parent=91 // pred_check
          %p783 = pneg %p204
        $region114: #{tpu_custom_call.1} parent=91 // pred_check_branch
          %785 = sbr.rel (%p783) target = $region116
        $region115: #{tpu_custom_call.1} parent=91 // pred_region
          %786 = dma.done [#allocation13], 16
        $region116: #{tpu_custom_call.1} parent=91 // pred_fallthru
          _
        // Predicated region
        $region117: #{tpu_custom_call.1} parent=91 // pred_check
          %p787 = pneg %p225
        $region118: #{tpu_custom_call.1} parent=91 // pred_check_branch
          %789 = sbr.rel (%p787) target = $region120
        $region119: #{tpu_custom_call.1} parent=91 // pred_region
          %790 = dma.done [#allocation13], 512
        $region120: #{tpu_custom_call.1} parent=91 // pred_fallthru
          _
        // Predicated region
        $region121: #{tpu_custom_call.1} parent=91 // pred_check
          %p791 = pneg %p246
        $region122: #{tpu_custom_call.1} parent=91 // pred_check_branch
          %793 = sbr.rel (%p791) target = $region124
        $region123: #{tpu_custom_call.1} parent=91 // pred_region
          %794 = dma.done [#allocation16], 512
        $region124: #{tpu_custom_call.1} parent=91 // pred_fallthru
          _
        // Predicated region
        $region125: #{tpu_custom_call.1} parent=91 // pred_check
          %p795 = pneg %p267
        $region126: #{tpu_custom_call.1} parent=91 // pred_check_branch
          %797 = sbr.rel (%p795) target = $region128
        $region127: #{tpu_custom_call.1} parent=91 // pred_region
          %798 = dma.done [#allocation16], 64
        $region128: #{tpu_custom_call.1} parent=91 // pred_fallthru
          _
        // Predicated region
        $region129: #{tpu_custom_call.1} parent=91 // pred_check
          %p799 = pneg %p288
        $region130: #{tpu_custom_call.1} parent=91 // pred_check_branch
          %801 = sbr.rel (%p799) target = $region132
        $region131: #{tpu_custom_call.1} parent=91 // pred_region
          %802 = dma.done [#allocation19], 512
        $region132: #{tpu_custom_call.1} parent=91 // pred_fallthru
          _
        // Predicated region
        $region133: #{tpu_custom_call.1} parent=91 // pred_check
          %p803 = pneg %p309
        $region134: #{tpu_custom_call.1} parent=91 // pred_check_branch
          %805 = sbr.rel (%p803) target = $region136
        $region135: #{tpu_custom_call.1} parent=91 // pred_region
          %806 = dma.done [#allocation19], 16
        $region136: #{tpu_custom_call.1} parent=91 // pred_fallthru
          _
        // Predicated region
        $region137: #{tpu_custom_call.1} parent=91 // pred_check
          %p807 = pneg %p330
        $region138: #{tpu_custom_call.1} parent=91 // pred_check_branch
          %809 = sbr.rel (%p807) target = $region140
        $region139: #{tpu_custom_call.1} parent=91 // pred_region
          %810 = dma.done [#allocation22], 512
        $region140: #{tpu_custom_call.1} parent=91 // pred_fallthru
          _
        // Predicated region
        $region141: #{tpu_custom_call.1} parent=91 // pred_check
          %p811 = pneg %p351
        $region142: #{tpu_custom_call.1} parent=91 // pred_check_branch
          %813 = sbr.rel (%p811) target = $region144
        $region143: #{tpu_custom_call.1} parent=91 // pred_region
          %814 = dma.done [#allocation22], 64
        $region144: #{tpu_custom_call.1} parent=91 // pred_fallthru
          _
        // Predicated region
        $region145: #{tpu_custom_call.1} parent=91 // pred_check
          %p815 = pneg %p372
        $region146: #{tpu_custom_call.1} parent=91 // pred_check_branch
          %817 = sbr.rel (%p815) target = $region148
        $region147: #{tpu_custom_call.1} parent=91 // pred_region
          %818 = dma.done [#allocation25], 256
        $region148: #{tpu_custom_call.1} parent=91 // pred_fallthru
          _
        // Predicated region
        $region149: #{tpu_custom_call.1} parent=91 // pred_check
          %p819 = pneg %p393
        $region150: #{tpu_custom_call.1} parent=91 // pred_check_branch
          %821 = sbr.rel (%p819) target = $region152
        $region151: #{tpu_custom_call.1} parent=91 // pred_region
          %822 = dma.done [#allocation25], 16
        $region152: #{tpu_custom_call.1} parent=91 // pred_fallthru
          _
        // Predicated region
        $region153: #{tpu_custom_call.1} parent=91 // pred_check
          %p823 = pneg %p414
        $region154: #{tpu_custom_call.1} parent=91 // pred_check_branch
          %825 = sbr.rel (%p823) target = $region156
        $region155: #{tpu_custom_call.1} parent=91 // pred_region
          %826 = dma.done [#allocation28], 16
        $region156: #{tpu_custom_call.1} parent=91 // pred_fallthru
          _
        // Predicated region
        $region157: #{tpu_custom_call.1} parent=91 // pred_check
          %p827 = pneg %p435
        $region158: #{tpu_custom_call.1} parent=91 // pred_check_branch
          %829 = sbr.rel (%p827) target = $region160
        $region159: #{tpu_custom_call.1} parent=91 // pred_region
          %830 = dma.done [#allocation28], 256
        $region160: #{tpu_custom_call.1} parent=91 // pred_fallthru
          _
        %s831 = sand.u32 %s71, 1
        %s832 = scalar_lea.sflag [#allocation4], %s831
        %s833 = sand.u32 %s71, 1
        %s834 = smul.addr %s833, 16
        %s835 = scalar_lea.vmem [#allocation3], %s834
        %p836 = pneg %p84
        %p837 = pneg %p81
        %s838 = sand.u32 %s49, 1
        %s839 = scalar_lea.sflag [#allocation7], %s838
        %s840 = sand.u32 %s97, 1
        %s841 = smul.addr %s840, 8
        %s842 = scalar_lea.vmem [#allocation6], %s841
        %p843 = pneg %p110
        %p844 = pneg %p107
        %s845 = sand.u32 %s49, 1
        %s846 = scalar_lea.sflag [#allocation7], %s845
        %s847 = sand.u32 %s123, 1
        %s848 = smul.addr %s847, 8
        %s849 = scalar_lea.vmem [#allocation8], %s848
        %p850 = pneg %p136
        %p851 = pneg %p133
        %s852 = sand.u32 %s49, 1
        %s853 = scalar_lea.sflag [#allocation10], %s852
        %s854 = sand.u32 %s149, 1
        %s855 = scalar_lea.vmem [#allocation9], %s854
        %p856 = pneg %p162
        %p857 = pneg %p159
        %p858 = pneg %p183
        %p859 = pneg %p180
        %p860 = pneg %p204
        %p861 = pneg %p201
        %p862 = pneg %p225
        %p863 = pneg %p222
        %p864 = pneg %p246
        %p865 = pneg %p243
        %p866 = pneg %p267
        %p867 = pneg %p264
        %p868 = pneg %p288
        %p869 = pneg %p285
        %p870 = pneg %p309
        %p871 = pneg %p306
        %p872 = pneg %p330
        %p873 = pneg %p327
        %p874 = pneg %p351
        %p875 = pneg %p348
        %p876 = pneg %p372
        %p877 = pneg %p369
        %p878 = pneg %p393
        %p879 = pneg %p390
        %p880 = pneg %p414
        %p881 = pneg %p411
        %p882 = pneg %p435
        %p883 = pneg %p432
        %p884 = pneg %p456
        %p885 = pneg %p453
        %p886 = pneg %p484
        %p887 = pneg %p481
        %s888 = sand.u32 %s471, 1
        %s889 = scalar_lea.sflag [#allocation5], %s888
        %s890 = sand.u32 %s471, 1
        %s891 = scalar_lea.vmem [#allocation30], %s890
        %s892 = smul.u32 2, %s54
        %v893 = vld [vmem:[%s748] sm:$0xff]
        %v894 = vld [vmem:[%s748 + $0x8] sm:$0xff]
        %v895 = vld [vmem:[%s757] sm:$0xff]
        %v896 = vld [vmem:[%s766] sm:$0xff]
        %v897 = vld [vmem:[%s774] sm:$0x1]
        %vm898 = vcmask 261120
        %v899 = vsel %vm898, %v893, 0.0
        %900 = vadd.xlane.f32.xlu0 %v899
        %v901 = vpop.xlane.xlu0 %900
        %v902 = vsel %vm898, %v894, 0.0
        %903 = vadd.xlane.f32.xlu0 %v902
        %v904 = vpop.xlane.xlu0 %903
        %v905 = vrcp.pop 32.0
        %v906 = vmul.f32 %v901, %v905
        %v907 = vmul.f32 %v904, %v905
        %v908 = vsub.f32 %v893, %v906
        %v909 = vsub.f32 %v894, %v907
        %v910 = vmul.f32 %v908, %v908
        %v911 = vmul.f32 %v909, %v909
        %v912 = vsel %vm898, %v910, 0.0
        %913 = vadd.xlane.f32.xlu0 %v912
        %v914 = vpop.xlane.xlu0 %913
        %v915 = vsel %vm898, %v911, 0.0
        %916 = vadd.xlane.f32.xlu0 %v915
        %v917 = vpop.xlane.xlu0 %916
        %v918 = vmul.f32 %v914, %v905
        %v919 = vmul.f32 %v917, %v905
        %v920 = vadd.f32 %v918, 1e-05
        %v921 = vadd.f32 %v919, 1e-05
        %v922 = vrsqrt.pop %v920
        %v923 = vrsqrt.pop %v921
        %v924 = vmul.f32 %v908, %v922
        %v925 = vmul.f32 %v909, %v923
        %v926 = vld [vmem:[#allocation11] sm:$0x1]
        %v928 = vlaneseq
        %v929 = vshrl.u32 %v928, 7
        %v930 = vsub.s32 0, %v929
        %v931 = vrot.slane %v926, %v930
        %v933 = vmul.f32 %v924, %v931
        %v934 = vmul.f32 %v925, %v931
        %v935 = vld [vmem:[#allocation12] sm:$0x1]
        %v937 = vlaneseq
        %v938 = vshrl.u32 %v937, 7
        %v939 = vsub.s32 0, %v938
        %v940 = vrot.slane %v935, %v939
        %v942 = vadd.f32 %v933, %v940
        %v943 = vadd.f32 %v934, %v940
        %v944 = vld [vmem:[#allocation14] sm:$0xff]
        %v945 = vld [vmem:[#allocation14 + $0x8] sm:$0xff]
        %v946 = vld [vmem:[#allocation14 + $0x10] sm:$0xff]
        %v947 = vld [vmem:[#allocation14 + $0x18] sm:$0xff]
        %v948 = vld [vmem:[#allocation15] sm:$0xff]
        %v949 = vld [vmem:[#allocation15 + $0x8] sm:$0xff]
        %v950 = vld [vmem:[#allocation15 + $0x10] sm:$0xff]
        %v951 = vld [vmem:[#allocation15 + $0x18] sm:$0xff]
        %953 = vset.pattern.permute.xlu0 0
        %954 = vperm.xlu0 %953, %v948
        %v955 = vpop.permute.xlu0 %954
        %958 = vset.pattern.permute.xlu0 0
        %959 = vperm.xlu0 %958, %v949
        %v960 = vpop.permute.xlu0 %959
        %963 = vset.pattern.permute.xlu0 0
        %964 = vperm.xlu0 %963, %v950
        %v965 = vpop.permute.xlu0 %964
        %968 = vset.pattern.permute.xlu0 0
        %969 = vperm.xlu0 %968, %v951
        %v970 = vpop.permute.xlu0 %969
        %v973 = vsel %vm898, %v944, 0
        %v976 = vsel %vm898, %v945, 0
        %v979 = vsel %vm898, %v946, 0
        %v982 = vsel %vm898, %v947, 0
        %v985 = vsel %vm898, %v942, 0
        %v988 = vsel %vm898, %v943, 0
        %990 = vmatprep.subr.mxu0 0.0
        %991 = vmatpush1.xpose.msra.mxu0 %v985
        %992 = vmatprep.subr.mxu0 0.0
        %993 = vmatpush1.xpose.msra.mxu0 %v988
        %994 = vmatprep.subr.mxu0 0.0
        %995 = vmatpush1.xpose.msra.mxu0 0.0
        %996 = vmatprep.subr.mxu0 0.0
        %997 = vmatpush1.xpose.msra.mxu0 0.0
        %998 = vmatprep.subr.mxu0 0.0
        %999 = vmatpush1.xpose.msra.mxu0 0.0
        %1000 = vmatprep.subr.mxu0 0.0
        %1001 = vmatpush1.xpose.msra.mxu0 0.0
        %1002 = vmatprep.subr.mxu0 0.0
        %1003 = vmatpush1.xpose.msra.mxu0 0.0
        %1004 = vmatprep.subr.mxu0 0.0
        %1005 = vmatpush1.xpose.msra.mxu0 0.0
        %1006 = vmatprep.subr.mxu0 0.0
        %1007 = vmatpush1.xpose.msra.mxu0 0.0
        %1008 = vmatprep.subr.mxu0 0.0
        %1009 = vmatpush1.xpose.msra.mxu0 0.0
        %1010 = vmatprep.subr.mxu0 0.0
        %1011 = vmatpush1.xpose.msra.mxu0 0.0
        %1012 = vmatprep.subr.mxu0 0.0
        %1013 = vmatpush1.xpose.msra.mxu0 0.0
        %1014 = vmatprep.subr.mxu0 0.0
        %1015 = vmatpush1.xpose.msra.mxu0 0.0
        %1016 = vmatprep.subr.mxu0 0.0
        %1017 = vmatpush1.xpose.msra.mxu0 0.0
        %1018 = vmatprep.subr.mxu0 0.0
        %1019 = vmatpush1.xpose.msra.mxu0 0.0
        %1020 = vmatprep.subr.mxu0 0.0
        %1021 = vmatpush1.xpose.msra.mxu0 0.0
        %1022 = vmatprep.subr.mxu0 0.0
        %1023 = vmatpush1.xpose.msra.mxu0 0.0
        %1024 = vmatprep.subr.mxu0 0.0
        %1025 = vmatpush1.xpose.msra.mxu0 0.0
        %1026 = vmatprep.subr.mxu0 0.0
        %1027 = vmatpush1.xpose.msra.mxu0 0.0
        %1028 = vmatprep.subr.mxu0 0.0
        %1029 = vmatpush1.xpose.msra.mxu0 0.0
        %1030 = vmatprep.subr.mxu0 0.0
        %1031 = vmatpush1.xpose.msra.mxu0 0.0
        %1032 = vmatprep.subr.mxu0 0.0
        %1033 = vmatpush1.xpose.msra.mxu0 0.0
        %1034 = vmatprep.subr.mxu0 0.0
        %1035 = vmatpush1.xpose.msra.mxu0 0.0
        %1036 = vmatprep.subr.mxu0 0.0
        %1037 = vmatpush1.xpose.msra.mxu0 0.0
        %1038 = vmatprep.subr.mxu0 0.0
        %1039 = vmatpush1.xpose.msra.mxu0 0.0
        %1040 = vmatprep.subr.mxu0 0.0
        %1041 = vmatpush1.xpose.msra.mxu0 0.0
        %1042 = vmatprep.subr.mxu0 0.0
        %1043 = vmatpush1.xpose.msra.mxu0 0.0
        %1044 = vmatprep.subr.mxu0 0.0
        %1045 = vmatpush1.xpose.msra.mxu0 0.0
        %1046 = vmatprep.subr.mxu0 0.0
        %1047 = vmatpush1.xpose.msra.mxu0 0.0
        %1048 = vmatprep.subr.mxu0 0.0
        %1049 = vmatpush1.xpose.msra.mxu0 0.0
        %1050 = vmatprep.subr.mxu0 0.0
        %1051 = vmatpush1.xpose.msra.mxu0 0.0
        %1052 = vmatprep.subr.mxu0 0.0
        %1053 = vmatpush1.xpose.msra.mxu0 0.0
        %1054 = vmatprep.mubr.f32.mxu0 0.0
        %1055 = vmatmul.mubr.f32.gmra.mrb[0].mxu0 %v973
        %v1056 = vpop.f32.mrb[0].mxu0
        %v1057 = vadd.f32 %v955, %v1056
        %v1058 = vpop.f32.mrb[0].mxu0
        %1059 = vmatprep.mubr.f32.mxu0 0.0
        %1060 = vmatmul.mubr.f32.gmra.mrb[0].mxu0 %v976
        %v1061 = vpop.f32.mrb[0].mxu0
        %v1062 = vadd.f32 %v960, %v1061
        %v1063 = vpop.f32.mrb[0].mxu0
        %1064 = vmatprep.mubr.f32.mxu0 0.0
        %1065 = vmatmul.mubr.f32.gmra.mrb[0].mxu0 %v979
        %v1066 = vpop.f32.mrb[0].mxu0
        %v1067 = vadd.f32 %v965, %v1066
        %v1068 = vpop.f32.mrb[0].mxu0
        %1069 = vmatprep.mubr.f32.mxu0 0.0
        %1070 = vmatmul.mubr.f32.gmra.mrb[0].mxu0 %v982
        %v1071 = vpop.f32.mrb[0].mxu0
        %v1072 = vadd.f32 %v970, %v1071
        %v1073 = vpop.f32.mrb[0].mxu0
        %1074 = vdwg.mxu0
        %v1075 = vld [vmem:[#allocation18] sm:$0xff]
        %v1076 = vld [vmem:[#allocation18 + $0x8] sm:$0xff]
        %v1077 = vld [vmem:[#allocation18 + $0x10] sm:$0xff]
        %v1078 = vld [vmem:[#allocation18 + $0x18] sm:$0xff]
        %v1079 = vld [vmem:[#allocation20] sm:$0x1]
        %v1081 = vlaneseq
        %v1082 = vshrl.u32 %v1081, 7
        %v1083 = vsub.s32 0, %v1082
        %v1084 = vrot.slane %v1079, %v1083
        %v1087 = vsel %vm898, %v895, 0
        %1089 = vmatprep.subr.mxu0 0.0
        %1090 = vmatpush1.msra.mxu0 %v1075
        %1091 = vmatprep.subr.mxu0 0.0
        %1092 = vmatpush1.msra.mxu0 %v1076
        %1093 = vmatprep.subr.mxu0 0.0
        %1094 = vmatpush1.msra.mxu0 %v1077
        %1095 = vmatprep.subr.mxu0 0.0
        %1096 = vmatpush1.msra.mxu0 %v1078
        %1097 = vmatprep.subr.mxu0 0.0
        %1098 = vmatpush1.msra.mxu0 0.0
        %1099 = vmatprep.subr.mxu0 0.0
        %1100 = vmatpush1.msra.mxu0 0.0
        %1101 = vmatprep.subr.mxu0 0.0
        %1102 = vmatpush1.msra.mxu0 0.0
        %1103 = vmatprep.subr.mxu0 0.0
        %1104 = vmatpush1.msra.mxu0 0.0
        %1105 = vmatprep.subr.mxu0 0.0
        %1106 = vmatpush1.msra.mxu0 0.0
        %1107 = vmatprep.subr.mxu0 0.0
        %1108 = vmatpush1.msra.mxu0 0.0
        %1109 = vmatprep.subr.mxu0 0.0
        %1110 = vmatpush1.msra.mxu0 0.0
        %1111 = vmatprep.subr.mxu0 0.0
        %1112 = vmatpush1.msra.mxu0 0.0
        %1113 = vmatprep.subr.mxu0 0.0
        %1114 = vmatpush1.msra.mxu0 0.0
        %1115 = vmatprep.subr.mxu0 0.0
        %1116 = vmatpush1.msra.mxu0 0.0
        %1117 = vmatprep.subr.mxu0 0.0
        %1118 = vmatpush1.msra.mxu0 0.0
        %1119 = vmatprep.subr.mxu0 0.0
        %1120 = vmatpush1.msra.mxu0 0.0
        %1121 = vmatprep.subr.mxu0 0.0
        %1122 = vmatpush1.msra.mxu0 0.0
        %1123 = vmatprep.subr.mxu0 0.0
        %1124 = vmatpush1.msra.mxu0 0.0
        %1125 = vmatprep.subr.mxu0 0.0
        %1126 = vmatpush1.msra.mxu0 0.0
        %1127 = vmatprep.subr.mxu0 0.0
        %1128 = vmatpush1.msra.mxu0 0.0
        %1129 = vmatprep.subr.mxu0 0.0
        %1130 = vmatpush1.msra.mxu0 0.0
        %1131 = vmatprep.subr.mxu0 0.0
        %1132 = vmatpush1.msra.mxu0 0.0
        %1133 = vmatprep.subr.mxu0 0.0
        %1134 = vmatpush1.msra.mxu0 0.0
        %1135 = vmatprep.subr.mxu0 0.0
        %1136 = vmatpush1.msra.mxu0 0.0
        %1137 = vmatprep.subr.mxu0 0.0
        %1138 = vmatpush1.msra.mxu0 0.0
        %1139 = vmatprep.subr.mxu0 0.0
        %1140 = vmatpush1.msra.mxu0 0.0
        %1141 = vmatprep.subr.mxu0 0.0
        %1142 = vmatpush1.msra.mxu0 0.0
        %1143 = vmatprep.subr.mxu0 0.0
        %1144 = vmatpush1.msra.mxu0 0.0
        %1145 = vmatprep.subr.mxu0 0.0
        %1146 = vmatpush1.msra.mxu0 0.0
        %1147 = vmatprep.subr.mxu0 0.0
        %1148 = vmatpush1.msra.mxu0 0.0
        %1149 = vmatprep.subr.mxu0 0.0
        %1150 = vmatpush1.msra.mxu0 0.0
        %1151 = vmatprep.subr.mxu0 0.0
        %1152 = vmatpush1.msra.mxu0 0.0
        %1153 = vmatprep.mubr.f32.mxu0 0.0
        %1154 = vmatmul.mubr.f32.gmra.mrb[0].mxu0 %v1087
        %v1155 = vpop.f32.mrb[0].mxu0
        %v1156 = vadd.f32 %v1084, %v1155
        %v1157 = vpop.f32.mrb[0].mxu0
        %1158 = vdwg.mxu0
        %v1159 = vmul.f32 %v1156, %v1156
        %v1160 = vld [vmem:[#allocation21] sm:$0xff]
        %v1161 = vld [vmem:[#allocation21 + $0x8] sm:$0xff]
        %v1162 = vld [vmem:[#allocation21 + $0x10] sm:$0xff]
        %v1163 = vld [vmem:[#allocation21 + $0x18] sm:$0xff]
        %v1165 = vsel %vm898, %v1159, 0
        %1167 = vmatprep.subr.mxu0 0.0
        %1168 = vmatpush1.msra.mxu0 %v1160
        %1169 = vmatprep.subr.mxu0 0.0
        %1170 = vmatpush1.msra.mxu0 %v1161
        %1171 = vmatprep.subr.mxu0 0.0
        %1172 = vmatpush1.msra.mxu0 %v1162
        %1173 = vmatprep.subr.mxu0 0.0
        %1174 = vmatpush1.msra.mxu0 %v1163
        %1175 = vmatprep.subr.mxu0 0.0
        %1176 = vmatpush1.msra.mxu0 0.0
        %1177 = vmatprep.subr.mxu0 0.0
        %1178 = vmatpush1.msra.mxu0 0.0
        %1179 = vmatprep.subr.mxu0 0.0
        %1180 = vmatpush1.msra.mxu0 0.0
        %1181 = vmatprep.subr.mxu0 0.0
        %1182 = vmatpush1.msra.mxu0 0.0
        %1183 = vmatprep.subr.mxu0 0.0
        %1184 = vmatpush1.msra.mxu0 0.0
        %1185 = vmatprep.subr.mxu0 0.0
        %1186 = vmatpush1.msra.mxu0 0.0
        %1187 = vmatprep.subr.mxu0 0.0
        %1188 = vmatpush1.msra.mxu0 0.0
        %1189 = vmatprep.subr.mxu0 0.0
        %1190 = vmatpush1.msra.mxu0 0.0
        %1191 = vmatprep.subr.mxu0 0.0
        %1192 = vmatpush1.msra.mxu0 0.0
        %1193 = vmatprep.subr.mxu0 0.0
        %1194 = vmatpush1.msra.mxu0 0.0
        %1195 = vmatprep.subr.mxu0 0.0
        %1196 = vmatpush1.msra.mxu0 0.0
        %1197 = vmatprep.subr.mxu0 0.0
        %1198 = vmatpush1.msra.mxu0 0.0
        %1199 = vmatprep.subr.mxu0 0.0
        %1200 = vmatpush1.msra.mxu0 0.0
        %1201 = vmatprep.subr.mxu0 0.0
        %1202 = vmatpush1.msra.mxu0 0.0
        %1203 = vmatprep.subr.mxu0 0.0
        %1204 = vmatpush1.msra.mxu0 0.0
        %1205 = vmatprep.subr.mxu0 0.0
        %1206 = vmatpush1.msra.mxu0 0.0
        %1207 = vmatprep.subr.mxu0 0.0
        %1208 = vmatpush1.msra.mxu0 0.0
        %1209 = vmatprep.subr.mxu0 0.0
        %1210 = vmatpush1.msra.mxu0 0.0
        %1211 = vmatprep.subr.mxu0 0.0
        %1212 = vmatpush1.msra.mxu0 0.0
        %1213 = vmatprep.subr.mxu0 0.0
        %1214 = vmatpush1.msra.mxu0 0.0
        %1215 = vmatprep.subr.mxu0 0.0
        %1216 = vmatpush1.msra.mxu0 0.0
        %1217 = vmatprep.subr.mxu0 0.0
        %1218 = vmatpush1.msra.mxu0 0.0
        %1219 = vmatprep.subr.mxu0 0.0
        %1220 = vmatpush1.msra.mxu0 0.0
        %1221 = vmatprep.subr.mxu0 0.0
        %1222 = vmatpush1.msra.mxu0 0.0
        %1223 = vmatprep.subr.mxu0 0.0
        %1224 = vmatpush1.msra.mxu0 0.0
        %1225 = vmatprep.subr.mxu0 0.0
        %1226 = vmatpush1.msra.mxu0 0.0
        %1227 = vmatprep.subr.mxu0 0.0
        %1228 = vmatpush1.msra.mxu0 0.0
        %1229 = vmatprep.subr.mxu0 0.0
        %1230 = vmatpush1.msra.mxu0 0.0
        %1231 = vmatprep.mubr.f32.mxu0 0.0
        %1232 = vmatmul.mubr.f32.gmra.mrb[0].mxu0 %v1165
        %v1233 = vpop.f32.mrb[0].mxu0
        %v1234 = vadd.f32 0.0, %v1233
        %v1235 = vpop.f32.mrb[0].mxu0
        %1236 = vdwg.mxu0
        %v1237 = vrsqrt.pop %v1234
        %v1238 = vmul.f32 %v1234, %v1237
        %vm1239 = vcmp.eq.f32.partialorder %v1234, inf
        %v1240 = vsel %vm1239, %v1234, %v1238
        %vm1241 = vcmp.eq.f32.partialorder %v1234, 0.0
        %v1242 = vand.u32 %v1234, 2147483648
        %v1243 = vsel %vm1241, %v1242, %v1240
        %v1244 = vmax.f32 %v1243, 1e-12
        %v1245 = vrcp.pop %v1244
        %v1246 = vmul.f32 1.0, %v1245
        %v1247 = vld [vmem:[#allocation23] sm:$0xf]
        %vm1248 = vcmask 31744
        %v1250 = vsel %vm1248, %v1246, 0
        %vm1252 = vcmask 1043456
        %v1254 = vsel %vm1252, %v1247, 0
        %1256 = vmatprep.subr.mxu0 0.0
        %1257 = vmatpush1.msra.mxu0 %v1254
        %1258 = vmatprep.subr.mxu0 0.0
        %1259 = vmatpush1.msra.mxu0 0.0
        %1260 = vmatprep.subr.mxu0 0.0
        %1261 = vmatpush1.msra.mxu0 0.0
        %1262 = vmatprep.subr.mxu0 0.0
        %1263 = vmatpush1.msra.mxu0 0.0
        %1264 = vmatprep.subr.mxu0 0.0
        %1265 = vmatpush1.msra.mxu0 0.0
        %1266 = vmatprep.subr.mxu0 0.0
        %1267 = vmatpush1.msra.mxu0 0.0
        %1268 = vmatprep.subr.mxu0 0.0
        %1269 = vmatpush1.msra.mxu0 0.0
        %1270 = vmatprep.subr.mxu0 0.0
        %1271 = vmatpush1.msra.mxu0 0.0
        %1272 = vmatprep.subr.mxu0 0.0
        %1273 = vmatpush1.msra.mxu0 0.0
        %1274 = vmatprep.subr.mxu0 0.0
        %1275 = vmatpush1.msra.mxu0 0.0
        %1276 = vmatprep.subr.mxu0 0.0
        %1277 = vmatpush1.msra.mxu0 0.0
        %1278 = vmatprep.subr.mxu0 0.0
        %1279 = vmatpush1.msra.mxu0 0.0
        %1280 = vmatprep.subr.mxu0 0.0
        %1281 = vmatpush1.msra.mxu0 0.0
        %1282 = vmatprep.subr.mxu0 0.0
        %1283 = vmatpush1.msra.mxu0 0.0
        %1284 = vmatprep.subr.mxu0 0.0
        %1285 = vmatpush1.msra.mxu0 0.0
        %1286 = vmatprep.subr.mxu0 0.0
        %1287 = vmatpush1.msra.mxu0 0.0
        %1288 = vmatprep.subr.mxu0 0.0
        %1289 = vmatpush1.msra.mxu0 0.0
        %1290 = vmatprep.subr.mxu0 0.0
        %1291 = vmatpush1.msra.mxu0 0.0
        %1292 = vmatprep.subr.mxu0 0.0
        %1293 = vmatpush1.msra.mxu0 0.0
        %1294 = vmatprep.subr.mxu0 0.0
        %1295 = vmatpush1.msra.mxu0 0.0
        %1296 = vmatprep.subr.mxu0 0.0
        %1297 = vmatpush1.msra.mxu0 0.0
        %1298 = vmatprep.subr.mxu0 0.0
        %1299 = vmatpush1.msra.mxu0 0.0
        %1300 = vmatprep.subr.mxu0 0.0
        %1301 = vmatpush1.msra.mxu0 0.0
        %1302 = vmatprep.subr.mxu0 0.0
        %1303 = vmatpush1.msra.mxu0 0.0
        %1304 = vmatprep.subr.mxu0 0.0
        %1305 = vmatpush1.msra.mxu0 0.0
        %1306 = vmatprep.subr.mxu0 0.0
        %1307 = vmatpush1.msra.mxu0 0.0
        %1308 = vmatprep.subr.mxu0 0.0
        %1309 = vmatpush1.msra.mxu0 0.0
        %1310 = vmatprep.subr.mxu0 0.0
        %1311 = vmatpush1.msra.mxu0 0.0
        %1312 = vmatprep.subr.mxu0 0.0
        %1313 = vmatpush1.msra.mxu0 0.0
        %1314 = vmatprep.subr.mxu0 0.0
        %1315 = vmatpush1.msra.mxu0 0.0
        %1316 = vmatprep.subr.mxu0 0.0
        %1317 = vmatpush1.msra.mxu0 0.0
        %1318 = vmatprep.subr.mxu0 0.0
        %1319 = vmatpush1.msra.mxu0 0.0
        %1320 = vmatprep.mubr.f32.mxu0 0.0
        %1321 = vmatmul.mubr.f32.gmra.mrb[0].mxu0 %v1250
        %v1322 = vpop.f32.mrb[0].mxu0
        %v1323 = vadd.f32 0.0, %v1322
        %v1324 = vpop.f32.mrb[0].mxu0
        %1325 = vdwg.mxu0
        %v1326 = vmul.f32 %v1156, %v1323
        %vm1327 = vcmp.gt.f32.partialorder %v896, 0.5
        %vm1328 = vcmask 7168
        %v1329 = vsel %vm1328, %v896, 0.0
        %1330 = vadd.xlane.f32.xlu0 %v1329
        %v1331 = vpop.xlane.xlu0 %1330
        %v1332 = vrot.slane %v1331, 4
        %v1333 = vadd.f32 %v1331, %v1332
        %v1334 = vrot.slane %v1333, 2
        %v1335 = vadd.f32 %v1333, %v1334
        %v1336 = vrot.slane %v1335, 1
        %v1337 = vadd.f32 %v1335, %v1336
        %s1338 = vtos %v1337
        %s1339 = sadd.f32 %s1338, 1.0
        %v1340 = vmul.f32 %v1057, %v1057
        %vm1341 = vcmask 130048
        %v1342 = vsel %vm1341, %v1340, 0.0
        %v1343 = vrot.slane %v1342, 4
        %v1344 = vadd.f32 %v1342, %v1343
        %v1345 = vrot.slane %v1344, 2
        %v1346 = vadd.f32 %v1344, %v1345
        %v1347 = vrot.slane %v1346, 1
        %v1348 = vadd.f32 %v1346, %v1347
        %v1349 = vrsqrt.pop %v1348
        %v1350 = vmul.f32 %v1348, %v1349
        %vm1351 = vcmp.eq.f32.partialorder %v1348, inf
        %v1352 = vsel %vm1351, %v1348, %v1350
        %vm1353 = vcmp.eq.f32.partialorder %v1348, 0.0
        %v1354 = vand.u32 %v1348, 2147483648
        %v1355 = vsel %vm1353, %v1354, %v1352
        %v1356 = vmax.f32 %v1355, 1e-12
        %v1357 = vrcp.pop %v1356
        %v1358 = vmul.f32 1.0, %v1357
        %v1359 = vld [vmem:[#allocation17] sm:$0x1]
        %vm1360 = vcmask 64512
        %v1362 = vsel %vm1360, %v1326, 0
        %1364 = vmatprep.subr.mxu0 0.0
        %1365 = vmatpush1.msra.mxu0 %v1057
        %1366 = vmatprep.subr.mxu0 0.0
        %1367 = vmatpush1.msra.mxu0 0.0
        %1368 = vmatprep.subr.mxu0 0.0
        %1369 = vmatpush1.msra.mxu0 0.0
        %1370 = vmatprep.subr.mxu0 0.0
        %1371 = vmatpush1.msra.mxu0 0.0
        %1372 = vmatprep.subr.mxu0 0.0
        %1373 = vmatpush1.msra.mxu0 0.0
        %1374 = vmatprep.subr.mxu0 0.0
        %1375 = vmatpush1.msra.mxu0 0.0
        %1376 = vmatprep.subr.mxu0 0.0
        %1377 = vmatpush1.msra.mxu0 0.0
        %1378 = vmatprep.subr.mxu0 0.0
        %1379 = vmatpush1.msra.mxu0 0.0
        %1380 = vmatprep.subr.mxu0 0.0
        %1381 = vmatpush1.msra.mxu0 0.0
        %1382 = vmatprep.subr.mxu0 0.0
        %1383 = vmatpush1.msra.mxu0 0.0
        %1384 = vmatprep.subr.mxu0 0.0
        %1385 = vmatpush1.msra.mxu0 0.0
        %1386 = vmatprep.subr.mxu0 0.0
        %1387 = vmatpush1.msra.mxu0 0.0
        %1388 = vmatprep.subr.mxu0 0.0
        %1389 = vmatpush1.msra.mxu0 0.0
        %1390 = vmatprep.subr.mxu0 0.0
        %1391 = vmatpush1.msra.mxu0 0.0
        %1392 = vmatprep.subr.mxu0 0.0
        %1393 = vmatpush1.msra.mxu0 0.0
        %1394 = vmatprep.subr.mxu0 0.0
        %1395 = vmatpush1.msra.mxu0 0.0
        %1396 = vmatprep.subr.mxu0 0.0
        %1397 = vmatpush1.msra.mxu0 0.0
        %1398 = vmatprep.subr.mxu0 0.0
        %1399 = vmatpush1.msra.mxu0 0.0
        %1400 = vmatprep.subr.mxu0 0.0
        %1401 = vmatpush1.msra.mxu0 0.0
        %1402 = vmatprep.subr.mxu0 0.0
        %1403 = vmatpush1.msra.mxu0 0.0
        %1404 = vmatprep.subr.mxu0 0.0
        %1405 = vmatpush1.msra.mxu0 0.0
        %1406 = vmatprep.subr.mxu0 0.0
        %1407 = vmatpush1.msra.mxu0 0.0
        %1408 = vmatprep.subr.mxu0 0.0
        %1409 = vmatpush1.msra.mxu0 0.0
        %1410 = vmatprep.subr.mxu0 0.0
        %1411 = vmatpush1.msra.mxu0 0.0
        %1412 = vmatprep.subr.mxu0 0.0
        %1413 = vmatpush1.msra.mxu0 0.0
        %1414 = vmatprep.subr.mxu0 0.0
        %1415 = vmatpush1.msra.mxu0 0.0
        %1416 = vmatprep.subr.mxu0 0.0
        %1417 = vmatpush1.msra.mxu0 0.0
        %1418 = vmatprep.subr.mxu0 0.0
        %1419 = vmatpush1.msra.mxu0 0.0
        %1420 = vmatprep.subr.mxu0 0.0
        %1421 = vmatpush1.msra.mxu0 0.0
        %1422 = vmatprep.subr.mxu0 0.0
        %1423 = vmatpush1.msra.mxu0 0.0
        %1424 = vmatprep.subr.mxu0 0.0
        %1425 = vmatpush1.msra.mxu0 0.0
        %1426 = vmatprep.subr.mxu0 0.0
        %1427 = vmatpush1.msra.mxu0 0.0
        %1428 = vmatprep.mubr.f32.mxu0 0.0
        %1429 = vmatmul.mubr.f32.gmra.mrb[0].mxu0 %v1362
        %v1430 = vpop.f32.mrb[0].mxu0
        %v1431 = vadd.f32 0.0, %v1430
        %v1432 = vpop.f32.mrb[0].mxu0
        %1433 = vdwg.mxu0
        %v1434 = vmul.f32 %v1431, %v1358
        %v1436 = vsel %vm1360, %v1359, 0
        %1438 = vmatprep.subr.mxu0 0.0
        %1439 = vmatpush1.msra.mxu0 %v1057
        %1440 = vmatprep.subr.mxu0 0.0
        %1441 = vmatpush1.msra.mxu0 0.0
        %1442 = vmatprep.subr.mxu0 0.0
        %1443 = vmatpush1.msra.mxu0 0.0
        %1444 = vmatprep.subr.mxu0 0.0
        %1445 = vmatpush1.msra.mxu0 0.0
        %1446 = vmatprep.subr.mxu0 0.0
        %1447 = vmatpush1.msra.mxu0 0.0
        %1448 = vmatprep.subr.mxu0 0.0
        %1449 = vmatpush1.msra.mxu0 0.0
        %1450 = vmatprep.subr.mxu0 0.0
        %1451 = vmatpush1.msra.mxu0 0.0
        %1452 = vmatprep.subr.mxu0 0.0
        %1453 = vmatpush1.msra.mxu0 0.0
        %1454 = vmatprep.subr.mxu0 0.0
        %1455 = vmatpush1.msra.mxu0 0.0
        %1456 = vmatprep.subr.mxu0 0.0
        %1457 = vmatpush1.msra.mxu0 0.0
        %1458 = vmatprep.subr.mxu0 0.0
        %1459 = vmatpush1.msra.mxu0 0.0
        %1460 = vmatprep.subr.mxu0 0.0
        %1461 = vmatpush1.msra.mxu0 0.0
        %1462 = vmatprep.subr.mxu0 0.0
        %1463 = vmatpush1.msra.mxu0 0.0
        %1464 = vmatprep.subr.mxu0 0.0
        %1465 = vmatpush1.msra.mxu0 0.0
        %1466 = vmatprep.subr.mxu0 0.0
        %1467 = vmatpush1.msra.mxu0 0.0
        %1468 = vmatprep.subr.mxu0 0.0
        %1469 = vmatpush1.msra.mxu0 0.0
        %1470 = vmatprep.subr.mxu0 0.0
        %1471 = vmatpush1.msra.mxu0 0.0
        %1472 = vmatprep.subr.mxu0 0.0
        %1473 = vmatpush1.msra.mxu0 0.0
        %1474 = vmatprep.subr.mxu0 0.0
        %1475 = vmatpush1.msra.mxu0 0.0
        %1476 = vmatprep.subr.mxu0 0.0
        %1477 = vmatpush1.msra.mxu0 0.0
        %1478 = vmatprep.subr.mxu0 0.0
        %1479 = vmatpush1.msra.mxu0 0.0
        %1480 = vmatprep.subr.mxu0 0.0
        %1481 = vmatpush1.msra.mxu0 0.0
        %1482 = vmatprep.subr.mxu0 0.0
        %1483 = vmatpush1.msra.mxu0 0.0
        %1484 = vmatprep.subr.mxu0 0.0
        %1485 = vmatpush1.msra.mxu0 0.0
        %1486 = vmatprep.subr.mxu0 0.0
        %1487 = vmatpush1.msra.mxu0 0.0
        %1488 = vmatprep.subr.mxu0 0.0
        %1489 = vmatpush1.msra.mxu0 0.0
        %1490 = vmatprep.subr.mxu0 0.0
        %1491 = vmatpush1.msra.mxu0 0.0
        %1492 = vmatprep.subr.mxu0 0.0
        %1493 = vmatpush1.msra.mxu0 0.0
        %1494 = vmatprep.subr.mxu0 0.0
        %1495 = vmatpush1.msra.mxu0 0.0
        %1496 = vmatprep.subr.mxu0 0.0
        %1497 = vmatpush1.msra.mxu0 0.0
        %1498 = vmatprep.subr.mxu0 0.0
        %1499 = vmatpush1.msra.mxu0 0.0
        %1500 = vmatprep.subr.mxu0 0.0
        %1501 = vmatpush1.msra.mxu0 0.0
        %1502 = vmatprep.mubr.f32.mxu0 0.0
        %1503 = vmatmul.mubr.f32.gmra.mrb[0].mxu0 %v1436
        %v1504 = vpop.f32.mrb[0].mxu0
        %v1505 = vadd.f32 0.0, %v1504
        %v1506 = vpop.f32.mrb[0].mxu0
        %1507 = vdwg.mxu0
        %v1508 = vmul.f32 %v1505, %v1358
        %v1509 = vmul.f32 %v1434, 20.0
        %v1510 = vsel %vm1327, 1, 0
        %1511 = vset.pattern.permute.xlu0 0
        %1512 = vperm.xlu0 %1511, %v1510
        %v1513 = vpop.permute.xlu0 %1512
        %vm1514 = vcmp.eq.s32.totalorder %v1513, 1
        %v1515 = vsel %vm1514, %v1509, -1e+30
        %v1516 = vmul.f32 %v1508, 20.0
        %v1517 = vsel %vm1341, %v1515, -inf
        %v1518 = vrot.slane %v1517, 4
        %v1519 = vmax.f32 %v1517, %v1518
        %v1520 = vrot.slane %v1519, 2
        %v1521 = vmax.f32 %v1519, %v1520
        %v1522 = vrot.slane %v1521, 1
        %v1523 = vmax.f32 %v1521, %v1522
        %v1524 = vmax.f32 %v1523, %v1516
        %v1525 = vlaneseq
        %v1526 = vshrl.u32 %v1525, 7
        %v1527 = vsub.s32 0, %v1526
        %v1528 = vrot.slane %v1524, %v1527
        %v1529 = vsub.f32 %v1515, %v1528
        %v1530 = vmul.f32 %v1529, 1.442695
        %v1531 = vpow.pop %v1530
        %v1532 = vsel %vm1514, %v1531, 0.0
        %v1533 = vsel %vm1341, %v1532, 0.0
        %v1534 = vrot.slane %v1533, 4
        %v1535 = vadd.f32 %v1533, %v1534
        %v1536 = vrot.slane %v1535, 2
        %v1537 = vadd.f32 %v1535, %v1536
        %v1538 = vrot.slane %v1537, 1
        %v1539 = vadd.f32 %v1537, %v1538
        %v1540 = vsub.f32 %v1516, %v1524
        %v1541 = vmul.f32 %v1540, 1.442695
        %v1542 = vpow.pop %v1541
        %v1543 = vadd.f32 %v1539, %v1542
        %v1544 = vmax.f32 %v1543, 1e-20
        %v1545 = vstv %s1339
        %v1546 = vrcp.pop %v1545
        %v1547 = vmul.f32 %v1544, %v1546
        %v1548 = vadd.f32 %v1547, 1e-20
        %v1549 = vlog2.pop %v1548
        %v1550 = vmul.f32 %v1549, 0.6931472
        %v1551 = vadd.f32 %v1550, %v1524
        %v1552 = vmul.f32 %v1551, 0.05
        %v1553 = vmul.f32 %v1062, %v1062
        %v1554 = vsel %vm1341, %v1553, 0.0
        %v1555 = vrot.slane %v1554, 4
        %v1556 = vadd.f32 %v1554, %v1555
        %v1557 = vrot.slane %v1556, 2
        %v1558 = vadd.f32 %v1556, %v1557
        %v1559 = vrot.slane %v1558, 1
        %v1560 = vadd.f32 %v1558, %v1559
        %v1561 = vrsqrt.pop %v1560
        %v1562 = vmul.f32 %v1560, %v1561
        %vm1563 = vcmp.eq.f32.partialorder %v1560, inf
        %v1564 = vsel %vm1563, %v1560, %v1562
        %vm1565 = vcmp.eq.f32.partialorder %v1560, 0.0
        %v1566 = vand.u32 %v1560, 2147483648
        %v1567 = vsel %vm1565, %v1566, %v1564
        %v1568 = vmax.f32 %v1567, 1e-12
        %v1569 = vrcp.pop %v1568
        %v1570 = vmul.f32 1.0, %v1569
        %v1571 = vld [vmem:[#allocation17 + $0x1] sm:$0x1]
        %1572 = vrot.lane.b32.xlu0 %v1326, 120
        %v1573 = vpop.permute.xlu0 %1572
        %v1574 = vsel %vm1360, %v1573, 0
        %1576 = vmatprep.subr.mxu0 0.0
        %1577 = vmatpush1.msra.mxu0 %v1062
        %1578 = vmatprep.subr.mxu0 0.0
        %1579 = vmatpush1.msra.mxu0 0.0
        %1580 = vmatprep.subr.mxu0 0.0
        %1581 = vmatpush1.msra.mxu0 0.0
        %1582 = vmatprep.subr.mxu0 0.0
        %1583 = vmatpush1.msra.mxu0 0.0
        %1584 = vmatprep.subr.mxu0 0.0
        %1585 = vmatpush1.msra.mxu0 0.0
        %1586 = vmatprep.subr.mxu0 0.0
        %1587 = vmatpush1.msra.mxu0 0.0
        %1588 = vmatprep.subr.mxu0 0.0
        %1589 = vmatpush1.msra.mxu0 0.0
        %1590 = vmatprep.subr.mxu0 0.0
        %1591 = vmatpush1.msra.mxu0 0.0
        %1592 = vmatprep.subr.mxu0 0.0
        %1593 = vmatpush1.msra.mxu0 0.0
        %1594 = vmatprep.subr.mxu0 0.0
        %1595 = vmatpush1.msra.mxu0 0.0
        %1596 = vmatprep.subr.mxu0 0.0
        %1597 = vmatpush1.msra.mxu0 0.0
        %1598 = vmatprep.subr.mxu0 0.0
        %1599 = vmatpush1.msra.mxu0 0.0
        %1600 = vmatprep.subr.mxu0 0.0
        %1601 = vmatpush1.msra.mxu0 0.0
        %1602 = vmatprep.subr.mxu0 0.0
        %1603 = vmatpush1.msra.mxu0 0.0
        %1604 = vmatprep.subr.mxu0 0.0
        %1605 = vmatpush1.msra.mxu0 0.0
        %1606 = vmatprep.subr.mxu0 0.0
        %1607 = vmatpush1.msra.mxu0 0.0
        %1608 = vmatprep.subr.mxu0 0.0
        %1609 = vmatpush1.msra.mxu0 0.0
        %1610 = vmatprep.subr.mxu0 0.0
        %1611 = vmatpush1.msra.mxu0 0.0
        %1612 = vmatprep.subr.mxu0 0.0
        %1613 = vmatpush1.msra.mxu0 0.0
        %1614 = vmatprep.subr.mxu0 0.0
        %1615 = vmatpush1.msra.mxu0 0.0
        %1616 = vmatprep.subr.mxu0 0.0
        %1617 = vmatpush1.msra.mxu0 0.0
        %1618 = vmatprep.subr.mxu0 0.0
        %1619 = vmatpush1.msra.mxu0 0.0
        %1620 = vmatprep.subr.mxu0 0.0
        %1621 = vmatpush1.msra.mxu0 0.0
        %1622 = vmatprep.subr.mxu0 0.0
        %1623 = vmatpush1.msra.mxu0 0.0
        %1624 = vmatprep.subr.mxu0 0.0
        %1625 = vmatpush1.msra.mxu0 0.0
        %1626 = vmatprep.subr.mxu0 0.0
        %1627 = vmatpush1.msra.mxu0 0.0
        %1628 = vmatprep.subr.mxu0 0.0
        %1629 = vmatpush1.msra.mxu0 0.0
        %1630 = vmatprep.subr.mxu0 0.0
        %1631 = vmatpush1.msra.mxu0 0.0
        %1632 = vmatprep.subr.mxu0 0.0
        %1633 = vmatpush1.msra.mxu0 0.0
        %1634 = vmatprep.subr.mxu0 0.0
        %1635 = vmatpush1.msra.mxu0 0.0
        %1636 = vmatprep.subr.mxu0 0.0
        %1637 = vmatpush1.msra.mxu0 0.0
        %1638 = vmatprep.subr.mxu0 0.0
        %1639 = vmatpush1.msra.mxu0 0.0
        %1640 = vmatprep.mubr.f32.mxu0 0.0
        %1641 = vmatmul.mubr.f32.gmra.mrb[0].mxu0 %v1574
        %v1642 = vpop.f32.mrb[0].mxu0
        %v1643 = vadd.f32 0.0, %v1642
        %v1644 = vpop.f32.mrb[0].mxu0
        %1645 = vdwg.mxu0
        %v1646 = vmul.f32 %v1643, %v1570
        %v1648 = vsel %vm1360, %v1571, 0
        %1650 = vmatprep.subr.mxu0 0.0
        %1651 = vmatpush1.msra.mxu0 %v1062
        %1652 = vmatprep.subr.mxu0 0.0
        %1653 = vmatpush1.msra.mxu0 0.0
        %1654 = vmatprep.subr.mxu0 0.0
        %1655 = vmatpush1.msra.mxu0 0.0
        %1656 = vmatprep.subr.mxu0 0.0
        %1657 = vmatpush1.msra.mxu0 0.0
        %1658 = vmatprep.subr.mxu0 0.0
        %1659 = vmatpush1.msra.mxu0 0.0
        %1660 = vmatprep.subr.mxu0 0.0
        %1661 = vmatpush1.msra.mxu0 0.0
        %1662 = vmatprep.subr.mxu0 0.0
        %1663 = vmatpush1.msra.mxu0 0.0
        %1664 = vmatprep.subr.mxu0 0.0
        %1665 = vmatpush1.msra.mxu0 0.0
        %1666 = vmatprep.subr.mxu0 0.0
        %1667 = vmatpush1.msra.mxu0 0.0
        %1668 = vmatprep.subr.mxu0 0.0
        %1669 = vmatpush1.msra.mxu0 0.0
        %1670 = vmatprep.subr.mxu0 0.0
        %1671 = vmatpush1.msra.mxu0 0.0
        %1672 = vmatprep.subr.mxu0 0.0
        %1673 = vmatpush1.msra.mxu0 0.0
        %1674 = vmatprep.subr.mxu0 0.0
        %1675 = vmatpush1.msra.mxu0 0.0
        %1676 = vmatprep.subr.mxu0 0.0
        %1677 = vmatpush1.msra.mxu0 0.0
        %1678 = vmatprep.subr.mxu0 0.0
        %1679 = vmatpush1.msra.mxu0 0.0
        %1680 = vmatprep.subr.mxu0 0.0
        %1681 = vmatpush1.msra.mxu0 0.0
        %1682 = vmatprep.subr.mxu0 0.0
        %1683 = vmatpush1.msra.mxu0 0.0
        %1684 = vmatprep.subr.mxu0 0.0
        %1685 = vmatpush1.msra.mxu0 0.0
        %1686 = vmatprep.subr.mxu0 0.0
        %1687 = vmatpush1.msra.mxu0 0.0
        %1688 = vmatprep.subr.mxu0 0.0
        %1689 = vmatpush1.msra.mxu0 0.0
        %1690 = vmatprep.subr.mxu0 0.0
        %1691 = vmatpush1.msra.mxu0 0.0
        %1692 = vmatprep.subr.mxu0 0.0
        %1693 = vmatpush1.msra.mxu0 0.0
        %1694 = vmatprep.subr.mxu0 0.0
        %1695 = vmatpush1.msra.mxu0 0.0
        %1696 = vmatprep.subr.mxu0 0.0
        %1697 = vmatpush1.msra.mxu0 0.0
        %1698 = vmatprep.subr.mxu0 0.0
        %1699 = vmatpush1.msra.mxu0 0.0
        %1700 = vmatprep.subr.mxu0 0.0
        %1701 = vmatpush1.msra.mxu0 0.0
        %1702 = vmatprep.subr.mxu0 0.0
        %1703 = vmatpush1.msra.mxu0 0.0
        %1704 = vmatprep.subr.mxu0 0.0
        %1705 = vmatpush1.msra.mxu0 0.0
        %1706 = vmatprep.subr.mxu0 0.0
        %1707 = vmatpush1.msra.mxu0 0.0
        %1708 = vmatprep.subr.mxu0 0.0
        %1709 = vmatpush1.msra.mxu0 0.0
        %1710 = vmatprep.subr.mxu0 0.0
        %1711 = vmatpush1.msra.mxu0 0.0
        %1712 = vmatprep.subr.mxu0 0.0
        %1713 = vmatpush1.msra.mxu0 0.0
        %1714 = vmatprep.mubr.f32.mxu0 0.0
        %1715 = vmatmul.mubr.f32.gmra.mrb[0].mxu0 %v1648
        %v1716 = vpop.f32.mrb[0].mxu0
        %v1717 = vadd.f32 0.0, %v1716
        %v1718 = vpop.f32.mrb[0].mxu0
        %1719 = vdwg.mxu0
        %v1720 = vmul.f32 %v1717, %v1570
        %v1721 = vmul.f32 %v1646, 20.0
        %v1722 = vsel %vm1514, %v1721, -1e+30
        %v1723 = vmul.f32 %v1720, 20.0
        %v1724 = vsel %vm1341, %v1722, -inf
        %v1725 = vrot.slane %v1724, 4
        %v1726 = vmax.f32 %v1724, %v1725
        %v1727 = vrot.slane %v1726, 2
        %v1728 = vmax.f32 %v1726, %v1727
        %v1729 = vrot.slane %v1728, 1
        %v1730 = vmax.f32 %v1728, %v1729
        %v1731 = vmax.f32 %v1730, %v1723
        %v1732 = vlaneseq
        %v1733 = vshrl.u32 %v1732, 7
        %v1734 = vsub.s32 0, %v1733
        %v1735 = vrot.slane %v1731, %v1734
        %v1736 = vsub.f32 %v1722, %v1735
        %v1737 = vmul.f32 %v1736, 1.442695
        %v1738 = vpow.pop %v1737
        %v1739 = vsel %vm1514, %v1738, 0.0
        %v1740 = vsel %vm1341, %v1739, 0.0
        %v1741 = vrot.slane %v1740, 4
        %v1742 = vadd.f32 %v1740, %v1741
        %v1743 = vrot.slane %v1742, 2
        %v1744 = vadd.f32 %v1742, %v1743
        %v1745 = vrot.slane %v1744, 1
        %v1746 = vadd.f32 %v1744, %v1745
        %v1747 = vsub.f32 %v1723, %v1731
        %v1748 = vmul.f32 %v1747, 1.442695
        %v1749 = vpow.pop %v1748
        %v1750 = vadd.f32 %v1746, %v1749
        %v1751 = vmax.f32 %v1750, 1e-20
        %v1752 = vmul.f32 %v1751, %v1546
        %v1753 = vadd.f32 %v1752, 1e-20
        %v1754 = vlog2.pop %v1753
        %v1755 = vmul.f32 %v1754, 0.6931472
        %v1756 = vadd.f32 %v1755, %v1731
        %v1757 = vmul.f32 %v1756, 0.05
        %v1758 = vmul.f32 %v1067, %v1067
        %v1759 = vsel %vm1341, %v1758, 0.0
        %v1760 = vrot.slane %v1759, 4
        %v1761 = vadd.f32 %v1759, %v1760
        %v1762 = vrot.slane %v1761, 2
        %v1763 = vadd.f32 %v1761, %v1762
        %v1764 = vrot.slane %v1763, 1
        %v1765 = vadd.f32 %v1763, %v1764
        %v1766 = vrsqrt.pop %v1765
        %v1767 = vmul.f32 %v1765, %v1766
        %vm1768 = vcmp.eq.f32.partialorder %v1765, inf
        %v1769 = vsel %vm1768, %v1765, %v1767
        %vm1770 = vcmp.eq.f32.partialorder %v1765, 0.0
        %v1771 = vand.u32 %v1765, 2147483648
        %v1772 = vsel %vm1770, %v1771, %v1769
        %v1773 = vmax.f32 %v1772, 1e-12
        %v1774 = vrcp.pop %v1773
        %v1775 = vmul.f32 1.0, %v1774
        %v1776 = vld [vmem:[#allocation17 + $0x2] sm:$0x1]
        %1777 = vrot.lane.b32.xlu0 %v1326, 112
        %v1778 = vpop.permute.xlu0 %1777
        %v1779 = vsel %vm1360, %v1778, 0
        %1781 = vmatprep.subr.mxu0 0.0
        %1782 = vmatpush1.msra.mxu0 %v1067
        %1783 = vmatprep.subr.mxu0 0.0
        %1784 = vmatpush1.msra.mxu0 0.0
        %1785 = vmatprep.subr.mxu0 0.0
        %1786 = vmatpush1.msra.mxu0 0.0
        %1787 = vmatprep.subr.mxu0 0.0
        %1788 = vmatpush1.msra.mxu0 0.0
        %1789 = vmatprep.subr.mxu0 0.0
        %1790 = vmatpush1.msra.mxu0 0.0
        %1791 = vmatprep.subr.mxu0 0.0
        %1792 = vmatpush1.msra.mxu0 0.0
        %1793 = vmatprep.subr.mxu0 0.0
        %1794 = vmatpush1.msra.mxu0 0.0
        %1795 = vmatprep.subr.mxu0 0.0
        %1796 = vmatpush1.msra.mxu0 0.0
        %1797 = vmatprep.subr.mxu0 0.0
        %1798 = vmatpush1.msra.mxu0 0.0
        %1799 = vmatprep.subr.mxu0 0.0
        %1800 = vmatpush1.msra.mxu0 0.0
        %1801 = vmatprep.subr.mxu0 0.0
        %1802 = vmatpush1.msra.mxu0 0.0
        %1803 = vmatprep.subr.mxu0 0.0
        %1804 = vmatpush1.msra.mxu0 0.0
        %1805 = vmatprep.subr.mxu0 0.0
        %1806 = vmatpush1.msra.mxu0 0.0
        %1807 = vmatprep.subr.mxu0 0.0
        %1808 = vmatpush1.msra.mxu0 0.0
        %1809 = vmatprep.subr.mxu0 0.0
        %1810 = vmatpush1.msra.mxu0 0.0
        %1811 = vmatprep.subr.mxu0 0.0
        %1812 = vmatpush1.msra.mxu0 0.0
        %1813 = vmatprep.subr.mxu0 0.0
        %1814 = vmatpush1.msra.mxu0 0.0
        %1815 = vmatprep.subr.mxu0 0.0
        %1816 = vmatpush1.msra.mxu0 0.0
        %1817 = vmatprep.subr.mxu0 0.0
        %1818 = vmatpush1.msra.mxu0 0.0
        %1819 = vmatprep.subr.mxu0 0.0
        %1820 = vmatpush1.msra.mxu0 0.0
        %1821 = vmatprep.subr.mxu0 0.0
        %1822 = vmatpush1.msra.mxu0 0.0
        %1823 = vmatprep.subr.mxu0 0.0
        %1824 = vmatpush1.msra.mxu0 0.0
        %1825 = vmatprep.subr.mxu0 0.0
        %1826 = vmatpush1.msra.mxu0 0.0
        %1827 = vmatprep.subr.mxu0 0.0
        %1828 = vmatpush1.msra.mxu0 0.0
        %1829 = vmatprep.subr.mxu0 0.0
        %1830 = vmatpush1.msra.mxu0 0.0
        %1831 = vmatprep.subr.mxu0 0.0
        %1832 = vmatpush1.msra.mxu0 0.0
        %1833 = vmatprep.subr.mxu0 0.0
        %1834 = vmatpush1.msra.mxu0 0.0
        %1835 = vmatprep.subr.mxu0 0.0
        %1836 = vmatpush1.msra.mxu0 0.0
        %1837 = vmatprep.subr.mxu0 0.0
        %1838 = vmatpush1.msra.mxu0 0.0
        %1839 = vmatprep.subr.mxu0 0.0
        %1840 = vmatpush1.msra.mxu0 0.0
        %1841 = vmatprep.subr.mxu0 0.0
        %1842 = vmatpush1.msra.mxu0 0.0
        %1843 = vmatprep.subr.mxu0 0.0
        %1844 = vmatpush1.msra.mxu0 0.0
        %1845 = vmatprep.mubr.f32.mxu0 0.0
        %1846 = vmatmul.mubr.f32.gmra.mrb[0].mxu0 %v1779
        %v1847 = vpop.f32.mrb[0].mxu0
        %v1848 = vadd.f32 0.0, %v1847
        %v1849 = vpop.f32.mrb[0].mxu0
        %1850 = vdwg.mxu0
        %v1851 = vmul.f32 %v1848, %v1775
        %v1853 = vsel %vm1360, %v1776, 0
        %1855 = vmatprep.subr.mxu0 0.0
        %1856 = vmatpush1.msra.mxu0 %v1067
        %1857 = vmatprep.subr.mxu0 0.0
        %1858 = vmatpush1.msra.mxu0 0.0
        %1859 = vmatprep.subr.mxu0 0.0
        %1860 = vmatpush1.msra.mxu0 0.0
        %1861 = vmatprep.subr.mxu0 0.0
        %1862 = vmatpush1.msra.mxu0 0.0
        %1863 = vmatprep.subr.mxu0 0.0
        %1864 = vmatpush1.msra.mxu0 0.0
        %1865 = vmatprep.subr.mxu0 0.0
        %1866 = vmatpush1.msra.mxu0 0.0
        %1867 = vmatprep.subr.mxu0 0.0
        %1868 = vmatpush1.msra.mxu0 0.0
        %1869 = vmatprep.subr.mxu0 0.0
        %1870 = vmatpush1.msra.mxu0 0.0
        %1871 = vmatprep.subr.mxu0 0.0
        %1872 = vmatpush1.msra.mxu0 0.0
        %1873 = vmatprep.subr.mxu0 0.0
        %1874 = vmatpush1.msra.mxu0 0.0
        %1875 = vmatprep.subr.mxu0 0.0
        %1876 = vmatpush1.msra.mxu0 0.0
        %1877 = vmatprep.subr.mxu0 0.0
        %1878 = vmatpush1.msra.mxu0 0.0
        %1879 = vmatprep.subr.mxu0 0.0
        %1880 = vmatpush1.msra.mxu0 0.0
        %1881 = vmatprep.subr.mxu0 0.0
        %1882 = vmatpush1.msra.mxu0 0.0
        %1883 = vmatprep.subr.mxu0 0.0
        %1884 = vmatpush1.msra.mxu0 0.0
        %1885 = vmatprep.subr.mxu0 0.0
        %1886 = vmatpush1.msra.mxu0 0.0
        %1887 = vmatprep.subr.mxu0 0.0
        %1888 = vmatpush1.msra.mxu0 0.0
        %1889 = vmatprep.subr.mxu0 0.0
        %1890 = vmatpush1.msra.mxu0 0.0
        %1891 = vmatprep.subr.mxu0 0.0
        %1892 = vmatpush1.msra.mxu0 0.0
        %1893 = vmatprep.subr.mxu0 0.0
        %1894 = vmatpush1.msra.mxu0 0.0
        %1895 = vmatprep.subr.mxu0 0.0
        %1896 = vmatpush1.msra.mxu0 0.0
        %1897 = vmatprep.subr.mxu0 0.0
        %1898 = vmatpush1.msra.mxu0 0.0
        %1899 = vmatprep.subr.mxu0 0.0
        %1900 = vmatpush1.msra.mxu0 0.0
        %1901 = vmatprep.subr.mxu0 0.0
        %1902 = vmatpush1.msra.mxu0 0.0
        %1903 = vmatprep.subr.mxu0 0.0
        %1904 = vmatpush1.msra.mxu0 0.0
        %1905 = vmatprep.subr.mxu0 0.0
        %1906 = vmatpush1.msra.mxu0 0.0
        %1907 = vmatprep.subr.mxu0 0.0
        %1908 = vmatpush1.msra.mxu0 0.0
        %1909 = vmatprep.subr.mxu0 0.0
        %1910 = vmatpush1.msra.mxu0 0.0
        %1911 = vmatprep.subr.mxu0 0.0
        %1912 = vmatpush1.msra.mxu0 0.0
        %1913 = vmatprep.subr.mxu0 0.0
        %1914 = vmatpush1.msra.mxu0 0.0
        %1915 = vmatprep.subr.mxu0 0.0
        %1916 = vmatpush1.msra.mxu0 0.0
        %1917 = vmatprep.subr.mxu0 0.0
        %1918 = vmatpush1.msra.mxu0 0.0
        %1919 = vmatprep.mubr.f32.mxu0 0.0
        %1920 = vmatmul.mubr.f32.gmra.mrb[0].mxu0 %v1853
        %v1921 = vpop.f32.mrb[0].mxu0
        %v1922 = vadd.f32 0.0, %v1921
        %v1923 = vpop.f32.mrb[0].mxu0
        %1924 = vdwg.mxu0
        %v1925 = vmul.f32 %v1922, %v1775
        %v1926 = vmul.f32 %v1851, 20.0
        %v1927 = vsel %vm1514, %v1926, -1e+30
        %v1928 = vmul.f32 %v1925, 20.0
        %v1929 = vsel %vm1341, %v1927, -inf
        %v1930 = vrot.slane %v1929, 4
        %v1931 = vmax.f32 %v1929, %v1930
        %v1932 = vrot.slane %v1931, 2
        %v1933 = vmax.f32 %v1931, %v1932
        %v1934 = vrot.slane %v1933, 1
        %v1935 = vmax.f32 %v1933, %v1934
        %v1936 = vmax.f32 %v1935, %v1928
        %v1937 = vlaneseq
        %v1938 = vshrl.u32 %v1937, 7
        %v1939 = vsub.s32 0, %v1938
        %v1940 = vrot.slane %v1936, %v1939
        %v1941 = vsub.f32 %v1927, %v1940
        %v1942 = vmul.f32 %v1941, 1.442695
        %v1943 = vpow.pop %v1942
        %v1944 = vsel %vm1514, %v1943, 0.0
        %v1945 = vsel %vm1341, %v1944, 0.0
        %v1946 = vrot.slane %v1945, 4
        %v1947 = vadd.f32 %v1945, %v1946
        %v1948 = vrot.slane %v1947, 2
        %v1949 = vadd.f32 %v1947, %v1948
        %v1950 = vrot.slane %v1949, 1
        %v1951 = vadd.f32 %v1949, %v1950
        %v1952 = vsub.f32 %v1928, %v1936
        %v1953 = vmul.f32 %v1952, 1.442695
        %v1954 = vpow.pop %v1953
        %v1955 = vadd.f32 %v1951, %v1954
        %v1956 = vmax.f32 %v1955, 1e-20
        %v1957 = vmul.f32 %v1956, %v1546
        %v1958 = vadd.f32 %v1957, 1e-20
        %v1959 = vlog2.pop %v1958
        %v1960 = vmul.f32 %v1959, 0.6931472
        %v1961 = vadd.f32 %v1960, %v1936
        %v1962 = vmul.f32 %v1961, 0.05
        %v1963 = vmul.f32 %v1072, %v1072
        %v1964 = vsel %vm1341, %v1963, 0.0
        %v1965 = vrot.slane %v1964, 4
        %v1966 = vadd.f32 %v1964, %v1965
        %v1967 = vrot.slane %v1966, 2
        %v1968 = vadd.f32 %v1966, %v1967
        %v1969 = vrot.slane %v1968, 1
        %v1970 = vadd.f32 %v1968, %v1969
        %v1971 = vrsqrt.pop %v1970
        %v1972 = vmul.f32 %v1970, %v1971
        %vm1973 = vcmp.eq.f32.partialorder %v1970, inf
        %v1974 = vsel %vm1973, %v1970, %v1972
        %vm1975 = vcmp.eq.f32.partialorder %v1970, 0.0
        %v1976 = vand.u32 %v1970, 2147483648
        %v1977 = vsel %vm1975, %v1976, %v1974
        %v1978 = vmax.f32 %v1977, 1e-12
        %v1979 = vrcp.pop %v1978
        %v1980 = vmul.f32 1.0, %v1979
        %v1981 = vld [vmem:[#allocation17 + $0x3] sm:$0x1]
        %1982 = vrot.lane.b32.xlu0 %v1326, 104
        %v1983 = vpop.permute.xlu0 %1982
        %v1984 = vsel %vm1360, %v1983, 0
        %1986 = vmatprep.subr.mxu0 0.0
        %1987 = vmatpush1.msra.mxu0 %v1072
        %1988 = vmatprep.subr.mxu0 0.0
        %1989 = vmatpush1.msra.mxu0 0.0
        %1990 = vmatprep.subr.mxu0 0.0
        %1991 = vmatpush1.msra.mxu0 0.0
        %1992 = vmatprep.subr.mxu0 0.0
        %1993 = vmatpush1.msra.mxu0 0.0
        %1994 = vmatprep.subr.mxu0 0.0
        %1995 = vmatpush1.msra.mxu0 0.0
        %1996 = vmatprep.subr.mxu0 0.0
        %1997 = vmatpush1.msra.mxu0 0.0
        %1998 = vmatprep.subr.mxu0 0.0
        %1999 = vmatpush1.msra.mxu0 0.0
        %2000 = vmatprep.subr.mxu0 0.0
        %2001 = vmatpush1.msra.mxu0 0.0
        %2002 = vmatprep.subr.mxu0 0.0
        %2003 = vmatpush1.msra.mxu0 0.0
        %2004 = vmatprep.subr.mxu0 0.0
        %2005 = vmatpush1.msra.mxu0 0.0
        %2006 = vmatprep.subr.mxu0 0.0
        %2007 = vmatpush1.msra.mxu0 0.0
        %2008 = vmatprep.subr.mxu0 0.0
        %2009 = vmatpush1.msra.mxu0 0.0
        %2010 = vmatprep.subr.mxu0 0.0
        %2011 = vmatpush1.msra.mxu0 0.0
        %2012 = vmatprep.subr.mxu0 0.0
        %2013 = vmatpush1.msra.mxu0 0.0
        %2014 = vmatprep.subr.mxu0 0.0
        %2015 = vmatpush1.msra.mxu0 0.0
        %2016 = vmatprep.subr.mxu0 0.0
        %2017 = vmatpush1.msra.mxu0 0.0
        %2018 = vmatprep.subr.mxu0 0.0
        %2019 = vmatpush1.msra.mxu0 0.0
        %2020 = vmatprep.subr.mxu0 0.0
        %2021 = vmatpush1.msra.mxu0 0.0
        %2022 = vmatprep.subr.mxu0 0.0
        %2023 = vmatpush1.msra.mxu0 0.0
        %2024 = vmatprep.subr.mxu0 0.0
        %2025 = vmatpush1.msra.mxu0 0.0
        %2026 = vmatprep.subr.mxu0 0.0
        %2027 = vmatpush1.msra.mxu0 0.0
        %2028 = vmatprep.subr.mxu0 0.0
        %2029 = vmatpush1.msra.mxu0 0.0
        %2030 = vmatprep.subr.mxu0 0.0
        %2031 = vmatpush1.msra.mxu0 0.0
        %2032 = vmatprep.subr.mxu0 0.0
        %2033 = vmatpush1.msra.mxu0 0.0
        %2034 = vmatprep.subr.mxu0 0.0
        %2035 = vmatpush1.msra.mxu0 0.0
        %2036 = vmatprep.subr.mxu0 0.0
        %2037 = vmatpush1.msra.mxu0 0.0
        %2038 = vmatprep.subr.mxu0 0.0
        %2039 = vmatpush1.msra.mxu0 0.0
        %2040 = vmatprep.subr.mxu0 0.0
        %2041 = vmatpush1.msra.mxu0 0.0
        %2042 = vmatprep.subr.mxu0 0.0
        %2043 = vmatpush1.msra.mxu0 0.0
        %2044 = vmatprep.subr.mxu0 0.0
        %2045 = vmatpush1.msra.mxu0 0.0
        %2046 = vmatprep.subr.mxu0 0.0
        %2047 = vmatpush1.msra.mxu0 0.0
        %2048 = vmatprep.subr.mxu0 0.0
        %2049 = vmatpush1.msra.mxu0 0.0
        %2050 = vmatprep.mubr.f32.mxu0 0.0
        %2051 = vmatmul.mubr.f32.gmra.mrb[0].mxu0 %v1984
        %v2052 = vpop.f32.mrb[0].mxu0
        %v2053 = vadd.f32 0.0, %v2052
        %v2054 = vpop.f32.mrb[0].mxu0
        %2055 = vdwg.mxu0
        %v2056 = vmul.f32 %v2053, %v1980
        %v2058 = vsel %vm1360, %v1981, 0
        %2060 = vmatprep.subr.mxu0 0.0
        %2061 = vmatpush1.msra.mxu0 %v1072
        %2062 = vmatprep.subr.mxu0 0.0
        %2063 = vmatpush1.msra.mxu0 0.0
        %2064 = vmatprep.subr.mxu0 0.0
        %2065 = vmatpush1.msra.mxu0 0.0
        %2066 = vmatprep.subr.mxu0 0.0
        %2067 = vmatpush1.msra.mxu0 0.0
        %2068 = vmatprep.subr.mxu0 0.0
        %2069 = vmatpush1.msra.mxu0 0.0
        %2070 = vmatprep.subr.mxu0 0.0
        %2071 = vmatpush1.msra.mxu0 0.0
        %2072 = vmatprep.subr.mxu0 0.0
        %2073 = vmatpush1.msra.mxu0 0.0
        %2074 = vmatprep.subr.mxu0 0.0
        %2075 = vmatpush1.msra.mxu0 0.0
        %2076 = vmatprep.subr.mxu0 0.0
        %2077 = vmatpush1.msra.mxu0 0.0
        %2078 = vmatprep.subr.mxu0 0.0
        %2079 = vmatpush1.msra.mxu0 0.0
        %2080 = vmatprep.subr.mxu0 0.0
        %2081 = vmatpush1.msra.mxu0 0.0
        %2082 = vmatprep.subr.mxu0 0.0
        %2083 = vmatpush1.msra.mxu0 0.0
        %2084 = vmatprep.subr.mxu0 0.0
        %2085 = vmatpush1.msra.mxu0 0.0
        %2086 = vmatprep.subr.mxu0 0.0
        %2087 = vmatpush1.msra.mxu0 0.0
        %2088 = vmatprep.subr.mxu0 0.0
        %2089 = vmatpush1.msra.mxu0 0.0
        %2090 = vmatprep.subr.mxu0 0.0
        %2091 = vmatpush1.msra.mxu0 0.0
        %2092 = vmatprep.subr.mxu0 0.0
        %2093 = vmatpush1.msra.mxu0 0.0
        %2094 = vmatprep.subr.mxu0 0.0
        %2095 = vmatpush1.msra.mxu0 0.0
        %2096 = vmatprep.subr.mxu0 0.0
        %2097 = vmatpush1.msra.mxu0 0.0
        %2098 = vmatprep.subr.mxu0 0.0
        %2099 = vmatpush1.msra.mxu0 0.0
        %2100 = vmatprep.subr.mxu0 0.0
        %2101 = vmatpush1.msra.mxu0 0.0
        %2102 = vmatprep.subr.mxu0 0.0
        %2103 = vmatpush1.msra.mxu0 0.0
        %2104 = vmatprep.subr.mxu0 0.0
        %2105 = vmatpush1.msra.mxu0 0.0
        %2106 = vmatprep.subr.mxu0 0.0
        %2107 = vmatpush1.msra.mxu0 0.0
        %2108 = vmatprep.subr.mxu0 0.0
        %2109 = vmatpush1.msra.mxu0 0.0
        %2110 = vmatprep.subr.mxu0 0.0
        %2111 = vmatpush1.msra.mxu0 0.0
        %2112 = vmatprep.subr.mxu0 0.0
        %2113 = vmatpush1.msra.mxu0 0.0
        %2114 = vmatprep.subr.mxu0 0.0
        %2115 = vmatpush1.msra.mxu0 0.0
        %2116 = vmatprep.subr.mxu0 0.0
        %2117 = vmatpush1.msra.mxu0 0.0
        %2118 = vmatprep.subr.mxu0 0.0
        %2119 = vmatpush1.msra.mxu0 0.0
        %2120 = vmatprep.subr.mxu0 0.0
        %2121 = vmatpush1.msra.mxu0 0.0
        %2122 = vmatprep.subr.mxu0 0.0
        %2123 = vmatpush1.msra.mxu0 0.0
        %2124 = vmatprep.mubr.f32.mxu0 0.0
        %2125 = vmatmul.mubr.f32.gmra.mrb[0].mxu0 %v2058
        %v2126 = vpop.f32.mrb[0].mxu0
        %v2127 = vadd.f32 0.0, %v2126
        %v2128 = vpop.f32.mrb[0].mxu0
        %2129 = vdwg.mxu0
        %v2130 = vmul.f32 %v2127, %v1980
        %v2131 = vmul.f32 %v2056, 20.0
        %v2132 = vsel %vm1514, %v2131, -1e+30
        %v2133 = vmul.f32 %v2130, 20.0
        %v2134 = vsel %vm1341, %v2132, -inf
        %v2135 = vrot.slane %v2134, 4
        %v2136 = vmax.f32 %v2134, %v2135
        %v2137 = vrot.slane %v2136, 2
        %v2138 = vmax.f32 %v2136, %v2137
        %v2139 = vrot.slane %v2138, 1
        %v2140 = vmax.f32 %v2138, %v2139
        %v2141 = vmax.f32 %v2140, %v2133
        %v2142 = vlaneseq
        %v2143 = vshrl.u32 %v2142, 7
        %v2144 = vsub.s32 0, %v2143
        %v2145 = vrot.slane %v2141, %v2144
        %v2146 = vsub.f32 %v2132, %v2145
        %v2147 = vmul.f32 %v2146, 1.442695
        %v2148 = vpow.pop %v2147
        %v2149 = vsel %vm1514, %v2148, 0.0
        %v2150 = vsel %vm1341, %v2149, 0.0
        %v2151 = vrot.slane %v2150, 4
        %v2152 = vadd.f32 %v2150, %v2151
        %v2153 = vrot.slane %v2152, 2
        %v2154 = vadd.f32 %v2152, %v2153
        %v2155 = vrot.slane %v2154, 1
        %v2156 = vadd.f32 %v2154, %v2155
        %v2157 = vsub.f32 %v2133, %v2141
        %v2158 = vmul.f32 %v2157, 1.442695
        %v2159 = vpow.pop %v2158
        %v2160 = vadd.f32 %v2156, %v2159
        %v2161 = vmax.f32 %v2160, 1e-20
        %v2162 = vmul.f32 %v2161, %v1546
        %v2163 = vadd.f32 %v2162, 1e-20
        %v2164 = vlog2.pop %v2163
        %v2165 = vmul.f32 %v2164, 0.6931472
        %v2166 = vadd.f32 %v2165, %v2141
        %v2167 = vmul.f32 %v2166, 0.05
        %v2169 = vrot.slane %v1757, 7
        %v2172 = vrot.slane %v1962, 6
        %v2175 = vrot.slane %v2167, 5
        %vm2177 = vcmask 1040384
        %v2178 = vsel %vm2177, %v1552, %v2169
        %vm2179 = vcmask 1041408
        %v2180 = vsel %vm2179, %v2178, %v2172
        %vm2181 = vcmask 1042432
        %v2182 = vsel %vm2181, %v2180, %v2175
        %v2183 = vld [vmem:[#allocation24] sm:$0xff]
        %v2184 = vld [vmem:[#allocation24 + $0x8] sm:$0xff]
        %v2185 = vld [vmem:[#allocation26] sm:$0x1]
        %v2187 = vsel %vm1341, %v897, 0
        %2189 = vmatprep.subr.mxu0 0.0
        %2190 = vmatpush1.msra.mxu0 %v2183
        %2191 = vmatprep.subr.mxu0 0.0
        %2192 = vmatpush1.msra.mxu0 %v2184
        %2193 = vmatprep.subr.mxu0 0.0
        %2194 = vmatpush1.msra.mxu0 0.0
        %2195 = vmatprep.subr.mxu0 0.0
        %2196 = vmatpush1.msra.mxu0 0.0
        %2197 = vmatprep.subr.mxu0 0.0
        %2198 = vmatpush1.msra.mxu0 0.0
        %2199 = vmatprep.subr.mxu0 0.0
        %2200 = vmatpush1.msra.mxu0 0.0
        %2201 = vmatprep.subr.mxu0 0.0
        %2202 = vmatpush1.msra.mxu0 0.0
        %2203 = vmatprep.subr.mxu0 0.0
        %2204 = vmatpush1.msra.mxu0 0.0
        %2205 = vmatprep.subr.mxu0 0.0
        %2206 = vmatpush1.msra.mxu0 0.0
        %2207 = vmatprep.subr.mxu0 0.0
        %2208 = vmatpush1.msra.mxu0 0.0
        %2209 = vmatprep.subr.mxu0 0.0
        %2210 = vmatpush1.msra.mxu0 0.0
        %2211 = vmatprep.subr.mxu0 0.0
        %2212 = vmatpush1.msra.mxu0 0.0
        %2213 = vmatprep.subr.mxu0 0.0
        %2214 = vmatpush1.msra.mxu0 0.0
        %2215 = vmatprep.subr.mxu0 0.0
        %2216 = vmatpush1.msra.mxu0 0.0
        %2217 = vmatprep.subr.mxu0 0.0
        %2218 = vmatpush1.msra.mxu0 0.0
        %2219 = vmatprep.subr.mxu0 0.0
        %2220 = vmatpush1.msra.mxu0 0.0
        %2221 = vmatprep.subr.mxu0 0.0
        %2222 = vmatpush1.msra.mxu0 0.0
        %2223 = vmatprep.subr.mxu0 0.0
        %2224 = vmatpush1.msra.mxu0 0.0
        %2225 = vmatprep.subr.mxu0 0.0
        %2226 = vmatpush1.msra.mxu0 0.0
        %2227 = vmatprep.subr.mxu0 0.0
        %2228 = vmatpush1.msra.mxu0 0.0
        %2229 = vmatprep.subr.mxu0 0.0
        %2230 = vmatpush1.msra.mxu0 0.0
        %2231 = vmatprep.subr.mxu0 0.0
        %2232 = vmatpush1.msra.mxu0 0.0
        %2233 = vmatprep.subr.mxu0 0.0
        %2234 = vmatpush1.msra.mxu0 0.0
        %2235 = vmatprep.subr.mxu0 0.0
        %2236 = vmatpush1.msra.mxu0 0.0
        %2237 = vmatprep.subr.mxu0 0.0
        %2238 = vmatpush1.msra.mxu0 0.0
        %2239 = vmatprep.subr.mxu0 0.0
        %2240 = vmatpush1.msra.mxu0 0.0
        %2241 = vmatprep.subr.mxu0 0.0
        %2242 = vmatpush1.msra.mxu0 0.0
        %2243 = vmatprep.subr.mxu0 0.0
        %2244 = vmatpush1.msra.mxu0 0.0
        %2245 = vmatprep.subr.mxu0 0.0
        %2246 = vmatpush1.msra.mxu0 0.0
        %2247 = vmatprep.subr.mxu0 0.0
        %2248 = vmatpush1.msra.mxu0 0.0
        %2249 = vmatprep.subr.mxu0 0.0
        %2250 = vmatpush1.msra.mxu0 0.0
        %2251 = vmatprep.subr.mxu0 0.0
        %2252 = vmatpush1.msra.mxu0 0.0
        %2253 = vmatprep.mubr.f32.mxu0 0.0
        %2254 = vmatmul.mubr.f32.gmra.mrb[0].mxu0 %v2187
        %v2255 = vpop.f32.mrb[0].mxu0
        %v2256 = vadd.f32 %v2185, %v2255
        %v2257 = vpop.f32.mrb[0].mxu0
        %2258 = vdwg.mxu0
        %v2259 = vxor.u32 %v2256, 2147483648
        %v2260 = vmul.f32 %v2259, 1.442695
        %v2261 = vpow.pop %v2260
        %v2262 = vadd.f32 %v2261, 1.0
        %v2263 = vrcp.pop %v2262
        %v2264 = vmul.f32 1.0, %v2263
        %v2265 = vld [vmem:[#allocation27] sm:$0x1]
        %v2266 = vmul.f32 %v2264, %v2265
        %v2267 = vld [vmem:[#allocation29] sm:$0xff]
        %v2268 = vld [vmem:[#allocation29 + $0x8] sm:$0xff]
        %v2270 = vsel %vm1341, %v2266, 0
        %2272 = vmatprep.subr.mxu0 0.0
        %2273 = vmatpush1.msra.mxu0 %v2267
        %2274 = vmatprep.subr.mxu0 0.0
        %2275 = vmatpush1.msra.mxu0 %v2268
        %2276 = vmatprep.subr.mxu0 0.0
        %2277 = vmatpush1.msra.mxu0 0.0
        %2278 = vmatprep.subr.mxu0 0.0
        %2279 = vmatpush1.msra.mxu0 0.0
        %2280 = vmatprep.subr.mxu0 0.0
        %2281 = vmatpush1.msra.mxu0 0.0
        %2282 = vmatprep.subr.mxu0 0.0
        %2283 = vmatpush1.msra.mxu0 0.0
        %2284 = vmatprep.subr.mxu0 0.0
        %2285 = vmatpush1.msra.mxu0 0.0
        %2286 = vmatprep.subr.mxu0 0.0
        %2287 = vmatpush1.msra.mxu0 0.0
        %2288 = vmatprep.subr.mxu0 0.0
        %2289 = vmatpush1.msra.mxu0 0.0
        %2290 = vmatprep.subr.mxu0 0.0
        %2291 = vmatpush1.msra.mxu0 0.0
        %2292 = vmatprep.subr.mxu0 0.0
        %2293 = vmatpush1.msra.mxu0 0.0
        %2294 = vmatprep.subr.mxu0 0.0
        %2295 = vmatpush1.msra.mxu0 0.0
        %2296 = vmatprep.subr.mxu0 0.0
        %2297 = vmatpush1.msra.mxu0 0.0
        %2298 = vmatprep.subr.mxu0 0.0
        %2299 = vmatpush1.msra.mxu0 0.0
        %2300 = vmatprep.subr.mxu0 0.0
        %2301 = vmatpush1.msra.mxu0 0.0
        %2302 = vmatprep.subr.mxu0 0.0
        %2303 = vmatpush1.msra.mxu0 0.0
        %2304 = vmatprep.subr.mxu0 0.0
        %2305 = vmatpush1.msra.mxu0 0.0
        %2306 = vmatprep.subr.mxu0 0.0
        %2307 = vmatpush1.msra.mxu0 0.0
        %2308 = vmatprep.subr.mxu0 0.0
        %2309 = vmatpush1.msra.mxu0 0.0
        %2310 = vmatprep.subr.mxu0 0.0
        %2311 = vmatpush1.msra.mxu0 0.0
        %2312 = vmatprep.subr.mxu0 0.0
        %2313 = vmatpush1.msra.mxu0 0.0
        %2314 = vmatprep.subr.mxu0 0.0
        %2315 = vmatpush1.msra.mxu0 0.0
        %2316 = vmatprep.subr.mxu0 0.0
        %2317 = vmatpush1.msra.mxu0 0.0
        %2318 = vmatprep.subr.mxu0 0.0
        %2319 = vmatpush1.msra.mxu0 0.0
        %2320 = vmatprep.subr.mxu0 0.0
        %2321 = vmatpush1.msra.mxu0 0.0
        %2322 = vmatprep.subr.mxu0 0.0
        %2323 = vmatpush1.msra.mxu0 0.0
        %2324 = vmatprep.subr.mxu0 0.0
        %2325 = vmatpush1.msra.mxu0 0.0
        %2326 = vmatprep.subr.mxu0 0.0
        %2327 = vmatpush1.msra.mxu0 0.0
        %2328 = vmatprep.subr.mxu0 0.0
        %2329 = vmatpush1.msra.mxu0 0.0
        %2330 = vmatprep.subr.mxu0 0.0
        %2331 = vmatpush1.msra.mxu0 0.0
        %2332 = vmatprep.subr.mxu0 0.0
        %2333 = vmatpush1.msra.mxu0 0.0
        %2334 = vmatprep.subr.mxu0 0.0
        %2335 = vmatpush1.msra.mxu0 0.0
        %2336 = vmatprep.mubr.f32.mxu0 0.0
        %2337 = vmatmul.mubr.f32.gmra.mrb[0].mxu0 %v2270
        %v2338 = vpop.f32.mrb[0].mxu0
        %v2339 = vadd.f32 0.0, %v2338
        %v2340 = vpop.f32.mrb[0].mxu0
        %2341 = vdwg.mxu0
        %v2342 = vld [vmem:[#allocation2] sm:$0x1]
        %2344 = vset.pattern.permute.xlu0 0
        %2345 = vperm.xlu0 %2344, %v2342
        %v2346 = vpop.permute.xlu0 %2345
        %v2348 = vlaneseq
        %v2349 = vshrl.u32 %v2348, 7
        %v2350 = vsub.s32 0, %v2349
        %v2351 = vrot.slane %v2346, %v2350
        %v2353 = vsel %vm1248, %v2339, 0
        %v2356 = vsel %vm1252, %v2182, 0
        %2358 = vmatprep.subr.mxu0 0.0
        %2359 = vmatpush1.msra.mxu0 %v2356
        %2360 = vmatprep.subr.mxu0 0.0
        %2361 = vmatpush1.msra.mxu0 0.0
        %2362 = vmatprep.subr.mxu0 0.0
        %2363 = vmatpush1.msra.mxu0 0.0
        %2364 = vmatprep.subr.mxu0 0.0
        %2365 = vmatpush1.msra.mxu0 0.0
        %2366 = vmatprep.subr.mxu0 0.0
        %2367 = vmatpush1.msra.mxu0 0.0
        %2368 = vmatprep.subr.mxu0 0.0
        %2369 = vmatpush1.msra.mxu0 0.0
        %2370 = vmatprep.subr.mxu0 0.0
        %2371 = vmatpush1.msra.mxu0 0.0
        %2372 = vmatprep.subr.mxu0 0.0
        %2373 = vmatpush1.msra.mxu0 0.0
        %2374 = vmatprep.subr.mxu0 0.0
        %2375 = vmatpush1.msra.mxu0 0.0
        %2376 = vmatprep.subr.mxu0 0.0
        %2377 = vmatpush1.msra.mxu0 0.0
        %2378 = vmatprep.subr.mxu0 0.0
        %2379 = vmatpush1.msra.mxu0 0.0
        %2380 = vmatprep.subr.mxu0 0.0
        %2381 = vmatpush1.msra.mxu0 0.0
        %2382 = vmatprep.subr.mxu0 0.0
        %2383 = vmatpush1.msra.mxu0 0.0
        %2384 = vmatprep.subr.mxu0 0.0
        %2385 = vmatpush1.msra.mxu0 0.0
        %2386 = vmatprep.subr.mxu0 0.0
        %2387 = vmatpush1.msra.mxu0 0.0
        %2388 = vmatprep.subr.mxu0 0.0
        %2389 = vmatpush1.msra.mxu0 0.0
        %2390 = vmatprep.subr.mxu0 0.0
        %2391 = vmatpush1.msra.mxu0 0.0
        %2392 = vmatprep.subr.mxu0 0.0
        %2393 = vmatpush1.msra.mxu0 0.0
        %2394 = vmatprep.subr.mxu0 0.0
        %2395 = vmatpush1.msra.mxu0 0.0
        %2396 = vmatprep.subr.mxu0 0.0
        %2397 = vmatpush1.msra.mxu0 0.0
        %2398 = vmatprep.subr.mxu0 0.0
        %2399 = vmatpush1.msra.mxu0 0.0
        %2400 = vmatprep.subr.mxu0 0.0
        %2401 = vmatpush1.msra.mxu0 0.0
        %2402 = vmatprep.subr.mxu0 0.0
        %2403 = vmatpush1.msra.mxu0 0.0
        %2404 = vmatprep.subr.mxu0 0.0
        %2405 = vmatpush1.msra.mxu0 0.0
        %2406 = vmatprep.subr.mxu0 0.0
        %2407 = vmatpush1.msra.mxu0 0.0
        %2408 = vmatprep.subr.mxu0 0.0
        %2409 = vmatpush1.msra.mxu0 0.0
        %2410 = vmatprep.subr.mxu0 0.0
        %2411 = vmatpush1.msra.mxu0 0.0
        %2412 = vmatprep.subr.mxu0 0.0
        %2413 = vmatpush1.msra.mxu0 0.0
        %2414 = vmatprep.subr.mxu0 0.0
        %2415 = vmatpush1.msra.mxu0 0.0
        %2416 = vmatprep.subr.mxu0 0.0
        %2417 = vmatpush1.msra.mxu0 0.0
        %2418 = vmatprep.subr.mxu0 0.0
        %2419 = vmatpush1.msra.mxu0 0.0
        %2420 = vmatprep.subr.mxu0 0.0
        %2421 = vmatpush1.msra.mxu0 0.0
        %2422 = vmatprep.mubr.f32.mxu0 0.0
        %2423 = vmatmul.mubr.f32.gmra.mrb[0].mxu0 %v2353
        %v2424 = vpop.f32.mrb[0].mxu0
        %v2425 = vadd.f32 %v2351, %v2424
        %v2426 = vpop.f32.mrb[0].mxu0
        %2427 = vdwg.mxu0
        %v2428 = vmax.f32 %v2425, 0.0
        %vm2429 = vcmp.ne.f32.partialorder %v2425, %v2425
        %v2430 = vadd.f32 %v2425, 0.0
        %v2431 = vand.u32 2147483647, %v2425
        %v2432 = vsub.f32 0.0, %v2431
        %v2433 = vmul.f32 %v2432, 1.442695
        %v2434 = vpow.pop %v2433
        %v2435 = vadd.f32 %v2434, 1.0
        %v2436 = vlog2.pop %v2435
        %v2437 = vmul.f32 %v2436, 0.6931472
        %v2438 = vmul.f32 -0.5, %v2434
        %v2439 = vadd.f32 %v2438, 1.0
        %v2440 = vmul.f32 %v2439, %v2434
        %v2441 = vand.u32 2147483647, %v2434
        %vm2442 = vcmp.lt.f32.partialorder %v2441, 0.0004427343
        %v2443 = vsel %vm2442, %v2440, %v2437
        %v2444 = vadd.f32 %v2428, %v2443
        %v2445 = vsel %vm2429, %v2430, %v2444
        %vm2446 = vcmask 122880
        %2447 = vst.msk [vmem:[%s891] sm:$0x1] %vm2446, %v2445
        %s2448 = sand.u32 %s471, 1
        %s2449 = scalar_lea.sflag [#allocation5], %s2448
        %s2450 = sand.u32 %s471, 1
        %s2451 = scalar_lea.vmem [#allocation30], %s2450
        // Predicated region
        $region161: #{tpu_custom_call.1} parent=91 // pred_check
          %p2452 = pneg %p481
        $region162: #{tpu_custom_call.1} parent=91 // pred_check_branch
          %2454 = sbr.rel (%p2452) target = $region164
        $region163: #{tpu_custom_call.1} parent=91 // pred_region
          %s2456 = ssub.s32 16, 16
          %2457 = vsyncadd %s2449, %s2456
          %s2458 = sadd.s32 %s54, %s53
          %s2459 = smul.addr %s2458, 16
          %s2460 = scalar_lea.hbm %s18, %s2459
          %s2462 = sshll.u32 %s2451, 4
          %s2463 = int_to_ptr.vmem [resolvable:$true] %s2462
          %2465 = dma.vmem_to_hbm [thread:$0]  %s2463, 16, %s2460, %s2449
        $region164: #{tpu_custom_call.1} parent=91 // pred_fallthru
          _
      $region92: #{tpu_custom_call.1} parent=5 // pred_fallthru
        _
      %p2466 = scmp.le.s32.totalorder 2, %s44
      // Predicated region
      $region165: #{tpu_custom_call.1} parent=5 // pred_check
        %p2467 = pneg %p2466
      $region166: #{tpu_custom_call.1} parent=5 // pred_check_branch
        %2469 = sbr.rel (%p2467) target = $region168
      $region167: #{tpu_custom_call.1} parent=5 // pred_region
        %s2470 = ssub.s32 %s44, 2
        // Predicated region
        $region169: #{tpu_custom_call.1} parent=167 // pred_check
          %p2471 = pneg %p487
        $region170: #{tpu_custom_call.1} parent=167 // pred_check_branch
          %2473 = sbr.rel (%p2471) target = $region172
        $region171: #{tpu_custom_call.1} parent=167 // pred_region
          %s2474 = sand.u32 %s472, 1
          %s2475 = scalar_lea.sflag [#allocation5], %s2474
          %s2476 = sand.u32 %s472, 1
          %s2477 = scalar_lea.vmem [#allocation30], %s2476
          %2478 = dma.done %s2475, 16
        $region172: #{tpu_custom_call.1} parent=167 // pred_fallthru
          _
      $region168: #{tpu_custom_call.1} parent=5 // pred_fallthru
        _
    $region6: #{tpu_custom_call.1} parent=1 // loop_footer
      %s48 = sadd.s32 1, %s44
    $region7: #{tpu_custom_call.1} parent=1 // loop_footer_branch
      %43 = sbr.rel target = $region3
    $region8: #{tpu_custom_call.1} parent=1 // loop_exit
      _
    %2479 = vsyncpa [#allocation4], 1
    %s2480 = scalar_lea.sflag [#allocation4], 1
    %2481 = vsyncpa %s2480, 1
    %2482 = vsyncpa [#allocation7], 1
    %s2483 = scalar_lea.sflag [#allocation7], 1
    %2484 = vsyncpa %s2483, 1
    %2485 = vsyncpa [#allocation10], 1
    %s2486 = scalar_lea.sflag [#allocation10], 1
    %2487 = vsyncpa %s2486, 1
    %2488 = vsyncpa [#allocation13], 1
    %2489 = vsyncpa [#allocation16], 1
    %2490 = vsyncpa [#allocation19], 1
    %2491 = vsyncpa [#allocation22], 1
    %2492 = vsyncpa [#allocation25], 1
    %2493 = vsyncpa [#allocation28], 1
    %2494 = vsyncpa [#allocation5], 1
    %s2495 = scalar_lea.sflag [#allocation5], 1
    %2496 = vsyncpa %s2495, 1

</llo_original>
